<compile_context>
chip_gen: v5e
topology: v5e:2x2
jax: 0.10.0
libtpu: 0.0.40
codegen_flags: <defaults>
</compile_context>

<pallas_src>
import functools

import jax
import jax.numpy as jnp
from jax import lax
from jax.experimental import pallas as pl
from jax.experimental.pallas import tpu as pltpu

IN_DIM = 768
HID_DIM = 512


def critic_kernel(x_ref, w1_ref, b1_ref, w2t_ref, b2_ref, o_ref):
    # x_ref:   (TB, 768)  bf16      w1_ref: (768, 512) bf16
    # b1_ref:  (1, 512)   f32       w2t_ref: (1, 512)  f32
    # b2_ref:  (1, 1)     f32 (SMEM scalar)
    # o_ref:   (1, 1, TB) f32  (lane-dense output block)
    x = x_ref[...]

    # First linear (bf16 x bf16 -> f32 accumulate on MXU) + bias + ReLU (VPU, f32).
    h = jnp.dot(x, w1_ref[...], preferred_element_type=jnp.float32) + b1_ref[...]
    h = jnp.maximum(h, 0.0)  # (TB, 512) f32

    # Dropout: identity in eval mode.

    # Second linear, lane-dense: (1,512) contracted with (TB,512) -> (1, TB).
    v = lax.dot_general(
        w2t_ref[...], h,
        dimension_numbers=(((1,), (1,)), ((), ())),
        preferred_element_type=jnp.float32,
    )
    o_ref[0] = (v + b2_ref[0, 0]).astype(o_ref.dtype)


@functools.partial(jax.jit, static_argnames=("block_b",))
def critic_forward(state, w1, b1, w2t, b2, *, block_b=256):
    """state: [B, 768] f32. Returns values of shape [B] (torch .squeeze())."""
    B = state.shape[0]
    num_blocks = pl.cdiv(B, block_b)
    B_pad = num_blocks * block_b

    # bf16 activations at the boundary: halves x DMA bytes; accumulate in f32.
    x = state.astype(jnp.bfloat16)
    if B_pad != B:
        x = jnp.pad(x, ((0, B_pad - B), (0, 0)))

    out = pl.pallas_call(
        critic_kernel,
        out_shape=jax.ShapeDtypeStruct((num_blocks, 1, block_b), jnp.float32),
        grid_spec=pltpu.PrefetchScalarGridSpec(
            num_scalar_prefetch=0,
            grid=(num_blocks,),
            in_specs=[
                pl.BlockSpec((block_b, IN_DIM), lambda i: (i, 0)),   # x tile (bf16)
                pl.BlockSpec((IN_DIM, HID_DIM), lambda i: (0, 0)),   # W1 (resident, bf16)
                pl.BlockSpec((1, HID_DIM), lambda i: (0, 0)),        # b1 (f32)
                pl.BlockSpec((1, HID_DIM), lambda i: (0, 0)),        # W2^T (f32)
                pl.BlockSpec(memory_space=pltpu.MemorySpace.SMEM),   # b2 scalar
            ],
            out_specs=pl.BlockSpec((1, 1, block_b), lambda i: (i, 0, 0)),
        ),
        compiler_params=pltpu.CompilerParams(
            dimension_semantics=("parallel",),
        ),
    )(x, w1, b1, w2t, b2)

    # (num_blocks, 1, block_b) -> (B_pad,) -> drop padded rows -> [B]
    return out.reshape(B_pad)[:B]


def init_params(key):
    """PyTorch nn.Linear default init (uniform +/- 1/sqrt(fan_in)).

    W1 is stored [in, out] in bf16; W2 is stored transposed as (1, 512) f32.
    """
    k1, k2, k3, k4 = jax.random.split(key, 4)
    bound1 = 1.0 / jnp.sqrt(jnp.float32(IN_DIM))
    bound2 = 1.0 / jnp.sqrt(jnp.float32(HID_DIM))
    w1 = jax.random.uniform(k1, (IN_DIM, HID_DIM), jnp.float32, -bound1, bound1)
    b1 = jax.random.uniform(k2, (1, HID_DIM), jnp.float32, -bound1, bound1)
    w2t = jax.random.uniform(k3, (1, HID_DIM), jnp.float32, -bound2, bound2)
    b2 = jax.random.uniform(k4, (1, 1), jnp.float32, -bound2, bound2)
    return w1.astype(jnp.bfloat16), b1, w2t, b2


if __name__ == "__main__":
    key = jax.random.PRNGKey(0)
    kx, kp = jax.random.split(key)

    B = 300  # ragged vs. block_b=256 -> exercises padding path; grid has 2 steps
    state = jax.random.normal(kx, (B, IN_DIM), dtype=jnp.float32)
    w1, b1, w2t, b2 = init_params(kp)

    values = critic_forward(state, w1, b1, w2t, b2)
    values = jax.block_until_ready(values)

    # Reference in plain JAX with the same bf16-input / f32-accumulate recipe
    # (eval-mode dropout = identity).
    xb = state.astype(jnp.bfloat16)
    h_ref = jnp.maximum(
        jnp.dot(xb, w1, preferred_element_type=jnp.float32) + b1, 0.0)
    ref = (h_ref @ w2t[0] + b2[0, 0]).reshape(B)

    assert values.shape == (B,), values.shape
    assert jnp.allclose(values, ref, atol=5e-3, rtol=1e-2), (
        float(jnp.max(jnp.abs(values - ref))))

    print("KERNEL_OK")
</pallas_src>

<mosaic_0001>
module attributes {stable_mosaic.version = 11 : i64} {
  func.func @critic_kernel(%arg0: i32, %arg1: memref<256x768xbf16, #tpu.memory_space<vmem>>, %arg2: memref<768x512xbf16, #tpu.memory_space<vmem>>, %arg3: memref<1x512xf32, #tpu.memory_space<vmem>>, %arg4: memref<1x512xf32, #tpu.memory_space<vmem>>, %arg5: memref<1x1xf32, #tpu.memory_space<smem>>, %arg6: memref<1x1x256xf32, #tpu.memory_space<vmem>>) attributes {dimension_semantics = [#tpu.dimension_semantics<parallel>], iteration_bounds = array<i64: 2>, scalar_prefetch = 0 : i64, scratch_operands = 0 : i64, tpu.core_type = #tpu.core_type<tc>, window_params = [{transform_indices = @transform_0, window_bounds = array<i64: 256, 768>}, {pipeline_mode = #tpu.pipeline_mode<synchronous>, transform_indices = @transform_1, window_bounds = array<i64: 768, 512>}, {pipeline_mode = #tpu.pipeline_mode<synchronous>, transform_indices = @transform_2, window_bounds = array<i64: 1, 512>}, {pipeline_mode = #tpu.pipeline_mode<synchronous>, transform_indices = @transform_3, window_bounds = array<i64: 1, 512>}, {transform_indices = @transform_4, window_bounds = array<i64: 1, 1>}, {transform_indices = @transform_5, window_bounds = array<i64: 1, 1, 256>}]} {
    %c0 = arith.constant 0 : index
    %c0_0 = arith.constant 0 : index
    %0 = vector.load %arg1[%c0, %c0_0] : memref<256x768xbf16, #tpu.memory_space<vmem>>, vector<256x768xbf16>
    %c0_1 = arith.constant 0 : index
    %c0_2 = arith.constant 0 : index
    %1 = vector.load %arg2[%c0_1, %c0_2] : memref<768x512xbf16, #tpu.memory_space<vmem>>, vector<768x512xbf16>
    %cst = arith.constant dense<0.000000e+00> : vector<256x512xf32>
    %2 = tpu.matmul %0, %1, %cst {dimension_numbers = #tpu.dot_dimension_numbers<[1], [0], [0], [1], [0, 0, 1, 1], [], []>} : vector<256x768xbf16>, vector<768x512xbf16>, vector<256x512xf32> -> vector<256x512xf32>
    %c0_3 = arith.constant 0 : index
    %c0_4 = arith.constant 0 : index
    %3 = vector.load %arg3[%c0_3, %c0_4] : memref<1x512xf32, #tpu.memory_space<vmem>>, vector<1x512xf32>
    %4 = vector.broadcast %3 : vector<1x512xf32> to vector<256x512xf32>
    %5 = arith.addf %2, %4 : vector<256x512xf32>
    %cst_5 = arith.constant 0.000000e+00 : f32
    %6 = vector.broadcast %cst_5 : f32 to vector<256x512xf32>
    %7 = arith.maximumf %5, %6 : vector<256x512xf32>
    %c0_6 = arith.constant 0 : index
    %c0_7 = arith.constant 0 : index
    %8 = vector.load %arg4[%c0_6, %c0_7] : memref<1x512xf32, #tpu.memory_space<vmem>>, vector<1x512xf32>
    %cst_8 = arith.constant dense<0.000000e+00> : vector<1x256xf32>
    %9 = tpu.matmul %8, %7, %cst_8 {dimension_numbers = #tpu.dot_dimension_numbers<[1], [1], [0], [0], [0, 0, 1, 0], [], []>} : vector<1x512xf32>, vector<256x512xf32>, vector<1x256xf32> -> vector<1x256xf32>
    %c0_9 = arith.constant 0 : index
    %c0_10 = arith.constant 0 : index
    %10 = memref.load %arg5[%c0_9, %c0_10] : memref<1x1xf32, #tpu.memory_space<smem>>
    %11 = vector.broadcast %10 : f32 to vector<1x256xf32>
    %12 = arith.addf %9, %11 : vector<1x256xf32>
    %c0_11 = arith.constant 0 : index
    %c0_12 = arith.constant 0 : index
    %c0_13 = arith.constant 0 : index
    %13 = vector.load %arg6[%c0_11, %c0_12, %c0_13] : memref<1x1x256xf32, #tpu.memory_space<vmem>>, vector<1x1x256xf32>
    %14 = vector.shape_cast %13 : vector<1x1x256xf32> to vector<1x256xf32>
    %15 = vector.shape_cast %12 : vector<1x256xf32> to vector<1x1x256xf32>
    tpu.vector_store %arg6[%c0_11, %c0_12, %c0_13], %15 {strides = array<i32>} : memref<1x1x256xf32, #tpu.memory_space<vmem>>, vector<1x1x256xf32>,
    return
  }
  func.func @transform_0(%arg0: i32) -> (i32, i32) {
    %c0_i32 = arith.constant 0 : i32
    %c0_i32_0 = arith.constant 0 : i32
    return %arg0, %c0_i32 : i32, i32
  }
  func.func @transform_1(%arg0: i32) -> (i32, i32) {
    %c0_i32 = arith.constant 0 : i32
    %c0_i32_0 = arith.constant 0 : i32
    %c0_i32_1 = arith.constant 0 : i32
    return %c0_i32, %c0_i32_0 : i32, i32
  }
  func.func @transform_2(%arg0: i32) -> (i32, i32) {
    %c0_i32 = arith.constant 0 : i32
    %c0_i32_0 = arith.constant 0 : i32
    %c0_i32_1 = arith.constant 0 : i32
    return %c0_i32, %c0_i32_0 : i32, i32
  }
  func.func @transform_3(%arg0: i32) -> (i32, i32) {
    %c0_i32 = arith.constant 0 : i32
    %c0_i32_0 = arith.constant 0 : i32
    %c0_i32_1 = arith.constant 0 : i32
    return %c0_i32, %c0_i32_0 : i32, i32
  }
  func.func @transform_4(%arg0: i32) -> (i32, i32) {
    %c0_i32 = arith.constant 0 : i32
    %c0_i32_0 = arith.constant 0 : i32
    %c0_i32_1 = arith.constant 0 : i32
    return %c0_i32, %c0_i32_0 : i32, i32
  }
  func.func @transform_5(%arg0: i32) -> (i32, i32, i32) {
    %c0_i32 = arith.constant 0 : i32
    %c0_i32_0 = arith.constant 0 : i32
    %c0_i32_1 = arith.constant 0 : i32
    return %arg0, %c0_i32, %c0_i32_0 : i32, i32, i32
  }
}

</mosaic_0001>

<llo_original>
// kernel: critic_forward.1
$region0: #{critic_forward.1}
  #allocation0 [shape = 'u32[]', space=smem, size = 0x4, offset = 0x4, fixed_abs, tag = 'smem constant byte address 0x4 - core index']
  #allocation1 [shape = 'u32[72,128]{1,0:T(1,128)}', space=vmem, size = 0x9000, scoped, tag = 'internal scratch']
  #allocation2 [shape = 'f32[1,1]{1,0:T(1,128)S(6)}', space=smem, size = 0x200, scoped, tag = 'scoped memory for critic_forward.1']
  %s0 = inlined_call_operand.vmem [shape: bf16[512,768], index: 0, kind: input, shape index: {}]
  %s1 = inlined_call_operand.vmem [shape: bf16[768,512], index: 1, kind: input, shape index: {}]
  %s2 = inlined_call_operand.vmem [shape: f32[1,512], index: 2, kind: input, shape index: {}]
  %s3 = inlined_call_operand.vmem [shape: f32[1,512], index: 3, kind: input, shape index: {}]
  %s4 = inlined_call_operand.<no memory space> [shape: f32[1,1], index: 4, kind: input, shape index: {}]
  %s5 = inlined_call_operand.hbm [shape: f32[2,1,256], index: 5, kind: output, shape index: {}]
  %s6 = sld [smem:[#allocation0]]
  $region53: #{critic_forward.1} parent=0
    _
  %s8 = ssub.s32 1, %s6
  %s9 = scalar_select 0, %s8, %s6
  %10 = sst [smem:[#allocation2]] %s4
  $region1: #{critic_forward.1} parent=0
    #allocation3 [shape = 'u8[2048]{0}', space=vmem, size = 0x800, scoped, tag = 'output window, operand 0']
    #allocation4 [shape = 's32[2]{0}', space=sflag, size = 0x8, scoped, tag = 'scoped memory for critic_forward.1']
    %11 = vsyncpa [#allocation4], 0
    %s12 = scalar_lea.sflag [#allocation4], 1
    %13 = vsyncpa %s12, 0
    loop: start=0, step=1, limit=4
    $region2: #{critic_forward.1} parent=1 // loop_pre_header
      _
    $region3: #{critic_forward.1} parent=1 // loop_header
      %s15 = sphi 0, %s19
      %p16 = scmp.ge.s32.totalorder %s15, 4
      %s25 = sphi 0, %s27
      %s28 = sphi 0, %s25
      %s29 = sphi 0, %s28
      %s45 = sphi 0, %s29
      %s49 = sphi 0, %s49
      %s51 = sphi 0, %s49
      %s52 = sphi 0, %s51
      %s66 = sphi 0, %s52
      %s70 = sphi 0, %s70
      %s72 = sphi 0, %s70
      %s73 = sphi 0, %s72
      %s87 = sphi 0, %s73
      %s91 = sphi 0, %s91
      %s93 = sphi 0, %s91
      %s94 = sphi 0, %s93
      %s108 = sphi 0, %s94
      %s112 = sphi 0, %s112
      %s114 = sphi 0, %s112
      %s115 = sphi 0, %s114
      %s129 = sphi 0, %s115
      %s135 = sphi 0, %s137
      %s138 = sphi 0, %s135
      %s139 = sphi 0, %s138
      %s155 = sphi 0, %s139
    $region4: #{critic_forward.1} parent=1 // loop_header_branch
      %18 = sbr.rel (%p16) target = $region8
    $region5: #{critic_forward.1} parent=1 // loop_body
      %s20 = ssub.s32 %s15, 1
      %s21 = ssub.s32 %s15, 2
      %s22 = sadd.s32 %s15, 1
      %s23 = ssub.s32 %s15, %s22
      %p24 = scmp.eq.s32.totalorder %s23, 0
      %s26 = sadd.s32 %s25, 1
      %s27 = scalar_select %p24, %s25, %s26
      %p30 = pneg %p24
      %p31 = scmp.eq.s32.totalorder %s15, 1
      %p32 = por %p30, %p31
      %p33 = scmp.ne.s32.totalorder %s25, %s28
      %p34 = scmp.eq.s32.totalorder %s15, 0
      %p35 = por %p33, %p34
      %p36 = scmp.ne.s32.totalorder %s25, %s28
      %p37 = scmp.eq.s32.totalorder %s20, 1
      %p38 = por %p36, %p37
      %p39 = scmp.ne.s32.totalorder %s28, %s29
      %p40 = scmp.eq.s32.totalorder %s20, 0
      %p41 = por %p39, %p40
      %p42 = scmp.ne.s32.totalorder %s28, %s29
      %p43 = scmp.eq.s32.totalorder %s21, 1
      %p44 = por %p42, %p43
      %p46 = scmp.ne.s32.totalorder %s29, %s45
      %p47 = scmp.eq.s32.totalorder %s21, 0
      %p48 = por %p46, %p47
      %s50 = sadd.s32 %s49, 1
      %p53 = scmp.eq.s32.totalorder %s15, 1
      %p54 = scmp.ne.s32.totalorder %s49, %s51
      %p55 = scmp.eq.s32.totalorder %s15, 0
      %p56 = por %p54, %p55
      %p57 = scmp.ne.s32.totalorder %s49, %s51
      %p58 = scmp.eq.s32.totalorder %s20, 1
      %p59 = por %p57, %p58
      %p60 = scmp.ne.s32.totalorder %s51, %s52
      %p61 = scmp.eq.s32.totalorder %s20, 0
      %p62 = por %p60, %p61
      %p63 = scmp.ne.s32.totalorder %s51, %s52
      %p64 = scmp.eq.s32.totalorder %s21, 1
      %p65 = por %p63, %p64
      %p67 = scmp.ne.s32.totalorder %s52, %s66
      %p68 = scmp.eq.s32.totalorder %s21, 0
      %p69 = por %p67, %p68
      %s71 = sadd.s32 %s70, 1
      %p74 = scmp.eq.s32.totalorder %s15, 1
      %p75 = scmp.ne.s32.totalorder %s70, %s72
      %p76 = scmp.eq.s32.totalorder %s15, 0
      %p77 = por %p75, %p76
      %p78 = scmp.ne.s32.totalorder %s70, %s72
      %p79 = scmp.eq.s32.totalorder %s20, 1
      %p80 = por %p78, %p79
      %p81 = scmp.ne.s32.totalorder %s72, %s73
      %p82 = scmp.eq.s32.totalorder %s20, 0
      %p83 = por %p81, %p82
      %p84 = scmp.ne.s32.totalorder %s72, %s73
      %p85 = scmp.eq.s32.totalorder %s21, 1
      %p86 = por %p84, %p85
      %p88 = scmp.ne.s32.totalorder %s73, %s87
      %p89 = scmp.eq.s32.totalorder %s21, 0
      %p90 = por %p88, %p89
      %s92 = sadd.s32 %s91, 1
      %p95 = scmp.eq.s32.totalorder %s15, 1
      %p96 = scmp.ne.s32.totalorder %s91, %s93
      %p97 = scmp.eq.s32.totalorder %s15, 0
      %p98 = por %p96, %p97
      %p99 = scmp.ne.s32.totalorder %s91, %s93
      %p100 = scmp.eq.s32.totalorder %s20, 1
      %p101 = por %p99, %p100
      %p102 = scmp.ne.s32.totalorder %s93, %s94
      %p103 = scmp.eq.s32.totalorder %s20, 0
      %p104 = por %p102, %p103
      %p105 = scmp.ne.s32.totalorder %s93, %s94
      %p106 = scmp.eq.s32.totalorder %s21, 1
      %p107 = por %p105, %p106
      %p109 = scmp.ne.s32.totalorder %s94, %s108
      %p110 = scmp.eq.s32.totalorder %s21, 0
      %p111 = por %p109, %p110
      %s113 = sadd.s32 %s112, 1
      %p116 = scmp.eq.s32.totalorder %s15, 1
      %p117 = scmp.ne.s32.totalorder %s112, %s114
      %p118 = scmp.eq.s32.totalorder %s15, 0
      %p119 = por %p117, %p118
      %p120 = scmp.ne.s32.totalorder %s112, %s114
      %p121 = scmp.eq.s32.totalorder %s20, 1
      %p122 = por %p120, %p121
      %p123 = scmp.ne.s32.totalorder %s114, %s115
      %p124 = scmp.eq.s32.totalorder %s20, 0
      %p125 = por %p123, %p124
      %p126 = scmp.ne.s32.totalorder %s114, %s115
      %p127 = scmp.eq.s32.totalorder %s21, 1
      %p128 = por %p126, %p127
      %p130 = scmp.ne.s32.totalorder %s115, %s129
      %p131 = scmp.eq.s32.totalorder %s21, 0
      %p132 = por %p130, %p131
      %s133 = ssub.s32 %s15, %s22
      %p134 = scmp.eq.s32.totalorder %s133, 0
      %s136 = sadd.s32 %s135, 1
      %s137 = scalar_select %p134, %s135, %s136
      %p140 = pneg %p134
      %p141 = scmp.eq.s32.totalorder %s15, 1
      %p142 = por %p140, %p141
      %p143 = scmp.ne.s32.totalorder %s135, %s138
      %p144 = scmp.eq.s32.totalorder %s15, 0
      %p145 = por %p143, %p144
      %p146 = scmp.ne.s32.totalorder %s135, %s138
      %p147 = scmp.eq.s32.totalorder %s20, 1
      %p148 = por %p146, %p147
      %p149 = scmp.ne.s32.totalorder %s138, %s139
      %p150 = scmp.eq.s32.totalorder %s20, 0
      %p151 = por %p149, %p150
      %p152 = scmp.ne.s32.totalorder %s138, %s139
      %p153 = scmp.eq.s32.totalorder %s21, 1
      %p154 = por %p152, %p153
      %p156 = scmp.ne.s32.totalorder %s139, %s155
      %p157 = scmp.eq.s32.totalorder %s21, 0
      %p158 = por %p156, %p157
      %p159 = scmp.le.s32.totalorder 1, %s15
      %p160 = scmp.lt.s32.totalorder %s15, 3
      %p161 = pnand %p159, %p160
      %p162 = pneg %p161
      // Predicated region
      $region9: #{critic_forward.1} parent=5 // pred_check
        _
      $region10: #{critic_forward.1} parent=5 // pred_check_branch
        %164 = sbr.rel (%p161) target = $region12
      $region11: #{critic_forward.1} parent=5 // pred_region
        %s165 = ssub.s32 %s15, 1
        // Predicated region
        $region13: #{critic_forward.1} parent=11 // pred_check
          %p166 = pneg %p62
        $region14: #{critic_forward.1} parent=11 // pred_check_branch
          %168 = sbr.rel (%p166) target = $region16
        $region15: #{critic_forward.1} parent=11 // pred_region
          _
        $region16: #{critic_forward.1} parent=11 // pred_fallthru
          _
        // Predicated region
        $region17: #{critic_forward.1} parent=11 // pred_check
          %p169 = pneg %p83
        $region18: #{critic_forward.1} parent=11 // pred_check_branch
          %171 = sbr.rel (%p169) target = $region20
        $region19: #{critic_forward.1} parent=11 // pred_region
          _
        $region20: #{critic_forward.1} parent=11 // pred_fallthru
          _
        // Predicated region
        $region21: #{critic_forward.1} parent=11 // pred_check
          %p172 = pneg %p104
        $region22: #{critic_forward.1} parent=11 // pred_check_branch
          %174 = sbr.rel (%p172) target = $region24
        $region23: #{critic_forward.1} parent=11 // pred_region
          _
        $region24: #{critic_forward.1} parent=11 // pred_fallthru
          _
        // Predicated region
        $region25: #{critic_forward.1} parent=11 // pred_check
          %p175 = pneg %p125
        $region26: #{critic_forward.1} parent=11 // pred_check_branch
          %177 = sbr.rel (%p175) target = $region28
        $region27: #{critic_forward.1} parent=11 // pred_region
          _
        $region28: #{critic_forward.1} parent=11 // pred_fallthru
          _
      $region12: #{critic_forward.1} parent=5 // pred_fallthru
        _
      %p178 = scmp.lt.s32.totalorder %s15, 2
      // Predicated region
      $region29: #{critic_forward.1} parent=5 // pred_check
        %p179 = pneg %p178
      $region30: #{critic_forward.1} parent=5 // pred_check_branch
        %181 = sbr.rel (%p179) target = $region32
      $region31: #{critic_forward.1} parent=5 // pred_region
        // Predicated region
        $region33: #{critic_forward.1} parent=31 // pred_check
          %p182 = pneg %p35
        $region34: #{critic_forward.1} parent=31 // pred_check_branch
          %184 = sbr.rel (%p182) target = $region36
        $region35: #{critic_forward.1} parent=31 // pred_region
          %s185 = smul.u32 32, %s15
          %p186 = scmp.lt.s32.totalorder %s185, 63
          %s187 = scalar_select %p186, %s185, 63
          %s188 = smul.addr %s187, 6
          %s189 = smul.addr %s188, 4
          %s190 = scalar_lea.vmem %s0, %s189
          %s191 = smul.u32 32, %s15
        $region36: #{critic_forward.1} parent=31 // pred_fallthru
          _
      $region32: #{critic_forward.1} parent=5 // pred_fallthru
        _
      %p192 = scmp.le.s32.totalorder 1, %s15
      %p193 = scmp.lt.s32.totalorder %s15, 3
      %p194 = pnand %p192, %p193
      %p195 = pneg %p194
      // Predicated region
      $region37: #{critic_forward.1} parent=5 // pred_check
        _
      $region38: #{critic_forward.1} parent=5 // pred_check_branch
        %197 = sbr.rel (%p194) target = $region40
      $region39: #{critic_forward.1} parent=5 // pred_region
        %s198 = ssub.s32 %s15, 1
        %s199 = smul.u32 32, %s20
        %p200 = scmp.lt.s32.totalorder %s199, 63
        %s201 = scalar_select %p200, %s199, 63
        %s202 = smul.addr %s201, 6
        %s203 = smul.addr %s202, 4
        %s204 = scalar_lea.vmem %s0, %s203
        %p205 = pneg %p41
        %p206 = pneg %p38
        %p207 = pneg %p62
        %p208 = pneg %p59
        %p209 = pneg %p83
        %p210 = pneg %p80
        %p211 = pneg %p104
        %p212 = pneg %p101
        %p213 = pneg %p125
        %p214 = pneg %p122
        %p215 = pneg %p151
        %p216 = pneg %p148
        %s217 = sand.u32 %s138, 1
        %s218 = scalar_lea.sflag [#allocation4], %s217
        %s219 = sand.u32 %s138, 1
        %s220 = smul.addr %s219, 2
        %s221 = scalar_lea.vmem [#allocation3], %s220
        %s222 = smul.u32 32, %s20
        %p223 = scmp.lt.s32.totalorder %s222, 63
        %s224 = scalar_select %p223, %s222, 63
        %s225 = smul.addr %s224, 6
        %s226 = smul.addr %s225, 4
        %s227 = scalar_lea.vmem %s0, %s226
        %s228 = smul.u32 32, %s20
        %v229 = vld [vmem:[%s227] sm:$0xff]
        %v230 = vld [vmem:[%s227 + $0x8] sm:$0xff]
        %v231 = vld [vmem:[%s227 + $0x10] sm:$0xff]
        %v232 = vld [vmem:[%s227 + $0x18] sm:$0xff]
        %v233 = vld [vmem:[%s227 + $0x20] sm:$0xff]
        %v234 = vld [vmem:[%s227 + $0x28] sm:$0xff]
        %v235 = vld [vmem:[%s227 + $0x30] sm:$0xff]
        %v236 = vld [vmem:[%s227 + $0x38] sm:$0xff]
        %v237 = vld [vmem:[%s227 + $0x40] sm:$0xff]
        %v238 = vld [vmem:[%s227 + $0x48] sm:$0xff]
        %v239 = vld [vmem:[%s227 + $0x50] sm:$0xff]
        %v240 = vld [vmem:[%s227 + $0x58] sm:$0xff]
        %v241 = vld [vmem:[%s227 + $0x60] sm:$0xff]
        %v242 = vld [vmem:[%s227 + $0x68] sm:$0xff]
        %v243 = vld [vmem:[%s227 + $0x70] sm:$0xff]
        %v244 = vld [vmem:[%s227 + $0x78] sm:$0xff]
        %v245 = vld [vmem:[%s227 + $0x80] sm:$0xff]
        %v246 = vld [vmem:[%s227 + $0x88] sm:$0xff]
        %v247 = vld [vmem:[%s227 + $0x90] sm:$0xff]
        %v248 = vld [vmem:[%s227 + $0x98] sm:$0xff]
        %v249 = vld [vmem:[%s227 + $0xa0] sm:$0xff]
        %v250 = vld [vmem:[%s227 + $0xa8] sm:$0xff]
        %v251 = vld [vmem:[%s227 + $0xb0] sm:$0xff]
        %v252 = vld [vmem:[%s227 + $0xb8] sm:$0xff]
        %v253 = vld [vmem:[%s227 + $0xc0] sm:$0xff]
        %v254 = vld [vmem:[%s227 + $0xc8] sm:$0xff]
        %v255 = vld [vmem:[%s227 + $0xd0] sm:$0xff]
        %v256 = vld [vmem:[%s227 + $0xd8] sm:$0xff]
        %v257 = vld [vmem:[%s227 + $0xe0] sm:$0xff]
        %v258 = vld [vmem:[%s227 + $0xe8] sm:$0xff]
        %v259 = vld [vmem:[%s227 + $0xf0] sm:$0xff]
        %v260 = vld [vmem:[%s227 + $0xf8] sm:$0xff]
        %v261 = vld [vmem:[%s227 + $0x100] sm:$0xff]
        %v262 = vld [vmem:[%s227 + $0x108] sm:$0xff]
        %v263 = vld [vmem:[%s227 + $0x110] sm:$0xff]
        %v264 = vld [vmem:[%s227 + $0x118] sm:$0xff]
        %v265 = vld [vmem:[%s227 + $0x120] sm:$0xff]
        %v266 = vld [vmem:[%s227 + $0x128] sm:$0xff]
        %v267 = vld [vmem:[%s227 + $0x130] sm:$0xff]
        %v268 = vld [vmem:[%s227 + $0x138] sm:$0xff]
        %v269 = vld [vmem:[%s227 + $0x140] sm:$0xff]
        %v270 = vld [vmem:[%s227 + $0x148] sm:$0xff]
        %v271 = vld [vmem:[%s227 + $0x150] sm:$0xff]
        %v272 = vld [vmem:[%s227 + $0x158] sm:$0xff]
        %v273 = vld [vmem:[%s227 + $0x160] sm:$0xff]
        %v274 = vld [vmem:[%s227 + $0x168] sm:$0xff]
        %v275 = vld [vmem:[%s227 + $0x170] sm:$0xff]
        %v276 = vld [vmem:[%s227 + $0x178] sm:$0xff]
        %v277 = vld [vmem:[%s227 + $0x180] sm:$0xff]
        %v278 = vld [vmem:[%s227 + $0x188] sm:$0xff]
        %v279 = vld [vmem:[%s227 + $0x190] sm:$0xff]
        %v280 = vld [vmem:[%s227 + $0x198] sm:$0xff]
        %v281 = vld [vmem:[%s227 + $0x1a0] sm:$0xff]
        %v282 = vld [vmem:[%s227 + $0x1a8] sm:$0xff]
        %v283 = vld [vmem:[%s227 + $0x1b0] sm:$0xff]
        %v284 = vld [vmem:[%s227 + $0x1b8] sm:$0xff]
        %v285 = vld [vmem:[%s227 + $0x1c0] sm:$0xff]
        %v286 = vld [vmem:[%s227 + $0x1c8] sm:$0xff]
        %v287 = vld [vmem:[%s227 + $0x1d0] sm:$0xff]
        %v288 = vld [vmem:[%s227 + $0x1d8] sm:$0xff]
        %v289 = vld [vmem:[%s227 + $0x1e0] sm:$0xff]
        %v290 = vld [vmem:[%s227 + $0x1e8] sm:$0xff]
        %v291 = vld [vmem:[%s227 + $0x1f0] sm:$0xff]
        %v292 = vld [vmem:[%s227 + $0x1f8] sm:$0xff]
        %v293 = vld [vmem:[%s227 + $0x200] sm:$0xff]
        %v294 = vld [vmem:[%s227 + $0x208] sm:$0xff]
        %v295 = vld [vmem:[%s227 + $0x210] sm:$0xff]
        %v296 = vld [vmem:[%s227 + $0x218] sm:$0xff]
        %v297 = vld [vmem:[%s227 + $0x220] sm:$0xff]
        %v298 = vld [vmem:[%s227 + $0x228] sm:$0xff]
        %v299 = vld [vmem:[%s227 + $0x230] sm:$0xff]
        %v300 = vld [vmem:[%s227 + $0x238] sm:$0xff]
        %v301 = vld [vmem:[%s227 + $0x240] sm:$0xff]
        %v302 = vld [vmem:[%s227 + $0x248] sm:$0xff]
        %v303 = vld [vmem:[%s227 + $0x250] sm:$0xff]
        %v304 = vld [vmem:[%s227 + $0x258] sm:$0xff]
        %v305 = vld [vmem:[%s227 + $0x260] sm:$0xff]
        %v306 = vld [vmem:[%s227 + $0x268] sm:$0xff]
        %v307 = vld [vmem:[%s227 + $0x270] sm:$0xff]
        %v308 = vld [vmem:[%s227 + $0x278] sm:$0xff]
        %v309 = vld [vmem:[%s227 + $0x280] sm:$0xff]
        %v310 = vld [vmem:[%s227 + $0x288] sm:$0xff]
        %v311 = vld [vmem:[%s227 + $0x290] sm:$0xff]
        %v312 = vld [vmem:[%s227 + $0x298] sm:$0xff]
        %v313 = vld [vmem:[%s227 + $0x2a0] sm:$0xff]
        %v314 = vld [vmem:[%s227 + $0x2a8] sm:$0xff]
        %v315 = vld [vmem:[%s227 + $0x2b0] sm:$0xff]
        %v316 = vld [vmem:[%s227 + $0x2b8] sm:$0xff]
        %v317 = vld [vmem:[%s227 + $0x2c0] sm:$0xff]
        %v318 = vld [vmem:[%s227 + $0x2c8] sm:$0xff]
        %v319 = vld [vmem:[%s227 + $0x2d0] sm:$0xff]
        %v320 = vld [vmem:[%s227 + $0x2d8] sm:$0xff]
        %v321 = vld [vmem:[%s227 + $0x2e0] sm:$0xff]
        %v322 = vld [vmem:[%s227 + $0x2e8] sm:$0xff]
        %v323 = vld [vmem:[%s227 + $0x2f0] sm:$0xff]
        %v324 = vld [vmem:[%s227 + $0x2f8] sm:$0xff]
        %v325 = vld [vmem:[%s1] sm:$0xff]
        %v326 = vld [vmem:[%s1 + $0x8] sm:$0xff]
        %v327 = vld [vmem:[%s1 + $0x10] sm:$0xff]
        %v328 = vld [vmem:[%s1 + $0x18] sm:$0xff]
        %v329 = vld [vmem:[%s1 + $0x20] sm:$0xff]
        %v330 = vld [vmem:[%s1 + $0x28] sm:$0xff]
        %v331 = vld [vmem:[%s1 + $0x30] sm:$0xff]
        %v332 = vld [vmem:[%s1 + $0x38] sm:$0xff]
        %v333 = vld [vmem:[%s1 + $0x40] sm:$0xff]
        %v334 = vld [vmem:[%s1 + $0x48] sm:$0xff]
        %v335 = vld [vmem:[%s1 + $0x50] sm:$0xff]
        %v336 = vld [vmem:[%s1 + $0x58] sm:$0xff]
        %v337 = vld [vmem:[%s1 + $0x60] sm:$0xff]
        %v338 = vld [vmem:[%s1 + $0x68] sm:$0xff]
        %v339 = vld [vmem:[%s1 + $0x70] sm:$0xff]
        %v340 = vld [vmem:[%s1 + $0x78] sm:$0xff]
        %v341 = vld [vmem:[%s1 + $0x80] sm:$0xff]
        %v342 = vld [vmem:[%s1 + $0x88] sm:$0xff]
        %v343 = vld [vmem:[%s1 + $0x90] sm:$0xff]
        %v344 = vld [vmem:[%s1 + $0x98] sm:$0xff]
        %v345 = vld [vmem:[%s1 + $0xa0] sm:$0xff]
        %v346 = vld [vmem:[%s1 + $0xa8] sm:$0xff]
        %v347 = vld [vmem:[%s1 + $0xb0] sm:$0xff]
        %v348 = vld [vmem:[%s1 + $0xb8] sm:$0xff]
        %v349 = vld [vmem:[%s1 + $0xc0] sm:$0xff]
        %v350 = vld [vmem:[%s1 + $0xc8] sm:$0xff]
        %v351 = vld [vmem:[%s1 + $0xd0] sm:$0xff]
        %v352 = vld [vmem:[%s1 + $0xd8] sm:$0xff]
        %v353 = vld [vmem:[%s1 + $0xe0] sm:$0xff]
        %v354 = vld [vmem:[%s1 + $0xe8] sm:$0xff]
        %v355 = vld [vmem:[%s1 + $0xf0] sm:$0xff]
        %v356 = vld [vmem:[%s1 + $0xf8] sm:$0xff]
        %v357 = vld [vmem:[%s1 + $0x100] sm:$0xff]
        %v358 = vld [vmem:[%s1 + $0x108] sm:$0xff]
        %v359 = vld [vmem:[%s1 + $0x110] sm:$0xff]
        %v360 = vld [vmem:[%s1 + $0x118] sm:$0xff]
        %v361 = vld [vmem:[%s1 + $0x120] sm:$0xff]
        %v362 = vld [vmem:[%s1 + $0x128] sm:$0xff]
        %v363 = vld [vmem:[%s1 + $0x130] sm:$0xff]
        %v364 = vld [vmem:[%s1 + $0x138] sm:$0xff]
        %v365 = vld [vmem:[%s1 + $0x140] sm:$0xff]
        %v366 = vld [vmem:[%s1 + $0x148] sm:$0xff]
        %v367 = vld [vmem:[%s1 + $0x150] sm:$0xff]
        %v368 = vld [vmem:[%s1 + $0x158] sm:$0xff]
        %v369 = vld [vmem:[%s1 + $0x160] sm:$0xff]
        %v370 = vld [vmem:[%s1 + $0x168] sm:$0xff]
        %v371 = vld [vmem:[%s1 + $0x170] sm:$0xff]
        %v372 = vld [vmem:[%s1 + $0x178] sm:$0xff]
        %v373 = vld [vmem:[%s1 + $0x180] sm:$0xff]
        %v374 = vld [vmem:[%s1 + $0x188] sm:$0xff]
        %v375 = vld [vmem:[%s1 + $0x190] sm:$0xff]
        %v376 = vld [vmem:[%s1 + $0x198] sm:$0xff]
        %v377 = vld [vmem:[%s1 + $0x1a0] sm:$0xff]
        %v378 = vld [vmem:[%s1 + $0x1a8] sm:$0xff]
        %v379 = vld [vmem:[%s1 + $0x1b0] sm:$0xff]
        %v380 = vld [vmem:[%s1 + $0x1b8] sm:$0xff]
        %v381 = vld [vmem:[%s1 + $0x1c0] sm:$0xff]
        %v382 = vld [vmem:[%s1 + $0x1c8] sm:$0xff]
        %v383 = vld [vmem:[%s1 + $0x1d0] sm:$0xff]
        %v384 = vld [vmem:[%s1 + $0x1d8] sm:$0xff]
        %v385 = vld [vmem:[%s1 + $0x1e0] sm:$0xff]
        %v386 = vld [vmem:[%s1 + $0x1e8] sm:$0xff]
        %v387 = vld [vmem:[%s1 + $0x1f0] sm:$0xff]
        %v388 = vld [vmem:[%s1 + $0x1f8] sm:$0xff]
        %v389 = vld [vmem:[%s1 + $0x200] sm:$0xff]
        %v390 = vld [vmem:[%s1 + $0x208] sm:$0xff]
        %v391 = vld [vmem:[%s1 + $0x210] sm:$0xff]
        %v392 = vld [vmem:[%s1 + $0x218] sm:$0xff]
        %v393 = vld [vmem:[%s1 + $0x220] sm:$0xff]
        %v394 = vld [vmem:[%s1 + $0x228] sm:$0xff]
        %v395 = vld [vmem:[%s1 + $0x230] sm:$0xff]
        %v396 = vld [vmem:[%s1 + $0x238] sm:$0xff]
        %v397 = vld [vmem:[%s1 + $0x240] sm:$0xff]
        %v398 = vld [vmem:[%s1 + $0x248] sm:$0xff]
        %v399 = vld [vmem:[%s1 + $0x250] sm:$0xff]
        %v400 = vld [vmem:[%s1 + $0x258] sm:$0xff]
        %v401 = vld [vmem:[%s1 + $0x260] sm:$0xff]
        %v402 = vld [vmem:[%s1 + $0x268] sm:$0xff]
        %v403 = vld [vmem:[%s1 + $0x270] sm:$0xff]
        %v404 = vld [vmem:[%s1 + $0x278] sm:$0xff]
        %v405 = vld [vmem:[%s1 + $0x280] sm:$0xff]
        %v406 = vld [vmem:[%s1 + $0x288] sm:$0xff]
        %v407 = vld [vmem:[%s1 + $0x290] sm:$0xff]
        %v408 = vld [vmem:[%s1 + $0x298] sm:$0xff]
        %v409 = vld [vmem:[%s1 + $0x2a0] sm:$0xff]
        %v410 = vld [vmem:[%s1 + $0x2a8] sm:$0xff]
        %v411 = vld [vmem:[%s1 + $0x2b0] sm:$0xff]
        %v412 = vld [vmem:[%s1 + $0x2b8] sm:$0xff]
        %v413 = vld [vmem:[%s1 + $0x2c0] sm:$0xff]
        %v414 = vld [vmem:[%s1 + $0x2c8] sm:$0xff]
        %v415 = vld [vmem:[%s1 + $0x2d0] sm:$0xff]
        %v416 = vld [vmem:[%s1 + $0x2d8] sm:$0xff]
        %v417 = vld [vmem:[%s1 + $0x2e0] sm:$0xff]
        %v418 = vld [vmem:[%s1 + $0x2e8] sm:$0xff]
        %v419 = vld [vmem:[%s1 + $0x2f0] sm:$0xff]
        %v420 = vld [vmem:[%s1 + $0x2f8] sm:$0xff]
        %v421 = vld [vmem:[%s1 + $0x300] sm:$0xff]
        %v422 = vld [vmem:[%s1 + $0x308] sm:$0xff]
        %v423 = vld [vmem:[%s1 + $0x310] sm:$0xff]
        %v424 = vld [vmem:[%s1 + $0x318] sm:$0xff]
        %v425 = vld [vmem:[%s1 + $0x320] sm:$0xff]
        %v426 = vld [vmem:[%s1 + $0x328] sm:$0xff]
        %v427 = vld [vmem:[%s1 + $0x330] sm:$0xff]
        %v428 = vld [vmem:[%s1 + $0x338] sm:$0xff]
        %v429 = vld [vmem:[%s1 + $0x340] sm:$0xff]
        %v430 = vld [vmem:[%s1 + $0x348] sm:$0xff]
        %v431 = vld [vmem:[%s1 + $0x350] sm:$0xff]
        %v432 = vld [vmem:[%s1 + $0x358] sm:$0xff]
        %v433 = vld [vmem:[%s1 + $0x360] sm:$0xff]
        %v434 = vld [vmem:[%s1 + $0x368] sm:$0xff]
        %v435 = vld [vmem:[%s1 + $0x370] sm:$0xff]
        %v436 = vld [vmem:[%s1 + $0x378] sm:$0xff]
        %v437 = vld [vmem:[%s1 + $0x380] sm:$0xff]
        %v438 = vld [vmem:[%s1 + $0x388] sm:$0xff]
        %v439 = vld [vmem:[%s1 + $0x390] sm:$0xff]
        %v440 = vld [vmem:[%s1 + $0x398] sm:$0xff]
        %v441 = vld [vmem:[%s1 + $0x3a0] sm:$0xff]
        %v442 = vld [vmem:[%s1 + $0x3a8] sm:$0xff]
        %v443 = vld [vmem:[%s1 + $0x3b0] sm:$0xff]
        %v444 = vld [vmem:[%s1 + $0x3b8] sm:$0xff]
        %v445 = vld [vmem:[%s1 + $0x3c0] sm:$0xff]
        %v446 = vld [vmem:[%s1 + $0x3c8] sm:$0xff]
        %v447 = vld [vmem:[%s1 + $0x3d0] sm:$0xff]
        %v448 = vld [vmem:[%s1 + $0x3d8] sm:$0xff]
        %v449 = vld [vmem:[%s1 + $0x3e0] sm:$0xff]
        %v450 = vld [vmem:[%s1 + $0x3e8] sm:$0xff]
        %v451 = vld [vmem:[%s1 + $0x3f0] sm:$0xff]
        %v452 = vld [vmem:[%s1 + $0x3f8] sm:$0xff]
        %v453 = vld [vmem:[%s1 + $0x400] sm:$0xff]
        %v454 = vld [vmem:[%s1 + $0x408] sm:$0xff]
        %v455 = vld [vmem:[%s1 + $0x410] sm:$0xff]
        %v456 = vld [vmem:[%s1 + $0x418] sm:$0xff]
        %v457 = vld [vmem:[%s1 + $0x420] sm:$0xff]
        %v458 = vld [vmem:[%s1 + $0x428] sm:$0xff]
        %v459 = vld [vmem:[%s1 + $0x430] sm:$0xff]
        %v460 = vld [vmem:[%s1 + $0x438] sm:$0xff]
        %v461 = vld [vmem:[%s1 + $0x440] sm:$0xff]
        %v462 = vld [vmem:[%s1 + $0x448] sm:$0xff]
        %v463 = vld [vmem:[%s1 + $0x450] sm:$0xff]
        %v464 = vld [vmem:[%s1 + $0x458] sm:$0xff]
        %v465 = vld [vmem:[%s1 + $0x460] sm:$0xff]
        %v466 = vld [vmem:[%s1 + $0x468] sm:$0xff]
        %v467 = vld [vmem:[%s1 + $0x470] sm:$0xff]
        %v468 = vld [vmem:[%s1 + $0x478] sm:$0xff]
        %v469 = vld [vmem:[%s1 + $0x480] sm:$0xff]
        %v470 = vld [vmem:[%s1 + $0x488] sm:$0xff]
        %v471 = vld [vmem:[%s1 + $0x490] sm:$0xff]
        %v472 = vld [vmem:[%s1 + $0x498] sm:$0xff]
        %v473 = vld [vmem:[%s1 + $0x4a0] sm:$0xff]
        %v474 = vld [vmem:[%s1 + $0x4a8] sm:$0xff]
        %v475 = vld [vmem:[%s1 + $0x4b0] sm:$0xff]
        %v476 = vld [vmem:[%s1 + $0x4b8] sm:$0xff]
        %v477 = vld [vmem:[%s1 + $0x4c0] sm:$0xff]
        %v478 = vld [vmem:[%s1 + $0x4c8] sm:$0xff]
        %v479 = vld [vmem:[%s1 + $0x4d0] sm:$0xff]
        %v480 = vld [vmem:[%s1 + $0x4d8] sm:$0xff]
        %v481 = vld [vmem:[%s1 + $0x4e0] sm:$0xff]
        %v482 = vld [vmem:[%s1 + $0x4e8] sm:$0xff]
        %v483 = vld [vmem:[%s1 + $0x4f0] sm:$0xff]
        %v484 = vld [vmem:[%s1 + $0x4f8] sm:$0xff]
        %v485 = vld [vmem:[%s1 + $0x500] sm:$0xff]
        %v486 = vld [vmem:[%s1 + $0x508] sm:$0xff]
        %v487 = vld [vmem:[%s1 + $0x510] sm:$0xff]
        %v488 = vld [vmem:[%s1 + $0x518] sm:$0xff]
        %v489 = vld [vmem:[%s1 + $0x520] sm:$0xff]
        %v490 = vld [vmem:[%s1 + $0x528] sm:$0xff]
        %v491 = vld [vmem:[%s1 + $0x530] sm:$0xff]
        %v492 = vld [vmem:[%s1 + $0x538] sm:$0xff]
        %v493 = vld [vmem:[%s1 + $0x540] sm:$0xff]
        %v494 = vld [vmem:[%s1 + $0x548] sm:$0xff]
        %v495 = vld [vmem:[%s1 + $0x550] sm:$0xff]
        %v496 = vld [vmem:[%s1 + $0x558] sm:$0xff]
        %v497 = vld [vmem:[%s1 + $0x560] sm:$0xff]
        %v498 = vld [vmem:[%s1 + $0x568] sm:$0xff]
        %v499 = vld [vmem:[%s1 + $0x570] sm:$0xff]
        %v500 = vld [vmem:[%s1 + $0x578] sm:$0xff]
        %v501 = vld [vmem:[%s1 + $0x580] sm:$0xff]
        %v502 = vld [vmem:[%s1 + $0x588] sm:$0xff]
        %v503 = vld [vmem:[%s1 + $0x590] sm:$0xff]
        %v504 = vld [vmem:[%s1 + $0x598] sm:$0xff]
        %v505 = vld [vmem:[%s1 + $0x5a0] sm:$0xff]
        %v506 = vld [vmem:[%s1 + $0x5a8] sm:$0xff]
        %v507 = vld [vmem:[%s1 + $0x5b0] sm:$0xff]
        %v508 = vld [vmem:[%s1 + $0x5b8] sm:$0xff]
        %v509 = vld [vmem:[%s1 + $0x5c0] sm:$0xff]
        %v510 = vld [vmem:[%s1 + $0x5c8] sm:$0xff]
        %v511 = vld [vmem:[%s1 + $0x5d0] sm:$0xff]
        %v512 = vld [vmem:[%s1 + $0x5d8] sm:$0xff]
        %v513 = vld [vmem:[%s1 + $0x5e0] sm:$0xff]
        %v514 = vld [vmem:[%s1 + $0x5e8] sm:$0xff]
        %v515 = vld [vmem:[%s1 + $0x5f0] sm:$0xff]
        %v516 = vld [vmem:[%s1 + $0x5f8] sm:$0xff]
        %v517 = vld [vmem:[%s2] sm:$0xf]
        %v519 = vperm.slane %v517, 0
        %v520 = vperm.slane %v517, 1
        %v521 = vperm.slane %v517, 2
        %v522 = vperm.slane %v517, 3
        %v623 = vunpack.c.l.b16 %v229
        %v624 = vunpack.c.h.b16 %v229
        %v625 = vunpack.c.l.b16 %v230
        %v626 = vunpack.c.h.b16 %v230
        %v627 = vunpack.c.l.b16 %v231
        %v628 = vunpack.c.h.b16 %v231
        %v629 = vunpack.c.l.b16 %v232
        %v630 = vunpack.c.h.b16 %v232
        %v631 = vunpack.c.l.b16 %v233
        %v632 = vunpack.c.h.b16 %v233
        %v633 = vunpack.c.l.b16 %v234
        %v634 = vunpack.c.h.b16 %v234
        %v635 = vunpack.c.l.b16 %v235
        %v636 = vunpack.c.h.b16 %v235
        %v637 = vunpack.c.l.b16 %v236
        %v638 = vunpack.c.h.b16 %v236
        %v639 = vunpack.c.l.b16 %v237
        %v640 = vunpack.c.h.b16 %v237
        %v641 = vunpack.c.l.b16 %v238
        %v642 = vunpack.c.h.b16 %v238
        %v643 = vunpack.c.l.b16 %v239
        %v644 = vunpack.c.h.b16 %v239
        %v645 = vunpack.c.l.b16 %v240
        %v646 = vunpack.c.h.b16 %v240
        %v647 = vunpack.c.l.b16 %v241
        %v648 = vunpack.c.h.b16 %v241
        %v649 = vunpack.c.l.b16 %v242
        %v650 = vunpack.c.h.b16 %v242
        %v651 = vunpack.c.l.b16 %v243
        %v652 = vunpack.c.h.b16 %v243
        %v653 = vunpack.c.l.b16 %v244
        %v654 = vunpack.c.h.b16 %v244
        %v655 = vunpack.c.l.b16 %v245
        %v656 = vunpack.c.h.b16 %v245
        %v657 = vunpack.c.l.b16 %v246
        %v658 = vunpack.c.h.b16 %v246
        %v659 = vunpack.c.l.b16 %v247
        %v660 = vunpack.c.h.b16 %v247
        %v661 = vunpack.c.l.b16 %v248
        %v662 = vunpack.c.h.b16 %v248
        %v663 = vunpack.c.l.b16 %v249
        %v664 = vunpack.c.h.b16 %v249
        %v665 = vunpack.c.l.b16 %v250
        %v666 = vunpack.c.h.b16 %v250
        %v667 = vunpack.c.l.b16 %v251
        %v668 = vunpack.c.h.b16 %v251
        %v669 = vunpack.c.l.b16 %v252
        %v670 = vunpack.c.h.b16 %v252
        %v671 = vunpack.c.l.b16 %v253
        %v672 = vunpack.c.h.b16 %v253
        %v673 = vunpack.c.l.b16 %v254
        %v674 = vunpack.c.h.b16 %v254
        %v675 = vunpack.c.l.b16 %v255
        %v676 = vunpack.c.h.b16 %v255
        %v677 = vunpack.c.l.b16 %v256
        %v678 = vunpack.c.h.b16 %v256
        %v679 = vunpack.c.l.b16 %v257
        %v680 = vunpack.c.h.b16 %v257
        %v681 = vunpack.c.l.b16 %v258
        %v682 = vunpack.c.h.b16 %v258
        %v683 = vunpack.c.l.b16 %v259
        %v684 = vunpack.c.h.b16 %v259
        %v685 = vunpack.c.l.b16 %v260
        %v686 = vunpack.c.h.b16 %v260
        %v687 = vunpack.c.l.b16 %v261
        %v688 = vunpack.c.h.b16 %v261
        %v689 = vunpack.c.l.b16 %v262
        %v690 = vunpack.c.h.b16 %v262
        %v691 = vunpack.c.l.b16 %v263
        %v692 = vunpack.c.h.b16 %v263
        %v693 = vunpack.c.l.b16 %v264
        %v694 = vunpack.c.h.b16 %v264
        %v695 = vunpack.c.l.b16 %v265
        %v696 = vunpack.c.h.b16 %v265
        %v697 = vunpack.c.l.b16 %v266
        %v698 = vunpack.c.h.b16 %v266
        %v699 = vunpack.c.l.b16 %v267
        %v700 = vunpack.c.h.b16 %v267
        %v701 = vunpack.c.l.b16 %v268
        %v702 = vunpack.c.h.b16 %v268
        %v703 = vunpack.c.l.b16 %v269
        %v704 = vunpack.c.h.b16 %v269
        %v705 = vunpack.c.l.b16 %v270
        %v706 = vunpack.c.h.b16 %v270
        %v707 = vunpack.c.l.b16 %v271
        %v708 = vunpack.c.h.b16 %v271
        %v709 = vunpack.c.l.b16 %v272
        %v710 = vunpack.c.h.b16 %v272
        %v711 = vunpack.c.l.b16 %v273
        %v712 = vunpack.c.h.b16 %v273
        %v713 = vunpack.c.l.b16 %v274
        %v714 = vunpack.c.h.b16 %v274
        %v715 = vunpack.c.l.b16 %v275
        %v716 = vunpack.c.h.b16 %v275
        %v717 = vunpack.c.l.b16 %v276
        %v718 = vunpack.c.h.b16 %v276
        %v719 = vunpack.c.l.b16 %v277
        %v720 = vunpack.c.h.b16 %v277
        %v721 = vunpack.c.l.b16 %v278
        %v722 = vunpack.c.h.b16 %v278
        %v723 = vunpack.c.l.b16 %v279
        %v724 = vunpack.c.h.b16 %v279
        %v725 = vunpack.c.l.b16 %v280
        %v726 = vunpack.c.h.b16 %v280
        %v727 = vunpack.c.l.b16 %v281
        %v728 = vunpack.c.h.b16 %v281
        %v729 = vunpack.c.l.b16 %v282
        %v730 = vunpack.c.h.b16 %v282
        %v731 = vunpack.c.l.b16 %v283
        %v732 = vunpack.c.h.b16 %v283
        %v733 = vunpack.c.l.b16 %v284
        %v734 = vunpack.c.h.b16 %v284
        %v735 = vunpack.c.l.b16 %v285
        %v736 = vunpack.c.h.b16 %v285
        %v737 = vunpack.c.l.b16 %v286
        %v738 = vunpack.c.h.b16 %v286
        %v739 = vunpack.c.l.b16 %v287
        %v740 = vunpack.c.h.b16 %v287
        %v741 = vunpack.c.l.b16 %v288
        %v742 = vunpack.c.h.b16 %v288
        %v743 = vunpack.c.l.b16 %v289
        %v744 = vunpack.c.h.b16 %v289
        %v745 = vunpack.c.l.b16 %v290
        %v746 = vunpack.c.h.b16 %v290
        %v747 = vunpack.c.l.b16 %v291
        %v748 = vunpack.c.h.b16 %v291
        %v749 = vunpack.c.l.b16 %v292
        %v750 = vunpack.c.h.b16 %v292
        %v751 = vunpack.c.l.b16 %v293
        %v752 = vunpack.c.h.b16 %v293
        %v753 = vunpack.c.l.b16 %v294
        %v754 = vunpack.c.h.b16 %v294
        %v755 = vunpack.c.l.b16 %v295
        %v756 = vunpack.c.h.b16 %v295
        %v757 = vunpack.c.l.b16 %v296
        %v758 = vunpack.c.h.b16 %v296
        %v759 = vunpack.c.l.b16 %v297
        %v760 = vunpack.c.h.b16 %v297
        %v761 = vunpack.c.l.b16 %v298
        %v762 = vunpack.c.h.b16 %v298
        %v763 = vunpack.c.l.b16 %v299
        %v764 = vunpack.c.h.b16 %v299
        %v765 = vunpack.c.l.b16 %v300
        %v766 = vunpack.c.h.b16 %v300
        %v767 = vunpack.c.l.b16 %v301
        %v768 = vunpack.c.h.b16 %v301
        %v769 = vunpack.c.l.b16 %v302
        %v770 = vunpack.c.h.b16 %v302
        %v771 = vunpack.c.l.b16 %v303
        %v772 = vunpack.c.h.b16 %v303
        %v773 = vunpack.c.l.b16 %v304
        %v774 = vunpack.c.h.b16 %v304
        %v775 = vunpack.c.l.b16 %v305
        %v776 = vunpack.c.h.b16 %v305
        %v777 = vunpack.c.l.b16 %v306
        %v778 = vunpack.c.h.b16 %v306
        %v779 = vunpack.c.l.b16 %v307
        %v780 = vunpack.c.h.b16 %v307
        %v781 = vunpack.c.l.b16 %v308
        %v782 = vunpack.c.h.b16 %v308
        %v783 = vunpack.c.l.b16 %v309
        %v784 = vunpack.c.h.b16 %v309
        %v785 = vunpack.c.l.b16 %v310
        %v786 = vunpack.c.h.b16 %v310
        %v787 = vunpack.c.l.b16 %v311
        %v788 = vunpack.c.h.b16 %v311
        %v789 = vunpack.c.l.b16 %v312
        %v790 = vunpack.c.h.b16 %v312
        %v791 = vunpack.c.l.b16 %v313
        %v792 = vunpack.c.h.b16 %v313
        %v793 = vunpack.c.l.b16 %v314
        %v794 = vunpack.c.h.b16 %v314
        %v795 = vunpack.c.l.b16 %v315
        %v796 = vunpack.c.h.b16 %v315
        %v797 = vunpack.c.l.b16 %v316
        %v798 = vunpack.c.h.b16 %v316
        %v799 = vunpack.c.l.b16 %v317
        %v800 = vunpack.c.h.b16 %v317
        %v801 = vunpack.c.l.b16 %v318
        %v802 = vunpack.c.h.b16 %v318
        %v803 = vunpack.c.l.b16 %v319
        %v804 = vunpack.c.h.b16 %v319
        %v805 = vunpack.c.l.b16 %v320
        %v806 = vunpack.c.h.b16 %v320
        %v807 = vunpack.c.l.b16 %v321
        %v808 = vunpack.c.h.b16 %v321
        %v809 = vunpack.c.l.b16 %v322
        %v810 = vunpack.c.h.b16 %v322
        %v811 = vunpack.c.l.b16 %v323
        %v812 = vunpack.c.h.b16 %v323
        %v813 = vunpack.c.l.b16 %v324
        %v814 = vunpack.c.h.b16 %v324
        %v815 = vpack.c.b16 %v629, %v623
        %v816 = vpack.c.b16 %v630, %v624
        %v817 = vpack.c.b16 %v631, %v625
        %v818 = vpack.c.b16 %v632, %v626
        %v819 = vpack.c.b16 %v633, %v627
        %v820 = vpack.c.b16 %v634, %v628
        %v821 = vpack.c.b16 %v641, %v635
        %v822 = vpack.c.b16 %v642, %v636
        %v823 = vpack.c.b16 %v643, %v637
        %v824 = vpack.c.b16 %v644, %v638
        %v825 = vpack.c.b16 %v645, %v639
        %v826 = vpack.c.b16 %v646, %v640
        %v827 = vpack.c.b16 %v653, %v647
        %v828 = vpack.c.b16 %v654, %v648
        %v829 = vpack.c.b16 %v655, %v649
        %v830 = vpack.c.b16 %v656, %v650
        %v831 = vpack.c.b16 %v657, %v651
        %v832 = vpack.c.b16 %v658, %v652
        %v833 = vpack.c.b16 %v665, %v659
        %v834 = vpack.c.b16 %v666, %v660
        %v835 = vpack.c.b16 %v667, %v661
        %v836 = vpack.c.b16 %v668, %v662
        %v837 = vpack.c.b16 %v669, %v663
        %v838 = vpack.c.b16 %v670, %v664
        %v839 = vpack.c.b16 %v677, %v671
        %v840 = vpack.c.b16 %v678, %v672
        %v841 = vpack.c.b16 %v679, %v673
        %v842 = vpack.c.b16 %v680, %v674
        %v843 = vpack.c.b16 %v681, %v675
        %v844 = vpack.c.b16 %v682, %v676
        %v845 = vpack.c.b16 %v689, %v683
        %v846 = vpack.c.b16 %v690, %v684
        %v847 = vpack.c.b16 %v691, %v685
        %v848 = vpack.c.b16 %v692, %v686
        %v849 = vpack.c.b16 %v693, %v687
        %v850 = vpack.c.b16 %v694, %v688
        %v851 = vpack.c.b16 %v701, %v695
        %v852 = vpack.c.b16 %v702, %v696
        %v853 = vpack.c.b16 %v703, %v697
        %v854 = vpack.c.b16 %v704, %v698
        %v855 = vpack.c.b16 %v705, %v699
        %v856 = vpack.c.b16 %v706, %v700
        %v857 = vpack.c.b16 %v713, %v707
        %v858 = vpack.c.b16 %v714, %v708
        %v859 = vpack.c.b16 %v715, %v709
        %v860 = vpack.c.b16 %v716, %v710
        %v861 = vpack.c.b16 %v717, %v711
        %v862 = vpack.c.b16 %v718, %v712
        %v863 = vpack.c.b16 %v725, %v719
        %v864 = vpack.c.b16 %v726, %v720
        %v865 = vpack.c.b16 %v727, %v721
        %v866 = vpack.c.b16 %v728, %v722
        %v867 = vpack.c.b16 %v729, %v723
        %v868 = vpack.c.b16 %v730, %v724
        %v869 = vpack.c.b16 %v737, %v731
        %v870 = vpack.c.b16 %v738, %v732
        %v871 = vpack.c.b16 %v739, %v733
        %v872 = vpack.c.b16 %v740, %v734
        %v873 = vpack.c.b16 %v741, %v735
        %v874 = vpack.c.b16 %v742, %v736
        %v875 = vpack.c.b16 %v749, %v743
        %v876 = vpack.c.b16 %v750, %v744
        %v877 = vpack.c.b16 %v751, %v745
        %v878 = vpack.c.b16 %v752, %v746
        %v879 = vpack.c.b16 %v753, %v747
        %v880 = vpack.c.b16 %v754, %v748
        %v881 = vpack.c.b16 %v761, %v755
        %v882 = vpack.c.b16 %v762, %v756
        %v883 = vpack.c.b16 %v763, %v757
        %v884 = vpack.c.b16 %v764, %v758
        %v885 = vpack.c.b16 %v765, %v759
        %v886 = vpack.c.b16 %v766, %v760
        %v887 = vpack.c.b16 %v773, %v767
        %v888 = vpack.c.b16 %v774, %v768
        %v889 = vpack.c.b16 %v775, %v769
        %v890 = vpack.c.b16 %v776, %v770
        %v891 = vpack.c.b16 %v777, %v771
        %v892 = vpack.c.b16 %v778, %v772
        %v893 = vpack.c.b16 %v785, %v779
        %v894 = vpack.c.b16 %v786, %v780
        %v895 = vpack.c.b16 %v787, %v781
        %v896 = vpack.c.b16 %v788, %v782
        %v897 = vpack.c.b16 %v789, %v783
        %v898 = vpack.c.b16 %v790, %v784
        %v899 = vpack.c.b16 %v797, %v791
        %v900 = vpack.c.b16 %v798, %v792
        %v901 = vpack.c.b16 %v799, %v793
        %v902 = vpack.c.b16 %v800, %v794
        %v903 = vpack.c.b16 %v801, %v795
        %v904 = vpack.c.b16 %v802, %v796
        %v905 = vpack.c.b16 %v809, %v803
        %v906 = vpack.c.b16 %v810, %v804
        %v907 = vpack.c.b16 %v811, %v805
        %v908 = vpack.c.b16 %v812, %v806
        %v909 = vpack.c.b16 %v813, %v807
        %v910 = vpack.c.b16 %v814, %v808
        %v1199 = vunpack.c.l.b16 %v325
        %v1200 = vunpack.c.h.b16 %v325
        %v1201 = vunpack.c.l.b16 %v326
        %v1202 = vunpack.c.h.b16 %v326
        %v1203 = vunpack.c.l.b16 %v327
        %v1204 = vunpack.c.h.b16 %v327
        %v1205 = vunpack.c.l.b16 %v328
        %v1206 = vunpack.c.h.b16 %v328
        %v1207 = vunpack.c.l.b16 %v329
        %v1208 = vunpack.c.h.b16 %v329
        %v1209 = vunpack.c.l.b16 %v330
        %v1210 = vunpack.c.h.b16 %v330
        %v1211 = vunpack.c.l.b16 %v331
        %v1212 = vunpack.c.h.b16 %v331
        %v1213 = vunpack.c.l.b16 %v332
        %v1214 = vunpack.c.h.b16 %v332
        %v1215 = vunpack.c.l.b16 %v333
        %v1216 = vunpack.c.h.b16 %v333
        %v1217 = vunpack.c.l.b16 %v334
        %v1218 = vunpack.c.h.b16 %v334
        %v1219 = vunpack.c.l.b16 %v335
        %v1220 = vunpack.c.h.b16 %v335
        %v1221 = vunpack.c.l.b16 %v336
        %v1222 = vunpack.c.h.b16 %v336
        %v1223 = vunpack.c.l.b16 %v337
        %v1224 = vunpack.c.h.b16 %v337
        %v1225 = vunpack.c.l.b16 %v338
        %v1226 = vunpack.c.h.b16 %v338
        %v1227 = vunpack.c.l.b16 %v339
        %v1228 = vunpack.c.h.b16 %v339
        %v1229 = vunpack.c.l.b16 %v340
        %v1230 = vunpack.c.h.b16 %v340
        %v1231 = vunpack.c.l.b16 %v341
        %v1232 = vunpack.c.h.b16 %v341
        %v1233 = vunpack.c.l.b16 %v342
        %v1234 = vunpack.c.h.b16 %v342
        %v1235 = vunpack.c.l.b16 %v343
        %v1236 = vunpack.c.h.b16 %v343
        %v1237 = vunpack.c.l.b16 %v344
        %v1238 = vunpack.c.h.b16 %v344
        %v1239 = vunpack.c.l.b16 %v345
        %v1240 = vunpack.c.h.b16 %v345
        %v1241 = vunpack.c.l.b16 %v346
        %v1242 = vunpack.c.h.b16 %v346
        %v1243 = vunpack.c.l.b16 %v347
        %v1244 = vunpack.c.h.b16 %v347
        %v1245 = vunpack.c.l.b16 %v348
        %v1246 = vunpack.c.h.b16 %v348
        %v1247 = vunpack.c.l.b16 %v349
        %v1248 = vunpack.c.h.b16 %v349
        %v1249 = vunpack.c.l.b16 %v350
        %v1250 = vunpack.c.h.b16 %v350
        %v1251 = vunpack.c.l.b16 %v351
        %v1252 = vunpack.c.h.b16 %v351
        %v1253 = vunpack.c.l.b16 %v352
        %v1254 = vunpack.c.h.b16 %v352
        %v1255 = vunpack.c.l.b16 %v353
        %v1256 = vunpack.c.h.b16 %v353
        %v1257 = vunpack.c.l.b16 %v354
        %v1258 = vunpack.c.h.b16 %v354
        %v1259 = vunpack.c.l.b16 %v355
        %v1260 = vunpack.c.h.b16 %v355
        %v1261 = vunpack.c.l.b16 %v356
        %v1262 = vunpack.c.h.b16 %v356
        %v1263 = vunpack.c.l.b16 %v357
        %v1264 = vunpack.c.h.b16 %v357
        %v1265 = vunpack.c.l.b16 %v358
        %v1266 = vunpack.c.h.b16 %v358
        %v1267 = vunpack.c.l.b16 %v359
        %v1268 = vunpack.c.h.b16 %v359
        %v1269 = vunpack.c.l.b16 %v360
        %v1270 = vunpack.c.h.b16 %v360
        %v1271 = vunpack.c.l.b16 %v361
        %v1272 = vunpack.c.h.b16 %v361
        %v1273 = vunpack.c.l.b16 %v362
        %v1274 = vunpack.c.h.b16 %v362
        %v1275 = vunpack.c.l.b16 %v363
        %v1276 = vunpack.c.h.b16 %v363
        %v1277 = vunpack.c.l.b16 %v364
        %v1278 = vunpack.c.h.b16 %v364
        %v1279 = vunpack.c.l.b16 %v365
        %v1280 = vunpack.c.h.b16 %v365
        %v1281 = vunpack.c.l.b16 %v366
        %v1282 = vunpack.c.h.b16 %v366
        %v1283 = vunpack.c.l.b16 %v367
        %v1284 = vunpack.c.h.b16 %v367
        %v1285 = vunpack.c.l.b16 %v368
        %v1286 = vunpack.c.h.b16 %v368
        %v1287 = vunpack.c.l.b16 %v369
        %v1288 = vunpack.c.h.b16 %v369
        %v1289 = vunpack.c.l.b16 %v370
        %v1290 = vunpack.c.h.b16 %v370
        %v1291 = vunpack.c.l.b16 %v371
        %v1292 = vunpack.c.h.b16 %v371
        %v1293 = vunpack.c.l.b16 %v372
        %v1294 = vunpack.c.h.b16 %v372
        %v1295 = vunpack.c.l.b16 %v373
        %v1296 = vunpack.c.h.b16 %v373
        %v1297 = vunpack.c.l.b16 %v374
        %v1298 = vunpack.c.h.b16 %v374
        %v1299 = vunpack.c.l.b16 %v375
        %v1300 = vunpack.c.h.b16 %v375
        %v1301 = vunpack.c.l.b16 %v376
        %v1302 = vunpack.c.h.b16 %v376
        %v1303 = vunpack.c.l.b16 %v377
        %v1304 = vunpack.c.h.b16 %v377
        %v1305 = vunpack.c.l.b16 %v378
        %v1306 = vunpack.c.h.b16 %v378
        %v1307 = vunpack.c.l.b16 %v379
        %v1308 = vunpack.c.h.b16 %v379
        %v1309 = vunpack.c.l.b16 %v380
        %v1310 = vunpack.c.h.b16 %v380
        %v1311 = vunpack.c.l.b16 %v381
        %v1312 = vunpack.c.h.b16 %v381
        %v1313 = vunpack.c.l.b16 %v382
        %v1314 = vunpack.c.h.b16 %v382
        %v1315 = vunpack.c.l.b16 %v383
        %v1316 = vunpack.c.h.b16 %v383
        %v1317 = vunpack.c.l.b16 %v384
        %v1318 = vunpack.c.h.b16 %v384
        %v1319 = vunpack.c.l.b16 %v385
        %v1320 = vunpack.c.h.b16 %v385
        %v1321 = vunpack.c.l.b16 %v386
        %v1322 = vunpack.c.h.b16 %v386
        %v1323 = vunpack.c.l.b16 %v387
        %v1324 = vunpack.c.h.b16 %v387
        %v1325 = vunpack.c.l.b16 %v388
        %v1326 = vunpack.c.h.b16 %v388
        %v1327 = vunpack.c.l.b16 %v389
        %v1328 = vunpack.c.h.b16 %v389
        %v1329 = vunpack.c.l.b16 %v390
        %v1330 = vunpack.c.h.b16 %v390
        %v1331 = vunpack.c.l.b16 %v391
        %v1332 = vunpack.c.h.b16 %v391
        %v1333 = vunpack.c.l.b16 %v392
        %v1334 = vunpack.c.h.b16 %v392
        %v1335 = vunpack.c.l.b16 %v393
        %v1336 = vunpack.c.h.b16 %v393
        %v1337 = vunpack.c.l.b16 %v394
        %v1338 = vunpack.c.h.b16 %v394
        %v1339 = vunpack.c.l.b16 %v395
        %v1340 = vunpack.c.h.b16 %v395
        %v1341 = vunpack.c.l.b16 %v396
        %v1342 = vunpack.c.h.b16 %v396
        %v1343 = vunpack.c.l.b16 %v397
        %v1344 = vunpack.c.h.b16 %v397
        %v1345 = vunpack.c.l.b16 %v398
        %v1346 = vunpack.c.h.b16 %v398
        %v1347 = vunpack.c.l.b16 %v399
        %v1348 = vunpack.c.h.b16 %v399
        %v1349 = vunpack.c.l.b16 %v400
        %v1350 = vunpack.c.h.b16 %v400
        %v1351 = vunpack.c.l.b16 %v401
        %v1352 = vunpack.c.h.b16 %v401
        %v1353 = vunpack.c.l.b16 %v402
        %v1354 = vunpack.c.h.b16 %v402
        %v1355 = vunpack.c.l.b16 %v403
        %v1356 = vunpack.c.h.b16 %v403
        %v1357 = vunpack.c.l.b16 %v404
        %v1358 = vunpack.c.h.b16 %v404
        %v1359 = vunpack.c.l.b16 %v405
        %v1360 = vunpack.c.h.b16 %v405
        %v1361 = vunpack.c.l.b16 %v406
        %v1362 = vunpack.c.h.b16 %v406
        %v1363 = vunpack.c.l.b16 %v407
        %v1364 = vunpack.c.h.b16 %v407
        %v1365 = vunpack.c.l.b16 %v408
        %v1366 = vunpack.c.h.b16 %v408
        %v1367 = vunpack.c.l.b16 %v409
        %v1368 = vunpack.c.h.b16 %v409
        %v1369 = vunpack.c.l.b16 %v410
        %v1370 = vunpack.c.h.b16 %v410
        %v1371 = vunpack.c.l.b16 %v411
        %v1372 = vunpack.c.h.b16 %v411
        %v1373 = vunpack.c.l.b16 %v412
        %v1374 = vunpack.c.h.b16 %v412
        %v1375 = vunpack.c.l.b16 %v413
        %v1376 = vunpack.c.h.b16 %v413
        %v1377 = vunpack.c.l.b16 %v414
        %v1378 = vunpack.c.h.b16 %v414
        %v1379 = vunpack.c.l.b16 %v415
        %v1380 = vunpack.c.h.b16 %v415
        %v1381 = vunpack.c.l.b16 %v416
        %v1382 = vunpack.c.h.b16 %v416
        %v1383 = vunpack.c.l.b16 %v417
        %v1384 = vunpack.c.h.b16 %v417
        %v1385 = vunpack.c.l.b16 %v418
        %v1386 = vunpack.c.h.b16 %v418
        %v1387 = vunpack.c.l.b16 %v419
        %v1388 = vunpack.c.h.b16 %v419
        %v1389 = vunpack.c.l.b16 %v420
        %v1390 = vunpack.c.h.b16 %v420
        %v1391 = vunpack.c.l.b16 %v421
        %v1392 = vunpack.c.h.b16 %v421
        %v1393 = vunpack.c.l.b16 %v422
        %v1394 = vunpack.c.h.b16 %v422
        %v1395 = vunpack.c.l.b16 %v423
        %v1396 = vunpack.c.h.b16 %v423
        %v1397 = vunpack.c.l.b16 %v424
        %v1398 = vunpack.c.h.b16 %v424
        %v1399 = vunpack.c.l.b16 %v425
        %v1400 = vunpack.c.h.b16 %v425
        %v1401 = vunpack.c.l.b16 %v426
        %v1402 = vunpack.c.h.b16 %v426
        %v1403 = vunpack.c.l.b16 %v427
        %v1404 = vunpack.c.h.b16 %v427
        %v1405 = vunpack.c.l.b16 %v428
        %v1406 = vunpack.c.h.b16 %v428
        %v1407 = vunpack.c.l.b16 %v429
        %v1408 = vunpack.c.h.b16 %v429
        %v1409 = vunpack.c.l.b16 %v430
        %v1410 = vunpack.c.h.b16 %v430
        %v1411 = vunpack.c.l.b16 %v431
        %v1412 = vunpack.c.h.b16 %v431
        %v1413 = vunpack.c.l.b16 %v432
        %v1414 = vunpack.c.h.b16 %v432
        %v1415 = vunpack.c.l.b16 %v433
        %v1416 = vunpack.c.h.b16 %v433
        %v1417 = vunpack.c.l.b16 %v434
        %v1418 = vunpack.c.h.b16 %v434
        %v1419 = vunpack.c.l.b16 %v435
        %v1420 = vunpack.c.h.b16 %v435
        %v1421 = vunpack.c.l.b16 %v436
        %v1422 = vunpack.c.h.b16 %v436
        %v1423 = vunpack.c.l.b16 %v437
        %v1424 = vunpack.c.h.b16 %v437
        %v1425 = vunpack.c.l.b16 %v438
        %v1426 = vunpack.c.h.b16 %v438
        %v1427 = vunpack.c.l.b16 %v439
        %v1428 = vunpack.c.h.b16 %v439
        %v1429 = vunpack.c.l.b16 %v440
        %v1430 = vunpack.c.h.b16 %v440
        %v1431 = vunpack.c.l.b16 %v441
        %v1432 = vunpack.c.h.b16 %v441
        %v1433 = vunpack.c.l.b16 %v442
        %v1434 = vunpack.c.h.b16 %v442
        %v1435 = vunpack.c.l.b16 %v443
        %v1436 = vunpack.c.h.b16 %v443
        %v1437 = vunpack.c.l.b16 %v444
        %v1438 = vunpack.c.h.b16 %v444
        %v1439 = vunpack.c.l.b16 %v445
        %v1440 = vunpack.c.h.b16 %v445
        %v1441 = vunpack.c.l.b16 %v446
        %v1442 = vunpack.c.h.b16 %v446
        %v1443 = vunpack.c.l.b16 %v447
        %v1444 = vunpack.c.h.b16 %v447
        %v1445 = vunpack.c.l.b16 %v448
        %v1446 = vunpack.c.h.b16 %v448
        %v1447 = vunpack.c.l.b16 %v449
        %v1448 = vunpack.c.h.b16 %v449
        %v1449 = vunpack.c.l.b16 %v450
        %v1450 = vunpack.c.h.b16 %v450
        %v1451 = vunpack.c.l.b16 %v451
        %v1452 = vunpack.c.h.b16 %v451
        %v1453 = vunpack.c.l.b16 %v452
        %v1454 = vunpack.c.h.b16 %v452
        %v1455 = vunpack.c.l.b16 %v453
        %v1456 = vunpack.c.h.b16 %v453
        %v1457 = vunpack.c.l.b16 %v454
        %v1458 = vunpack.c.h.b16 %v454
        %v1459 = vunpack.c.l.b16 %v455
        %v1460 = vunpack.c.h.b16 %v455
        %v1461 = vunpack.c.l.b16 %v456
        %v1462 = vunpack.c.h.b16 %v456
        %v1463 = vunpack.c.l.b16 %v457
        %v1464 = vunpack.c.h.b16 %v457
        %v1465 = vunpack.c.l.b16 %v458
        %v1466 = vunpack.c.h.b16 %v458
        %v1467 = vunpack.c.l.b16 %v459
        %v1468 = vunpack.c.h.b16 %v459
        %v1469 = vunpack.c.l.b16 %v460
        %v1470 = vunpack.c.h.b16 %v460
        %v1471 = vunpack.c.l.b16 %v461
        %v1472 = vunpack.c.h.b16 %v461
        %v1473 = vunpack.c.l.b16 %v462
        %v1474 = vunpack.c.h.b16 %v462
        %v1475 = vunpack.c.l.b16 %v463
        %v1476 = vunpack.c.h.b16 %v463
        %v1477 = vunpack.c.l.b16 %v464
        %v1478 = vunpack.c.h.b16 %v464
        %v1479 = vunpack.c.l.b16 %v465
        %v1480 = vunpack.c.h.b16 %v465
        %v1481 = vunpack.c.l.b16 %v466
        %v1482 = vunpack.c.h.b16 %v466
        %v1483 = vunpack.c.l.b16 %v467
        %v1484 = vunpack.c.h.b16 %v467
        %v1485 = vunpack.c.l.b16 %v468
        %v1486 = vunpack.c.h.b16 %v468
        %v1487 = vunpack.c.l.b16 %v469
        %v1488 = vunpack.c.h.b16 %v469
        %v1489 = vunpack.c.l.b16 %v470
        %v1490 = vunpack.c.h.b16 %v470
        %v1491 = vunpack.c.l.b16 %v471
        %v1492 = vunpack.c.h.b16 %v471
        %v1493 = vunpack.c.l.b16 %v472
        %v1494 = vunpack.c.h.b16 %v472
        %v1495 = vunpack.c.l.b16 %v473
        %v1496 = vunpack.c.h.b16 %v473
        %v1497 = vunpack.c.l.b16 %v474
        %v1498 = vunpack.c.h.b16 %v474
        %v1499 = vunpack.c.l.b16 %v475
        %v1500 = vunpack.c.h.b16 %v475
        %v1501 = vunpack.c.l.b16 %v476
        %v1502 = vunpack.c.h.b16 %v476
        %v1503 = vunpack.c.l.b16 %v477
        %v1504 = vunpack.c.h.b16 %v477
        %v1505 = vunpack.c.l.b16 %v478
        %v1506 = vunpack.c.h.b16 %v478
        %v1507 = vunpack.c.l.b16 %v479
        %v1508 = vunpack.c.h.b16 %v479
        %v1509 = vunpack.c.l.b16 %v480
        %v1510 = vunpack.c.h.b16 %v480
        %v1511 = vunpack.c.l.b16 %v481
        %v1512 = vunpack.c.h.b16 %v481
        %v1513 = vunpack.c.l.b16 %v482
        %v1514 = vunpack.c.h.b16 %v482
        %v1515 = vunpack.c.l.b16 %v483
        %v1516 = vunpack.c.h.b16 %v483
        %v1517 = vunpack.c.l.b16 %v484
        %v1518 = vunpack.c.h.b16 %v484
        %v1519 = vunpack.c.l.b16 %v485
        %v1520 = vunpack.c.h.b16 %v485
        %v1521 = vunpack.c.l.b16 %v486
        %v1522 = vunpack.c.h.b16 %v486
        %v1523 = vunpack.c.l.b16 %v487
        %v1524 = vunpack.c.h.b16 %v487
        %v1525 = vunpack.c.l.b16 %v488
        %v1526 = vunpack.c.h.b16 %v488
        %v1527 = vunpack.c.l.b16 %v489
        %v1528 = vunpack.c.h.b16 %v489
        %v1529 = vunpack.c.l.b16 %v490
        %v1530 = vunpack.c.h.b16 %v490
        %v1531 = vunpack.c.l.b16 %v491
        %v1532 = vunpack.c.h.b16 %v491
        %v1533 = vunpack.c.l.b16 %v492
        %v1534 = vunpack.c.h.b16 %v492
        %v1535 = vunpack.c.l.b16 %v493
        %v1536 = vunpack.c.h.b16 %v493
        %v1537 = vunpack.c.l.b16 %v494
        %v1538 = vunpack.c.h.b16 %v494
        %v1539 = vunpack.c.l.b16 %v495
        %v1540 = vunpack.c.h.b16 %v495
        %v1541 = vunpack.c.l.b16 %v496
        %v1542 = vunpack.c.h.b16 %v496
        %v1543 = vunpack.c.l.b16 %v497
        %v1544 = vunpack.c.h.b16 %v497
        %v1545 = vunpack.c.l.b16 %v498
        %v1546 = vunpack.c.h.b16 %v498
        %v1547 = vunpack.c.l.b16 %v499
        %v1548 = vunpack.c.h.b16 %v499
        %v1549 = vunpack.c.l.b16 %v500
        %v1550 = vunpack.c.h.b16 %v500
        %v1551 = vunpack.c.l.b16 %v501
        %v1552 = vunpack.c.h.b16 %v501
        %v1553 = vunpack.c.l.b16 %v502
        %v1554 = vunpack.c.h.b16 %v502
        %v1555 = vunpack.c.l.b16 %v503
        %v1556 = vunpack.c.h.b16 %v503
        %v1557 = vunpack.c.l.b16 %v504
        %v1558 = vunpack.c.h.b16 %v504
        %v1559 = vunpack.c.l.b16 %v505
        %v1560 = vunpack.c.h.b16 %v505
        %v1561 = vunpack.c.l.b16 %v506
        %v1562 = vunpack.c.h.b16 %v506
        %v1563 = vunpack.c.l.b16 %v507
        %v1564 = vunpack.c.h.b16 %v507
        %v1565 = vunpack.c.l.b16 %v508
        %v1566 = vunpack.c.h.b16 %v508
        %v1567 = vunpack.c.l.b16 %v509
        %v1568 = vunpack.c.h.b16 %v509
        %v1569 = vunpack.c.l.b16 %v510
        %v1570 = vunpack.c.h.b16 %v510
        %v1571 = vunpack.c.l.b16 %v511
        %v1572 = vunpack.c.h.b16 %v511
        %v1573 = vunpack.c.l.b16 %v512
        %v1574 = vunpack.c.h.b16 %v512
        %v1575 = vunpack.c.l.b16 %v513
        %v1576 = vunpack.c.h.b16 %v513
        %v1577 = vunpack.c.l.b16 %v514
        %v1578 = vunpack.c.h.b16 %v514
        %v1579 = vunpack.c.l.b16 %v515
        %v1580 = vunpack.c.h.b16 %v515
        %v1581 = vunpack.c.l.b16 %v516
        %v1582 = vunpack.c.h.b16 %v516
        %v1583 = vpack.c.b16 %v1203, %v1199
        %v1584 = vpack.c.b16 %v1204, %v1200
        %v1585 = vpack.c.b16 %v1205, %v1201
        %v1586 = vpack.c.b16 %v1206, %v1202
        %v1587 = vpack.c.b16 %v1211, %v1207
        %v1588 = vpack.c.b16 %v1212, %v1208
        %v1589 = vpack.c.b16 %v1213, %v1209
        %v1590 = vpack.c.b16 %v1214, %v1210
        %v1591 = vpack.c.b16 %v1219, %v1215
        %v1592 = vpack.c.b16 %v1220, %v1216
        %v1593 = vpack.c.b16 %v1221, %v1217
        %v1594 = vpack.c.b16 %v1222, %v1218
        %v1595 = vpack.c.b16 %v1227, %v1223
        %v1596 = vpack.c.b16 %v1228, %v1224
        %v1597 = vpack.c.b16 %v1229, %v1225
        %v1598 = vpack.c.b16 %v1230, %v1226
        %v1599 = vpack.c.b16 %v1235, %v1231
        %v1600 = vpack.c.b16 %v1236, %v1232
        %v1601 = vpack.c.b16 %v1237, %v1233
        %v1602 = vpack.c.b16 %v1238, %v1234
        %v1603 = vpack.c.b16 %v1243, %v1239
        %v1604 = vpack.c.b16 %v1244, %v1240
        %v1605 = vpack.c.b16 %v1245, %v1241
        %v1606 = vpack.c.b16 %v1246, %v1242
        %v1607 = vpack.c.b16 %v1251, %v1247
        %v1608 = vpack.c.b16 %v1252, %v1248
        %v1609 = vpack.c.b16 %v1253, %v1249
        %v1610 = vpack.c.b16 %v1254, %v1250
        %v1611 = vpack.c.b16 %v1259, %v1255
        %v1612 = vpack.c.b16 %v1260, %v1256
        %v1613 = vpack.c.b16 %v1261, %v1257
        %v1614 = vpack.c.b16 %v1262, %v1258
        %v1615 = vpack.c.b16 %v1267, %v1263
        %v1616 = vpack.c.b16 %v1268, %v1264
        %v1617 = vpack.c.b16 %v1269, %v1265
        %v1618 = vpack.c.b16 %v1270, %v1266
        %v1619 = vpack.c.b16 %v1275, %v1271
        %v1620 = vpack.c.b16 %v1276, %v1272
        %v1621 = vpack.c.b16 %v1277, %v1273
        %v1622 = vpack.c.b16 %v1278, %v1274
        %v1623 = vpack.c.b16 %v1283, %v1279
        %v1624 = vpack.c.b16 %v1284, %v1280
        %v1625 = vpack.c.b16 %v1285, %v1281
        %v1626 = vpack.c.b16 %v1286, %v1282
        %v1627 = vpack.c.b16 %v1291, %v1287
        %v1628 = vpack.c.b16 %v1292, %v1288
        %v1629 = vpack.c.b16 %v1293, %v1289
        %v1630 = vpack.c.b16 %v1294, %v1290
        %v1631 = vpack.c.b16 %v1299, %v1295
        %v1632 = vpack.c.b16 %v1300, %v1296
        %v1633 = vpack.c.b16 %v1301, %v1297
        %v1634 = vpack.c.b16 %v1302, %v1298
        %v1635 = vpack.c.b16 %v1307, %v1303
        %v1636 = vpack.c.b16 %v1308, %v1304
        %v1637 = vpack.c.b16 %v1309, %v1305
        %v1638 = vpack.c.b16 %v1310, %v1306
        %v1639 = vpack.c.b16 %v1315, %v1311
        %v1640 = vpack.c.b16 %v1316, %v1312
        %v1641 = vpack.c.b16 %v1317, %v1313
        %v1642 = vpack.c.b16 %v1318, %v1314
        %v1643 = vpack.c.b16 %v1323, %v1319
        %v1644 = vpack.c.b16 %v1324, %v1320
        %v1645 = vpack.c.b16 %v1325, %v1321
        %v1646 = vpack.c.b16 %v1326, %v1322
        %v1647 = vpack.c.b16 %v1331, %v1327
        %v1648 = vpack.c.b16 %v1332, %v1328
        %v1649 = vpack.c.b16 %v1333, %v1329
        %v1650 = vpack.c.b16 %v1334, %v1330
        %v1651 = vpack.c.b16 %v1339, %v1335
        %v1652 = vpack.c.b16 %v1340, %v1336
        %v1653 = vpack.c.b16 %v1341, %v1337
        %v1654 = vpack.c.b16 %v1342, %v1338
        %v1655 = vpack.c.b16 %v1347, %v1343
        %v1656 = vpack.c.b16 %v1348, %v1344
        %v1657 = vpack.c.b16 %v1349, %v1345
        %v1658 = vpack.c.b16 %v1350, %v1346
        %v1659 = vpack.c.b16 %v1355, %v1351
        %v1660 = vpack.c.b16 %v1356, %v1352
        %v1661 = vpack.c.b16 %v1357, %v1353
        %v1662 = vpack.c.b16 %v1358, %v1354
        %v1663 = vpack.c.b16 %v1363, %v1359
        %v1664 = vpack.c.b16 %v1364, %v1360
        %v1665 = vpack.c.b16 %v1365, %v1361
        %v1666 = vpack.c.b16 %v1366, %v1362
        %v1667 = vpack.c.b16 %v1371, %v1367
        %v1668 = vpack.c.b16 %v1372, %v1368
        %v1669 = vpack.c.b16 %v1373, %v1369
        %v1670 = vpack.c.b16 %v1374, %v1370
        %v1671 = vpack.c.b16 %v1379, %v1375
        %v1672 = vpack.c.b16 %v1380, %v1376
        %v1673 = vpack.c.b16 %v1381, %v1377
        %v1674 = vpack.c.b16 %v1382, %v1378
        %v1675 = vpack.c.b16 %v1387, %v1383
        %v1676 = vpack.c.b16 %v1388, %v1384
        %v1677 = vpack.c.b16 %v1389, %v1385
        %v1678 = vpack.c.b16 %v1390, %v1386
        %v1679 = vpack.c.b16 %v1395, %v1391
        %v1680 = vpack.c.b16 %v1396, %v1392
        %v1681 = vpack.c.b16 %v1397, %v1393
        %v1682 = vpack.c.b16 %v1398, %v1394
        %v1683 = vpack.c.b16 %v1403, %v1399
        %v1684 = vpack.c.b16 %v1404, %v1400
        %v1685 = vpack.c.b16 %v1405, %v1401
        %v1686 = vpack.c.b16 %v1406, %v1402
        %v1687 = vpack.c.b16 %v1411, %v1407
        %v1688 = vpack.c.b16 %v1412, %v1408
        %v1689 = vpack.c.b16 %v1413, %v1409
        %v1690 = vpack.c.b16 %v1414, %v1410
        %v1691 = vpack.c.b16 %v1419, %v1415
        %v1692 = vpack.c.b16 %v1420, %v1416
        %v1693 = vpack.c.b16 %v1421, %v1417
        %v1694 = vpack.c.b16 %v1422, %v1418
        %v1695 = vpack.c.b16 %v1427, %v1423
        %v1696 = vpack.c.b16 %v1428, %v1424
        %v1697 = vpack.c.b16 %v1429, %v1425
        %v1698 = vpack.c.b16 %v1430, %v1426
        %v1699 = vpack.c.b16 %v1435, %v1431
        %v1700 = vpack.c.b16 %v1436, %v1432
        %v1701 = vpack.c.b16 %v1437, %v1433
        %v1702 = vpack.c.b16 %v1438, %v1434
        %v1703 = vpack.c.b16 %v1443, %v1439
        %v1704 = vpack.c.b16 %v1444, %v1440
        %v1705 = vpack.c.b16 %v1445, %v1441
        %v1706 = vpack.c.b16 %v1446, %v1442
        %v1707 = vpack.c.b16 %v1451, %v1447
        %v1708 = vpack.c.b16 %v1452, %v1448
        %v1709 = vpack.c.b16 %v1453, %v1449
        %v1710 = vpack.c.b16 %v1454, %v1450
        %v1711 = vpack.c.b16 %v1459, %v1455
        %v1712 = vpack.c.b16 %v1460, %v1456
        %v1713 = vpack.c.b16 %v1461, %v1457
        %v1714 = vpack.c.b16 %v1462, %v1458
        %v1715 = vpack.c.b16 %v1467, %v1463
        %v1716 = vpack.c.b16 %v1468, %v1464
        %v1717 = vpack.c.b16 %v1469, %v1465
        %v1718 = vpack.c.b16 %v1470, %v1466
        %v1719 = vpack.c.b16 %v1475, %v1471
        %v1720 = vpack.c.b16 %v1476, %v1472
        %v1721 = vpack.c.b16 %v1477, %v1473
        %v1722 = vpack.c.b16 %v1478, %v1474
        %v1723 = vpack.c.b16 %v1483, %v1479
        %v1724 = vpack.c.b16 %v1484, %v1480
        %v1725 = vpack.c.b16 %v1485, %v1481
        %v1726 = vpack.c.b16 %v1486, %v1482
        %v1727 = vpack.c.b16 %v1491, %v1487
        %v1728 = vpack.c.b16 %v1492, %v1488
        %v1729 = vpack.c.b16 %v1493, %v1489
        %v1730 = vpack.c.b16 %v1494, %v1490
        %v1731 = vpack.c.b16 %v1499, %v1495
        %v1732 = vpack.c.b16 %v1500, %v1496
        %v1733 = vpack.c.b16 %v1501, %v1497
        %v1734 = vpack.c.b16 %v1502, %v1498
        %v1735 = vpack.c.b16 %v1507, %v1503
        %v1736 = vpack.c.b16 %v1508, %v1504
        %v1737 = vpack.c.b16 %v1509, %v1505
        %v1738 = vpack.c.b16 %v1510, %v1506
        %v1739 = vpack.c.b16 %v1515, %v1511
        %v1740 = vpack.c.b16 %v1516, %v1512
        %v1741 = vpack.c.b16 %v1517, %v1513
        %v1742 = vpack.c.b16 %v1518, %v1514
        %v1743 = vpack.c.b16 %v1523, %v1519
        %v1744 = vpack.c.b16 %v1524, %v1520
        %v1745 = vpack.c.b16 %v1525, %v1521
        %v1746 = vpack.c.b16 %v1526, %v1522
        %v1747 = vpack.c.b16 %v1531, %v1527
        %v1748 = vpack.c.b16 %v1532, %v1528
        %v1749 = vpack.c.b16 %v1533, %v1529
        %v1750 = vpack.c.b16 %v1534, %v1530
        %v1751 = vpack.c.b16 %v1539, %v1535
        %v1752 = vpack.c.b16 %v1540, %v1536
        %v1753 = vpack.c.b16 %v1541, %v1537
        %v1754 = vpack.c.b16 %v1542, %v1538
        %v1755 = vpack.c.b16 %v1547, %v1543
        %v1756 = vpack.c.b16 %v1548, %v1544
        %v1757 = vpack.c.b16 %v1549, %v1545
        %v1758 = vpack.c.b16 %v1550, %v1546
        %v1759 = vpack.c.b16 %v1555, %v1551
        %v1760 = vpack.c.b16 %v1556, %v1552
        %v1761 = vpack.c.b16 %v1557, %v1553
        %v1762 = vpack.c.b16 %v1558, %v1554
        %v1763 = vpack.c.b16 %v1563, %v1559
        %v1764 = vpack.c.b16 %v1564, %v1560
        %v1765 = vpack.c.b16 %v1565, %v1561
        %v1766 = vpack.c.b16 %v1566, %v1562
        %v1767 = vpack.c.b16 %v1571, %v1567
        %v1768 = vpack.c.b16 %v1572, %v1568
        %v1769 = vpack.c.b16 %v1573, %v1569
        %v1770 = vpack.c.b16 %v1574, %v1570
        %v1771 = vpack.c.b16 %v1579, %v1575
        %v1772 = vpack.c.b16 %v1580, %v1576
        %v1773 = vpack.c.b16 %v1581, %v1577
        %v1774 = vpack.c.b16 %v1582, %v1578
        %1967 = vmatpush.bf16.msra.mxu0 %v1611
        %1968 = vmatpush.bf16.msra.mxu0 %v1607
        %1969 = vmatpush.bf16.msra.mxu0 %v1603
        %1970 = vmatpush.bf16.msra.mxu0 %v1599
        %1971 = vmatpush.bf16.msra.mxu0 %v1595
        %1972 = vmatpush.bf16.msra.mxu0 %v1591
        %1973 = vmatpush.bf16.msra.mxu0 %v1587
        %1974 = vmatpush.bf16.msra.mxu0 %v1583
        %1975 = vmatmul.bf16.gmra.mxu0 %v815
        %v1976 = vpop.f32.mrf.mxu0
        %v1977 = vadd.f32 %v519, %v1976
        %v1978 = vpop.f32.mrf.mxu0
        %v1979 = vadd.f32 %v519, %v1978
        %1980 = vmatmul.bf16.gmra.mxu0 %v821
        %v1981 = vpop.f32.mrf.mxu0
        %v1982 = vadd.f32 %v519, %v1981
        %v1983 = vpop.f32.mrf.mxu0
        %v1984 = vadd.f32 %v519, %v1983
        %1985 = vmatmul.bf16.gmra.mxu0 %v827
        %v1986 = vpop.f32.mrf.mxu0
        %v1987 = vadd.f32 %v519, %v1986
        %v1988 = vpop.f32.mrf.mxu0
        %v1989 = vadd.f32 %v519, %v1988
        %1990 = vmatmul.bf16.gmra.mxu0 %v833
        %v1991 = vpop.f32.mrf.mxu0
        %v1992 = vadd.f32 %v519, %v1991
        %v1993 = vpop.f32.mrf.mxu0
        %v1994 = vadd.f32 %v519, %v1993
        %1995 = vmatmul.bf16.gmra.mxu0 %v839
        %v1996 = vpop.f32.mrf.mxu0
        %v1997 = vadd.f32 %v519, %v1996
        %v1998 = vpop.f32.mrf.mxu0
        %v1999 = vadd.f32 %v519, %v1998
        %2000 = vmatmul.bf16.gmra.mxu0 %v845
        %v2001 = vpop.f32.mrf.mxu0
        %v2002 = vadd.f32 %v519, %v2001
        %v2003 = vpop.f32.mrf.mxu0
        %v2004 = vadd.f32 %v519, %v2003
        %2005 = vmatmul.bf16.gmra.mxu0 %v851
        %v2006 = vpop.f32.mrf.mxu0
        %v2007 = vadd.f32 %v519, %v2006
        %v2008 = vpop.f32.mrf.mxu0
        %v2009 = vadd.f32 %v519, %v2008
        %2010 = vmatmul.bf16.gmra.mxu0 %v857
        %v2011 = vpop.f32.mrf.mxu0
        %v2012 = vadd.f32 %v519, %v2011
        %v2013 = vpop.f32.mrf.mxu0
        %v2014 = vadd.f32 %v519, %v2013
        %2015 = vmatmul.bf16.gmra.mxu0 %v863
        %v2016 = vpop.f32.mrf.mxu0
        %v2017 = vadd.f32 %v519, %v2016
        %v2018 = vpop.f32.mrf.mxu0
        %v2019 = vadd.f32 %v519, %v2018
        %2020 = vmatmul.bf16.gmra.mxu0 %v869
        %v2021 = vpop.f32.mrf.mxu0
        %v2022 = vadd.f32 %v519, %v2021
        %v2023 = vpop.f32.mrf.mxu0
        %v2024 = vadd.f32 %v519, %v2023
        %2025 = vmatmul.bf16.gmra.mxu0 %v875
        %v2026 = vpop.f32.mrf.mxu0
        %v2027 = vadd.f32 %v519, %v2026
        %v2028 = vpop.f32.mrf.mxu0
        %v2029 = vadd.f32 %v519, %v2028
        %2030 = vmatmul.bf16.gmra.mxu0 %v881
        %v2031 = vpop.f32.mrf.mxu0
        %v2032 = vadd.f32 %v519, %v2031
        %v2033 = vpop.f32.mrf.mxu0
        %v2034 = vadd.f32 %v519, %v2033
        %2035 = vmatmul.bf16.gmra.mxu0 %v887
        %v2036 = vpop.f32.mrf.mxu0
        %v2037 = vadd.f32 %v519, %v2036
        %v2038 = vpop.f32.mrf.mxu0
        %v2039 = vadd.f32 %v519, %v2038
        %2040 = vmatmul.bf16.gmra.mxu0 %v893
        %v2041 = vpop.f32.mrf.mxu0
        %v2042 = vadd.f32 %v519, %v2041
        %v2043 = vpop.f32.mrf.mxu0
        %v2044 = vadd.f32 %v519, %v2043
        %2045 = vmatmul.bf16.gmra.mxu0 %v899
        %v2046 = vpop.f32.mrf.mxu0
        %v2047 = vadd.f32 %v519, %v2046
        %v2048 = vpop.f32.mrf.mxu0
        %v2049 = vadd.f32 %v519, %v2048
        %2050 = vmatmul.bf16.gmra.mxu0 %v905
        %v2051 = vpop.f32.mrf.mxu0
        %v2052 = vadd.f32 %v519, %v2051
        %v2053 = vpop.f32.mrf.mxu0
        %v2054 = vadd.f32 %v519, %v2053
        %2055 = vdwg.mxu0
        %2056 = vmatpush.bf16.msra.mxu0 %v1643
        %2057 = vmatpush.bf16.msra.mxu0 %v1639
        %2058 = vmatpush.bf16.msra.mxu0 %v1635
        %2059 = vmatpush.bf16.msra.mxu0 %v1631
        %2060 = vmatpush.bf16.msra.mxu0 %v1627
        %2061 = vmatpush.bf16.msra.mxu0 %v1623
        %2062 = vmatpush.bf16.msra.mxu0 %v1619
        %2063 = vmatpush.bf16.msra.mxu0 %v1615
        %2064 = vmatmul.bf16.gmra.mxu0 %v816
        %v2065 = vpop.f32.mrf.mxu0
        %v2066 = vadd.f32 %v1977, %v2065
        %v2067 = vpop.f32.mrf.mxu0
        %v2068 = vadd.f32 %v1979, %v2067
        %2069 = vmatmul.bf16.gmra.mxu0 %v822
        %v2070 = vpop.f32.mrf.mxu0
        %v2071 = vadd.f32 %v1982, %v2070
        %v2072 = vpop.f32.mrf.mxu0
        %v2073 = vadd.f32 %v1984, %v2072
        %2074 = vmatmul.bf16.gmra.mxu0 %v828
        %v2075 = vpop.f32.mrf.mxu0
        %v2076 = vadd.f32 %v1987, %v2075
        %v2077 = vpop.f32.mrf.mxu0
        %v2078 = vadd.f32 %v1989, %v2077
        %2079 = vmatmul.bf16.gmra.mxu0 %v834
        %v2080 = vpop.f32.mrf.mxu0
        %v2081 = vadd.f32 %v1992, %v2080
        %v2082 = vpop.f32.mrf.mxu0
        %v2083 = vadd.f32 %v1994, %v2082
        %2084 = vmatmul.bf16.gmra.mxu0 %v840
        %v2085 = vpop.f32.mrf.mxu0
        %v2086 = vadd.f32 %v1997, %v2085
        %v2087 = vpop.f32.mrf.mxu0
        %v2088 = vadd.f32 %v1999, %v2087
        %2089 = vmatmul.bf16.gmra.mxu0 %v846
        %v2090 = vpop.f32.mrf.mxu0
        %v2091 = vadd.f32 %v2002, %v2090
        %v2092 = vpop.f32.mrf.mxu0
        %v2093 = vadd.f32 %v2004, %v2092
        %2094 = vmatmul.bf16.gmra.mxu0 %v852
        %v2095 = vpop.f32.mrf.mxu0
        %v2096 = vadd.f32 %v2007, %v2095
        %v2097 = vpop.f32.mrf.mxu0
        %v2098 = vadd.f32 %v2009, %v2097
        %2099 = vmatmul.bf16.gmra.mxu0 %v858
        %v2100 = vpop.f32.mrf.mxu0
        %v2101 = vadd.f32 %v2012, %v2100
        %v2102 = vpop.f32.mrf.mxu0
        %v2103 = vadd.f32 %v2014, %v2102
        %2104 = vmatmul.bf16.gmra.mxu0 %v864
        %v2105 = vpop.f32.mrf.mxu0
        %v2106 = vadd.f32 %v2017, %v2105
        %v2107 = vpop.f32.mrf.mxu0
        %v2108 = vadd.f32 %v2019, %v2107
        %2109 = vmatmul.bf16.gmra.mxu0 %v870
        %v2110 = vpop.f32.mrf.mxu0
        %v2111 = vadd.f32 %v2022, %v2110
        %v2112 = vpop.f32.mrf.mxu0
        %v2113 = vadd.f32 %v2024, %v2112
        %2114 = vmatmul.bf16.gmra.mxu0 %v876
        %v2115 = vpop.f32.mrf.mxu0
        %v2116 = vadd.f32 %v2027, %v2115
        %v2117 = vpop.f32.mrf.mxu0
        %v2118 = vadd.f32 %v2029, %v2117
        %2119 = vmatmul.bf16.gmra.mxu0 %v882
        %v2120 = vpop.f32.mrf.mxu0
        %v2121 = vadd.f32 %v2032, %v2120
        %v2122 = vpop.f32.mrf.mxu0
        %v2123 = vadd.f32 %v2034, %v2122
        %2124 = vmatmul.bf16.gmra.mxu0 %v888
        %v2125 = vpop.f32.mrf.mxu0
        %v2126 = vadd.f32 %v2037, %v2125
        %v2127 = vpop.f32.mrf.mxu0
        %v2128 = vadd.f32 %v2039, %v2127
        %2129 = vmatmul.bf16.gmra.mxu0 %v894
        %v2130 = vpop.f32.mrf.mxu0
        %v2131 = vadd.f32 %v2042, %v2130
        %v2132 = vpop.f32.mrf.mxu0
        %v2133 = vadd.f32 %v2044, %v2132
        %2134 = vmatmul.bf16.gmra.mxu0 %v900
        %v2135 = vpop.f32.mrf.mxu0
        %v2136 = vadd.f32 %v2047, %v2135
        %v2137 = vpop.f32.mrf.mxu0
        %v2138 = vadd.f32 %v2049, %v2137
        %2139 = vmatmul.bf16.gmra.mxu0 %v906
        %v2140 = vpop.f32.mrf.mxu0
        %v2141 = vadd.f32 %v2052, %v2140
        %v2142 = vpop.f32.mrf.mxu0
        %v2143 = vadd.f32 %v2054, %v2142
        %2144 = vdwg.mxu0
        %2145 = vmatpush.bf16.msra.mxu0 %v1675
        %2146 = vmatpush.bf16.msra.mxu0 %v1671
        %2147 = vmatpush.bf16.msra.mxu0 %v1667
        %2148 = vmatpush.bf16.msra.mxu0 %v1663
        %2149 = vmatpush.bf16.msra.mxu0 %v1659
        %2150 = vmatpush.bf16.msra.mxu0 %v1655
        %2151 = vmatpush.bf16.msra.mxu0 %v1651
        %2152 = vmatpush.bf16.msra.mxu0 %v1647
        %2153 = vmatmul.bf16.gmra.mxu0 %v817
        %v2154 = vpop.f32.mrf.mxu0
        %v2155 = vadd.f32 %v2066, %v2154
        %v2156 = vpop.f32.mrf.mxu0
        %v2157 = vadd.f32 %v2068, %v2156
        %2158 = vmatmul.bf16.gmra.mxu0 %v823
        %v2159 = vpop.f32.mrf.mxu0
        %v2160 = vadd.f32 %v2071, %v2159
        %v2161 = vpop.f32.mrf.mxu0
        %v2162 = vadd.f32 %v2073, %v2161
        %2163 = vmatmul.bf16.gmra.mxu0 %v829
        %v2164 = vpop.f32.mrf.mxu0
        %v2165 = vadd.f32 %v2076, %v2164
        %v2166 = vpop.f32.mrf.mxu0
        %v2167 = vadd.f32 %v2078, %v2166
        %2168 = vmatmul.bf16.gmra.mxu0 %v835
        %v2169 = vpop.f32.mrf.mxu0
        %v2170 = vadd.f32 %v2081, %v2169
        %v2171 = vpop.f32.mrf.mxu0
        %v2172 = vadd.f32 %v2083, %v2171
        %2173 = vmatmul.bf16.gmra.mxu0 %v841
        %v2174 = vpop.f32.mrf.mxu0
        %v2175 = vadd.f32 %v2086, %v2174
        %v2176 = vpop.f32.mrf.mxu0
        %v2177 = vadd.f32 %v2088, %v2176
        %2178 = vmatmul.bf16.gmra.mxu0 %v847
        %v2179 = vpop.f32.mrf.mxu0
        %v2180 = vadd.f32 %v2091, %v2179
        %v2181 = vpop.f32.mrf.mxu0
        %v2182 = vadd.f32 %v2093, %v2181
        %2183 = vmatmul.bf16.gmra.mxu0 %v853
        %v2184 = vpop.f32.mrf.mxu0
        %v2185 = vadd.f32 %v2096, %v2184
        %v2186 = vpop.f32.mrf.mxu0
        %v2187 = vadd.f32 %v2098, %v2186
        %2188 = vmatmul.bf16.gmra.mxu0 %v859
        %v2189 = vpop.f32.mrf.mxu0
        %v2190 = vadd.f32 %v2101, %v2189
        %v2191 = vpop.f32.mrf.mxu0
        %v2192 = vadd.f32 %v2103, %v2191
        %2193 = vmatmul.bf16.gmra.mxu0 %v865
        %v2194 = vpop.f32.mrf.mxu0
        %v2195 = vadd.f32 %v2106, %v2194
        %v2196 = vpop.f32.mrf.mxu0
        %v2197 = vadd.f32 %v2108, %v2196
        %2198 = vmatmul.bf16.gmra.mxu0 %v871
        %v2199 = vpop.f32.mrf.mxu0
        %v2200 = vadd.f32 %v2111, %v2199
        %v2201 = vpop.f32.mrf.mxu0
        %v2202 = vadd.f32 %v2113, %v2201
        %2203 = vmatmul.bf16.gmra.mxu0 %v877
        %v2204 = vpop.f32.mrf.mxu0
        %v2205 = vadd.f32 %v2116, %v2204
        %v2206 = vpop.f32.mrf.mxu0
        %v2207 = vadd.f32 %v2118, %v2206
        %2208 = vmatmul.bf16.gmra.mxu0 %v883
        %v2209 = vpop.f32.mrf.mxu0
        %v2210 = vadd.f32 %v2121, %v2209
        %v2211 = vpop.f32.mrf.mxu0
        %v2212 = vadd.f32 %v2123, %v2211
        %2213 = vmatmul.bf16.gmra.mxu0 %v889
        %v2214 = vpop.f32.mrf.mxu0
        %v2215 = vadd.f32 %v2126, %v2214
        %v2216 = vpop.f32.mrf.mxu0
        %v2217 = vadd.f32 %v2128, %v2216
        %2218 = vmatmul.bf16.gmra.mxu0 %v895
        %v2219 = vpop.f32.mrf.mxu0
        %v2220 = vadd.f32 %v2131, %v2219
        %v2221 = vpop.f32.mrf.mxu0
        %v2222 = vadd.f32 %v2133, %v2221
        %2223 = vmatmul.bf16.gmra.mxu0 %v901
        %v2224 = vpop.f32.mrf.mxu0
        %v2225 = vadd.f32 %v2136, %v2224
        %v2226 = vpop.f32.mrf.mxu0
        %v2227 = vadd.f32 %v2138, %v2226
        %2228 = vmatmul.bf16.gmra.mxu0 %v907
        %v2229 = vpop.f32.mrf.mxu0
        %v2230 = vadd.f32 %v2141, %v2229
        %v2231 = vpop.f32.mrf.mxu0
        %v2232 = vadd.f32 %v2143, %v2231
        %2233 = vdwg.mxu0
        %2234 = vmatpush.bf16.msra.mxu0 %v1707
        %2235 = vmatpush.bf16.msra.mxu0 %v1703
        %2236 = vmatpush.bf16.msra.mxu0 %v1699
        %2237 = vmatpush.bf16.msra.mxu0 %v1695
        %2238 = vmatpush.bf16.msra.mxu0 %v1691
        %2239 = vmatpush.bf16.msra.mxu0 %v1687
        %2240 = vmatpush.bf16.msra.mxu0 %v1683
        %2241 = vmatpush.bf16.msra.mxu0 %v1679
        %2242 = vmatmul.bf16.gmra.mxu0 %v818
        %v2243 = vpop.f32.mrf.mxu0
        %v2244 = vadd.f32 %v2155, %v2243
        %v2245 = vpop.f32.mrf.mxu0
        %v2246 = vadd.f32 %v2157, %v2245
        %2247 = vmatmul.bf16.gmra.mxu0 %v824
        %v2248 = vpop.f32.mrf.mxu0
        %v2249 = vadd.f32 %v2160, %v2248
        %v2250 = vpop.f32.mrf.mxu0
        %v2251 = vadd.f32 %v2162, %v2250
        %2252 = vmatmul.bf16.gmra.mxu0 %v830
        %v2253 = vpop.f32.mrf.mxu0
        %v2254 = vadd.f32 %v2165, %v2253
        %v2255 = vpop.f32.mrf.mxu0
        %v2256 = vadd.f32 %v2167, %v2255
        %2257 = vmatmul.bf16.gmra.mxu0 %v836
        %v2258 = vpop.f32.mrf.mxu0
        %v2259 = vadd.f32 %v2170, %v2258
        %v2260 = vpop.f32.mrf.mxu0
        %v2261 = vadd.f32 %v2172, %v2260
        %2262 = vmatmul.bf16.gmra.mxu0 %v842
        %v2263 = vpop.f32.mrf.mxu0
        %v2264 = vadd.f32 %v2175, %v2263
        %v2265 = vpop.f32.mrf.mxu0
        %v2266 = vadd.f32 %v2177, %v2265
        %2267 = vmatmul.bf16.gmra.mxu0 %v848
        %v2268 = vpop.f32.mrf.mxu0
        %v2269 = vadd.f32 %v2180, %v2268
        %v2270 = vpop.f32.mrf.mxu0
        %v2271 = vadd.f32 %v2182, %v2270
        %2272 = vmatmul.bf16.gmra.mxu0 %v854
        %v2273 = vpop.f32.mrf.mxu0
        %v2274 = vadd.f32 %v2185, %v2273
        %v2275 = vpop.f32.mrf.mxu0
        %v2276 = vadd.f32 %v2187, %v2275
        %2277 = vmatmul.bf16.gmra.mxu0 %v860
        %v2278 = vpop.f32.mrf.mxu0
        %v2279 = vadd.f32 %v2190, %v2278
        %v2280 = vpop.f32.mrf.mxu0
        %v2281 = vadd.f32 %v2192, %v2280
        %2282 = vmatmul.bf16.gmra.mxu0 %v866
        %v2283 = vpop.f32.mrf.mxu0
        %v2284 = vadd.f32 %v2195, %v2283
        %v2285 = vpop.f32.mrf.mxu0
        %v2286 = vadd.f32 %v2197, %v2285
        %2287 = vmatmul.bf16.gmra.mxu0 %v872
        %v2288 = vpop.f32.mrf.mxu0
        %v2289 = vadd.f32 %v2200, %v2288
        %v2290 = vpop.f32.mrf.mxu0
        %v2291 = vadd.f32 %v2202, %v2290
        %2292 = vmatmul.bf16.gmra.mxu0 %v878
        %v2293 = vpop.f32.mrf.mxu0
        %v2294 = vadd.f32 %v2205, %v2293
        %v2295 = vpop.f32.mrf.mxu0
        %v2296 = vadd.f32 %v2207, %v2295
        %2297 = vmatmul.bf16.gmra.mxu0 %v884
        %v2298 = vpop.f32.mrf.mxu0
        %v2299 = vadd.f32 %v2210, %v2298
        %v2300 = vpop.f32.mrf.mxu0
        %v2301 = vadd.f32 %v2212, %v2300
        %2302 = vmatmul.bf16.gmra.mxu0 %v890
        %v2303 = vpop.f32.mrf.mxu0
        %v2304 = vadd.f32 %v2215, %v2303
        %v2305 = vpop.f32.mrf.mxu0
        %v2306 = vadd.f32 %v2217, %v2305
        %2307 = vmatmul.bf16.gmra.mxu0 %v896
        %v2308 = vpop.f32.mrf.mxu0
        %v2309 = vadd.f32 %v2220, %v2308
        %v2310 = vpop.f32.mrf.mxu0
        %v2311 = vadd.f32 %v2222, %v2310
        %2312 = vmatmul.bf16.gmra.mxu0 %v902
        %v2313 = vpop.f32.mrf.mxu0
        %v2314 = vadd.f32 %v2225, %v2313
        %v2315 = vpop.f32.mrf.mxu0
        %v2316 = vadd.f32 %v2227, %v2315
        %2317 = vmatmul.bf16.gmra.mxu0 %v908
        %v2318 = vpop.f32.mrf.mxu0
        %v2319 = vadd.f32 %v2230, %v2318
        %v2320 = vpop.f32.mrf.mxu0
        %v2321 = vadd.f32 %v2232, %v2320
        %2322 = vdwg.mxu0
        %2323 = vmatpush.bf16.msra.mxu0 %v1739
        %2324 = vmatpush.bf16.msra.mxu0 %v1735
        %2325 = vmatpush.bf16.msra.mxu0 %v1731
        %2326 = vmatpush.bf16.msra.mxu0 %v1727
        %2327 = vmatpush.bf16.msra.mxu0 %v1723
        %2328 = vmatpush.bf16.msra.mxu0 %v1719
        %2329 = vmatpush.bf16.msra.mxu0 %v1715
        %2330 = vmatpush.bf16.msra.mxu0 %v1711
        %2331 = vmatmul.bf16.gmra.mxu0 %v819
        %v2332 = vpop.f32.mrf.mxu0
        %v2333 = vadd.f32 %v2244, %v2332
        %v2334 = vpop.f32.mrf.mxu0
        %v2335 = vadd.f32 %v2246, %v2334
        %2336 = vmatmul.bf16.gmra.mxu0 %v825
        %v2337 = vpop.f32.mrf.mxu0
        %v2338 = vadd.f32 %v2249, %v2337
        %v2339 = vpop.f32.mrf.mxu0
        %v2340 = vadd.f32 %v2251, %v2339
        %2341 = vmatmul.bf16.gmra.mxu0 %v831
        %v2342 = vpop.f32.mrf.mxu0
        %v2343 = vadd.f32 %v2254, %v2342
        %v2344 = vpop.f32.mrf.mxu0
        %v2345 = vadd.f32 %v2256, %v2344
        %2346 = vmatmul.bf16.gmra.mxu0 %v837
        %v2347 = vpop.f32.mrf.mxu0
        %v2348 = vadd.f32 %v2259, %v2347
        %v2349 = vpop.f32.mrf.mxu0
        %v2350 = vadd.f32 %v2261, %v2349
        %2351 = vmatmul.bf16.gmra.mxu0 %v843
        %v2352 = vpop.f32.mrf.mxu0
        %v2353 = vadd.f32 %v2264, %v2352
        %v2354 = vpop.f32.mrf.mxu0
        %v2355 = vadd.f32 %v2266, %v2354
        %2356 = vmatmul.bf16.gmra.mxu0 %v849
        %v2357 = vpop.f32.mrf.mxu0
        %v2358 = vadd.f32 %v2269, %v2357
        %v2359 = vpop.f32.mrf.mxu0
        %v2360 = vadd.f32 %v2271, %v2359
        %2361 = vmatmul.bf16.gmra.mxu0 %v855
        %v2362 = vpop.f32.mrf.mxu0
        %v2363 = vadd.f32 %v2274, %v2362
        %v2364 = vpop.f32.mrf.mxu0
        %v2365 = vadd.f32 %v2276, %v2364
        %2366 = vmatmul.bf16.gmra.mxu0 %v861
        %v2367 = vpop.f32.mrf.mxu0
        %v2368 = vadd.f32 %v2279, %v2367
        %v2369 = vpop.f32.mrf.mxu0
        %v2370 = vadd.f32 %v2281, %v2369
        %2371 = vmatmul.bf16.gmra.mxu0 %v867
        %v2372 = vpop.f32.mrf.mxu0
        %v2373 = vadd.f32 %v2284, %v2372
        %v2374 = vpop.f32.mrf.mxu0
        %v2375 = vadd.f32 %v2286, %v2374
        %2376 = vmatmul.bf16.gmra.mxu0 %v873
        %v2377 = vpop.f32.mrf.mxu0
        %v2378 = vadd.f32 %v2289, %v2377
        %v2379 = vpop.f32.mrf.mxu0
        %v2380 = vadd.f32 %v2291, %v2379
        %2381 = vmatmul.bf16.gmra.mxu0 %v879
        %v2382 = vpop.f32.mrf.mxu0
        %v2383 = vadd.f32 %v2294, %v2382
        %v2384 = vpop.f32.mrf.mxu0
        %v2385 = vadd.f32 %v2296, %v2384
        %2386 = vmatmul.bf16.gmra.mxu0 %v885
        %v2387 = vpop.f32.mrf.mxu0
        %v2388 = vadd.f32 %v2299, %v2387
        %v2389 = vpop.f32.mrf.mxu0
        %v2390 = vadd.f32 %v2301, %v2389
        %2391 = vmatmul.bf16.gmra.mxu0 %v891
        %v2392 = vpop.f32.mrf.mxu0
        %v2393 = vadd.f32 %v2304, %v2392
        %v2394 = vpop.f32.mrf.mxu0
        %v2395 = vadd.f32 %v2306, %v2394
        %2396 = vmatmul.bf16.gmra.mxu0 %v897
        %v2397 = vpop.f32.mrf.mxu0
        %v2398 = vadd.f32 %v2309, %v2397
        %v2399 = vpop.f32.mrf.mxu0
        %v2400 = vadd.f32 %v2311, %v2399
        %2401 = vmatmul.bf16.gmra.mxu0 %v903
        %v2402 = vpop.f32.mrf.mxu0
        %v2403 = vadd.f32 %v2314, %v2402
        %v2404 = vpop.f32.mrf.mxu0
        %v2405 = vadd.f32 %v2316, %v2404
        %2406 = vmatmul.bf16.gmra.mxu0 %v909
        %v2407 = vpop.f32.mrf.mxu0
        %v2408 = vadd.f32 %v2319, %v2407
        %v2409 = vpop.f32.mrf.mxu0
        %v2410 = vadd.f32 %v2321, %v2409
        %2411 = vdwg.mxu0
        %2412 = vmatpush.bf16.msra.mxu0 %v1771
        %2413 = vmatpush.bf16.msra.mxu0 %v1767
        %2414 = vmatpush.bf16.msra.mxu0 %v1763
        %2415 = vmatpush.bf16.msra.mxu0 %v1759
        %2416 = vmatpush.bf16.msra.mxu0 %v1755
        %2417 = vmatpush.bf16.msra.mxu0 %v1751
        %2418 = vmatpush.bf16.msra.mxu0 %v1747
        %2419 = vmatpush.bf16.msra.mxu0 %v1743
        %2420 = vmatmul.bf16.gmra.mxu0 %v820
        %v2421 = vpop.f32.mrf.mxu0
        %v2422 = vadd.f32 %v2333, %v2421
        %v2423 = vpop.f32.mrf.mxu0
        %v2424 = vadd.f32 %v2335, %v2423
        %2425 = vmatmul.bf16.gmra.mxu0 %v826
        %v2426 = vpop.f32.mrf.mxu0
        %v2427 = vadd.f32 %v2338, %v2426
        %v2428 = vpop.f32.mrf.mxu0
        %v2429 = vadd.f32 %v2340, %v2428
        %2430 = vmatmul.bf16.gmra.mxu0 %v832
        %v2431 = vpop.f32.mrf.mxu0
        %v2432 = vadd.f32 %v2343, %v2431
        %v2433 = vpop.f32.mrf.mxu0
        %v2434 = vadd.f32 %v2345, %v2433
        %2435 = vmatmul.bf16.gmra.mxu0 %v838
        %v2436 = vpop.f32.mrf.mxu0
        %v2437 = vadd.f32 %v2348, %v2436
        %v2438 = vpop.f32.mrf.mxu0
        %v2439 = vadd.f32 %v2350, %v2438
        %2440 = vmatmul.bf16.gmra.mxu0 %v844
        %v2441 = vpop.f32.mrf.mxu0
        %v2442 = vadd.f32 %v2353, %v2441
        %v2443 = vpop.f32.mrf.mxu0
        %v2444 = vadd.f32 %v2355, %v2443
        %2445 = vmatmul.bf16.gmra.mxu0 %v850
        %v2446 = vpop.f32.mrf.mxu0
        %v2447 = vadd.f32 %v2358, %v2446
        %v2448 = vpop.f32.mrf.mxu0
        %v2449 = vadd.f32 %v2360, %v2448
        %2450 = vmatmul.bf16.gmra.mxu0 %v856
        %v2451 = vpop.f32.mrf.mxu0
        %v2452 = vadd.f32 %v2363, %v2451
        %v2453 = vpop.f32.mrf.mxu0
        %v2454 = vadd.f32 %v2365, %v2453
        %2455 = vmatmul.bf16.gmra.mxu0 %v862
        %v2456 = vpop.f32.mrf.mxu0
        %v2457 = vadd.f32 %v2368, %v2456
        %v2458 = vpop.f32.mrf.mxu0
        %v2459 = vadd.f32 %v2370, %v2458
        %2460 = vmatmul.bf16.gmra.mxu0 %v868
        %v2461 = vpop.f32.mrf.mxu0
        %v2462 = vadd.f32 %v2373, %v2461
        %v2463 = vpop.f32.mrf.mxu0
        %v2464 = vadd.f32 %v2375, %v2463
        %2465 = vmatmul.bf16.gmra.mxu0 %v874
        %v2466 = vpop.f32.mrf.mxu0
        %v2467 = vadd.f32 %v2378, %v2466
        %v2468 = vpop.f32.mrf.mxu0
        %v2469 = vadd.f32 %v2380, %v2468
        %2470 = vmatmul.bf16.gmra.mxu0 %v880
        %v2471 = vpop.f32.mrf.mxu0
        %v2472 = vadd.f32 %v2383, %v2471
        %v2473 = vpop.f32.mrf.mxu0
        %v2474 = vadd.f32 %v2385, %v2473
        %2475 = vmatmul.bf16.gmra.mxu0 %v886
        %v2476 = vpop.f32.mrf.mxu0
        %v2477 = vadd.f32 %v2388, %v2476
        %v2478 = vpop.f32.mrf.mxu0
        %v2479 = vadd.f32 %v2390, %v2478
        %2480 = vmatmul.bf16.gmra.mxu0 %v892
        %v2481 = vpop.f32.mrf.mxu0
        %v2482 = vadd.f32 %v2393, %v2481
        %v2483 = vpop.f32.mrf.mxu0
        %v2484 = vadd.f32 %v2395, %v2483
        %2485 = vmatmul.bf16.gmra.mxu0 %v898
        %v2486 = vpop.f32.mrf.mxu0
        %v2487 = vadd.f32 %v2398, %v2486
        %v2488 = vpop.f32.mrf.mxu0
        %v2489 = vadd.f32 %v2400, %v2488
        %2490 = vmatmul.bf16.gmra.mxu0 %v904
        %v2491 = vpop.f32.mrf.mxu0
        %v2492 = vadd.f32 %v2403, %v2491
        %v2493 = vpop.f32.mrf.mxu0
        %v2494 = vadd.f32 %v2405, %v2493
        %2495 = vmatmul.bf16.gmra.mxu0 %v910
        %v2496 = vpop.f32.mrf.mxu0
        %v2497 = vadd.f32 %v2408, %v2496
        %v2498 = vpop.f32.mrf.mxu0
        %v2499 = vadd.f32 %v2410, %v2498
        %2500 = vdwg.mxu0
        %2501 = vmatpush.bf16.msra.mxu0 %v1612
        %2502 = vmatpush.bf16.msra.mxu0 %v1608
        %2503 = vmatpush.bf16.msra.mxu0 %v1604
        %2504 = vmatpush.bf16.msra.mxu0 %v1600
        %2505 = vmatpush.bf16.msra.mxu0 %v1596
        %2506 = vmatpush.bf16.msra.mxu0 %v1592
        %2507 = vmatpush.bf16.msra.mxu0 %v1588
        %2508 = vmatpush.bf16.msra.mxu0 %v1584
        %2509 = vmatmul.bf16.gmra.mxu0 %v815
        %v2510 = vpop.f32.mrf.mxu0
        %v2511 = vadd.f32 %v520, %v2510
        %v2512 = vpop.f32.mrf.mxu0
        %v2513 = vadd.f32 %v520, %v2512
        %2514 = vmatmul.bf16.gmra.mxu0 %v821
        %v2515 = vpop.f32.mrf.mxu0
        %v2516 = vadd.f32 %v520, %v2515
        %v2517 = vpop.f32.mrf.mxu0
        %v2518 = vadd.f32 %v520, %v2517
        %2519 = vmatmul.bf16.gmra.mxu0 %v827
        %v2520 = vpop.f32.mrf.mxu0
        %v2521 = vadd.f32 %v520, %v2520
        %v2522 = vpop.f32.mrf.mxu0
        %v2523 = vadd.f32 %v520, %v2522
        %2524 = vmatmul.bf16.gmra.mxu0 %v833
        %v2525 = vpop.f32.mrf.mxu0
        %v2526 = vadd.f32 %v520, %v2525
        %v2527 = vpop.f32.mrf.mxu0
        %v2528 = vadd.f32 %v520, %v2527
        %2529 = vmatmul.bf16.gmra.mxu0 %v839
        %v2530 = vpop.f32.mrf.mxu0
        %v2531 = vadd.f32 %v520, %v2530
        %v2532 = vpop.f32.mrf.mxu0
        %v2533 = vadd.f32 %v520, %v2532
        %2534 = vmatmul.bf16.gmra.mxu0 %v845
        %v2535 = vpop.f32.mrf.mxu0
        %v2536 = vadd.f32 %v520, %v2535
        %v2537 = vpop.f32.mrf.mxu0
        %v2538 = vadd.f32 %v520, %v2537
        %2539 = vmatmul.bf16.gmra.mxu0 %v851
        %v2540 = vpop.f32.mrf.mxu0
        %v2541 = vadd.f32 %v520, %v2540
        %v2542 = vpop.f32.mrf.mxu0
        %v2543 = vadd.f32 %v520, %v2542
        %2544 = vmatmul.bf16.gmra.mxu0 %v857
        %v2545 = vpop.f32.mrf.mxu0
        %v2546 = vadd.f32 %v520, %v2545
        %v2547 = vpop.f32.mrf.mxu0
        %v2548 = vadd.f32 %v520, %v2547
        %2549 = vmatmul.bf16.gmra.mxu0 %v863
        %v2550 = vpop.f32.mrf.mxu0
        %v2551 = vadd.f32 %v520, %v2550
        %v2552 = vpop.f32.mrf.mxu0
        %v2553 = vadd.f32 %v520, %v2552
        %2554 = vmatmul.bf16.gmra.mxu0 %v869
        %v2555 = vpop.f32.mrf.mxu0
        %v2556 = vadd.f32 %v520, %v2555
        %v2557 = vpop.f32.mrf.mxu0
        %v2558 = vadd.f32 %v520, %v2557
        %2559 = vmatmul.bf16.gmra.mxu0 %v875
        %v2560 = vpop.f32.mrf.mxu0
        %v2561 = vadd.f32 %v520, %v2560
        %v2562 = vpop.f32.mrf.mxu0
        %v2563 = vadd.f32 %v520, %v2562
        %2564 = vmatmul.bf16.gmra.mxu0 %v881
        %v2565 = vpop.f32.mrf.mxu0
        %v2566 = vadd.f32 %v520, %v2565
        %v2567 = vpop.f32.mrf.mxu0
        %v2568 = vadd.f32 %v520, %v2567
        %2569 = vmatmul.bf16.gmra.mxu0 %v887
        %v2570 = vpop.f32.mrf.mxu0
        %v2571 = vadd.f32 %v520, %v2570
        %v2572 = vpop.f32.mrf.mxu0
        %v2573 = vadd.f32 %v520, %v2572
        %2574 = vmatmul.bf16.gmra.mxu0 %v893
        %v2575 = vpop.f32.mrf.mxu0
        %v2576 = vadd.f32 %v520, %v2575
        %v2577 = vpop.f32.mrf.mxu0
        %v2578 = vadd.f32 %v520, %v2577
        %2579 = vmatmul.bf16.gmra.mxu0 %v899
        %v2580 = vpop.f32.mrf.mxu0
        %v2581 = vadd.f32 %v520, %v2580
        %v2582 = vpop.f32.mrf.mxu0
        %v2583 = vadd.f32 %v520, %v2582
        %2584 = vmatmul.bf16.gmra.mxu0 %v905
        %v2585 = vpop.f32.mrf.mxu0
        %v2586 = vadd.f32 %v520, %v2585
        %v2587 = vpop.f32.mrf.mxu0
        %v2588 = vadd.f32 %v520, %v2587
        %2589 = vdwg.mxu0
        %2590 = vmatpush.bf16.msra.mxu0 %v1644
        %2591 = vmatpush.bf16.msra.mxu0 %v1640
        %2592 = vmatpush.bf16.msra.mxu0 %v1636
        %2593 = vmatpush.bf16.msra.mxu0 %v1632
        %2594 = vmatpush.bf16.msra.mxu0 %v1628
        %2595 = vmatpush.bf16.msra.mxu0 %v1624
        %2596 = vmatpush.bf16.msra.mxu0 %v1620
        %2597 = vmatpush.bf16.msra.mxu0 %v1616
        %2598 = vmatmul.bf16.gmra.mxu0 %v816
        %v2599 = vpop.f32.mrf.mxu0
        %v2600 = vadd.f32 %v2511, %v2599
        %v2601 = vpop.f32.mrf.mxu0
        %v2602 = vadd.f32 %v2513, %v2601
        %2603 = vmatmul.bf16.gmra.mxu0 %v822
        %v2604 = vpop.f32.mrf.mxu0
        %v2605 = vadd.f32 %v2516, %v2604
        %v2606 = vpop.f32.mrf.mxu0
        %v2607 = vadd.f32 %v2518, %v2606
        %2608 = vmatmul.bf16.gmra.mxu0 %v828
        %v2609 = vpop.f32.mrf.mxu0
        %v2610 = vadd.f32 %v2521, %v2609
        %v2611 = vpop.f32.mrf.mxu0
        %v2612 = vadd.f32 %v2523, %v2611
        %2613 = vmatmul.bf16.gmra.mxu0 %v834
        %v2614 = vpop.f32.mrf.mxu0
        %v2615 = vadd.f32 %v2526, %v2614
        %v2616 = vpop.f32.mrf.mxu0
        %v2617 = vadd.f32 %v2528, %v2616
        %2618 = vmatmul.bf16.gmra.mxu0 %v840
        %v2619 = vpop.f32.mrf.mxu0
        %v2620 = vadd.f32 %v2531, %v2619
        %v2621 = vpop.f32.mrf.mxu0
        %v2622 = vadd.f32 %v2533, %v2621
        %2623 = vmatmul.bf16.gmra.mxu0 %v846
        %v2624 = vpop.f32.mrf.mxu0
        %v2625 = vadd.f32 %v2536, %v2624
        %v2626 = vpop.f32.mrf.mxu0
        %v2627 = vadd.f32 %v2538, %v2626
        %2628 = vmatmul.bf16.gmra.mxu0 %v852
        %v2629 = vpop.f32.mrf.mxu0
        %v2630 = vadd.f32 %v2541, %v2629
        %v2631 = vpop.f32.mrf.mxu0
        %v2632 = vadd.f32 %v2543, %v2631
        %2633 = vmatmul.bf16.gmra.mxu0 %v858
        %v2634 = vpop.f32.mrf.mxu0
        %v2635 = vadd.f32 %v2546, %v2634
        %v2636 = vpop.f32.mrf.mxu0
        %v2637 = vadd.f32 %v2548, %v2636
        %2638 = vmatmul.bf16.gmra.mxu0 %v864
        %v2639 = vpop.f32.mrf.mxu0
        %v2640 = vadd.f32 %v2551, %v2639
        %v2641 = vpop.f32.mrf.mxu0
        %v2642 = vadd.f32 %v2553, %v2641
        %2643 = vmatmul.bf16.gmra.mxu0 %v870
        %v2644 = vpop.f32.mrf.mxu0
        %v2645 = vadd.f32 %v2556, %v2644
        %v2646 = vpop.f32.mrf.mxu0
        %v2647 = vadd.f32 %v2558, %v2646
        %2648 = vmatmul.bf16.gmra.mxu0 %v876
        %v2649 = vpop.f32.mrf.mxu0
        %v2650 = vadd.f32 %v2561, %v2649
        %v2651 = vpop.f32.mrf.mxu0
        %v2652 = vadd.f32 %v2563, %v2651
        %2653 = vmatmul.bf16.gmra.mxu0 %v882
        %v2654 = vpop.f32.mrf.mxu0
        %v2655 = vadd.f32 %v2566, %v2654
        %v2656 = vpop.f32.mrf.mxu0
        %v2657 = vadd.f32 %v2568, %v2656
        %2658 = vmatmul.bf16.gmra.mxu0 %v888
        %v2659 = vpop.f32.mrf.mxu0
        %v2660 = vadd.f32 %v2571, %v2659
        %v2661 = vpop.f32.mrf.mxu0
        %v2662 = vadd.f32 %v2573, %v2661
        %2663 = vmatmul.bf16.gmra.mxu0 %v894
        %v2664 = vpop.f32.mrf.mxu0
        %v2665 = vadd.f32 %v2576, %v2664
        %v2666 = vpop.f32.mrf.mxu0
        %v2667 = vadd.f32 %v2578, %v2666
        %2668 = vmatmul.bf16.gmra.mxu0 %v900
        %v2669 = vpop.f32.mrf.mxu0
        %v2670 = vadd.f32 %v2581, %v2669
        %v2671 = vpop.f32.mrf.mxu0
        %v2672 = vadd.f32 %v2583, %v2671
        %2673 = vmatmul.bf16.gmra.mxu0 %v906
        %v2674 = vpop.f32.mrf.mxu0
        %v2675 = vadd.f32 %v2586, %v2674
        %v2676 = vpop.f32.mrf.mxu0
        %v2677 = vadd.f32 %v2588, %v2676
        %2678 = vdwg.mxu0
        %2679 = vmatpush.bf16.msra.mxu0 %v1676
        %2680 = vmatpush.bf16.msra.mxu0 %v1672
        %2681 = vmatpush.bf16.msra.mxu0 %v1668
        %2682 = vmatpush.bf16.msra.mxu0 %v1664
        %2683 = vmatpush.bf16.msra.mxu0 %v1660
        %2684 = vmatpush.bf16.msra.mxu0 %v1656
        %2685 = vmatpush.bf16.msra.mxu0 %v1652
        %2686 = vmatpush.bf16.msra.mxu0 %v1648
        %2687 = vmatmul.bf16.gmra.mxu0 %v817
        %v2688 = vpop.f32.mrf.mxu0
        %v2689 = vadd.f32 %v2600, %v2688
        %v2690 = vpop.f32.mrf.mxu0
        %v2691 = vadd.f32 %v2602, %v2690
        %2692 = vmatmul.bf16.gmra.mxu0 %v823
        %v2693 = vpop.f32.mrf.mxu0
        %v2694 = vadd.f32 %v2605, %v2693
        %v2695 = vpop.f32.mrf.mxu0
        %v2696 = vadd.f32 %v2607, %v2695
        %2697 = vmatmul.bf16.gmra.mxu0 %v829
        %v2698 = vpop.f32.mrf.mxu0
        %v2699 = vadd.f32 %v2610, %v2698
        %v2700 = vpop.f32.mrf.mxu0
        %v2701 = vadd.f32 %v2612, %v2700
        %2702 = vmatmul.bf16.gmra.mxu0 %v835
        %v2703 = vpop.f32.mrf.mxu0
        %v2704 = vadd.f32 %v2615, %v2703
        %v2705 = vpop.f32.mrf.mxu0
        %v2706 = vadd.f32 %v2617, %v2705
        %2707 = vmatmul.bf16.gmra.mxu0 %v841
        %v2708 = vpop.f32.mrf.mxu0
        %v2709 = vadd.f32 %v2620, %v2708
        %v2710 = vpop.f32.mrf.mxu0
        %v2711 = vadd.f32 %v2622, %v2710
        %2712 = vmatmul.bf16.gmra.mxu0 %v847
        %v2713 = vpop.f32.mrf.mxu0
        %v2714 = vadd.f32 %v2625, %v2713
        %v2715 = vpop.f32.mrf.mxu0
        %v2716 = vadd.f32 %v2627, %v2715
        %2717 = vmatmul.bf16.gmra.mxu0 %v853
        %v2718 = vpop.f32.mrf.mxu0
        %v2719 = vadd.f32 %v2630, %v2718
        %v2720 = vpop.f32.mrf.mxu0
        %v2721 = vadd.f32 %v2632, %v2720
        %2722 = vmatmul.bf16.gmra.mxu0 %v859
        %v2723 = vpop.f32.mrf.mxu0
        %v2724 = vadd.f32 %v2635, %v2723
        %v2725 = vpop.f32.mrf.mxu0
        %v2726 = vadd.f32 %v2637, %v2725
        %2727 = vmatmul.bf16.gmra.mxu0 %v865
        %v2728 = vpop.f32.mrf.mxu0
        %v2729 = vadd.f32 %v2640, %v2728
        %v2730 = vpop.f32.mrf.mxu0
        %v2731 = vadd.f32 %v2642, %v2730
        %2732 = vmatmul.bf16.gmra.mxu0 %v871
        %v2733 = vpop.f32.mrf.mxu0
        %v2734 = vadd.f32 %v2645, %v2733
        %v2735 = vpop.f32.mrf.mxu0
        %v2736 = vadd.f32 %v2647, %v2735
        %2737 = vmatmul.bf16.gmra.mxu0 %v877
        %v2738 = vpop.f32.mrf.mxu0
        %v2739 = vadd.f32 %v2650, %v2738
        %v2740 = vpop.f32.mrf.mxu0
        %v2741 = vadd.f32 %v2652, %v2740
        %2742 = vmatmul.bf16.gmra.mxu0 %v883
        %v2743 = vpop.f32.mrf.mxu0
        %v2744 = vadd.f32 %v2655, %v2743
        %v2745 = vpop.f32.mrf.mxu0
        %v2746 = vadd.f32 %v2657, %v2745
        %2747 = vmatmul.bf16.gmra.mxu0 %v889
        %v2748 = vpop.f32.mrf.mxu0
        %v2749 = vadd.f32 %v2660, %v2748
        %v2750 = vpop.f32.mrf.mxu0
        %v2751 = vadd.f32 %v2662, %v2750
        %2752 = vmatmul.bf16.gmra.mxu0 %v895
        %v2753 = vpop.f32.mrf.mxu0
        %v2754 = vadd.f32 %v2665, %v2753
        %v2755 = vpop.f32.mrf.mxu0
        %v2756 = vadd.f32 %v2667, %v2755
        %2757 = vmatmul.bf16.gmra.mxu0 %v901
        %v2758 = vpop.f32.mrf.mxu0
        %v2759 = vadd.f32 %v2670, %v2758
        %v2760 = vpop.f32.mrf.mxu0
        %v2761 = vadd.f32 %v2672, %v2760
        %2762 = vmatmul.bf16.gmra.mxu0 %v907
        %v2763 = vpop.f32.mrf.mxu0
        %v2764 = vadd.f32 %v2675, %v2763
        %v2765 = vpop.f32.mrf.mxu0
        %v2766 = vadd.f32 %v2677, %v2765
        %2767 = vdwg.mxu0
        %2768 = vmatpush.bf16.msra.mxu0 %v1708
        %2769 = vmatpush.bf16.msra.mxu0 %v1704
        %2770 = vmatpush.bf16.msra.mxu0 %v1700
        %2771 = vmatpush.bf16.msra.mxu0 %v1696
        %2772 = vmatpush.bf16.msra.mxu0 %v1692
        %2773 = vmatpush.bf16.msra.mxu0 %v1688
        %2774 = vmatpush.bf16.msra.mxu0 %v1684
        %2775 = vmatpush.bf16.msra.mxu0 %v1680
        %2776 = vmatmul.bf16.gmra.mxu0 %v818
        %v2777 = vpop.f32.mrf.mxu0
        %v2778 = vadd.f32 %v2689, %v2777
        %v2779 = vpop.f32.mrf.mxu0
        %v2780 = vadd.f32 %v2691, %v2779
        %2781 = vmatmul.bf16.gmra.mxu0 %v824
        %v2782 = vpop.f32.mrf.mxu0
        %v2783 = vadd.f32 %v2694, %v2782
        %v2784 = vpop.f32.mrf.mxu0
        %v2785 = vadd.f32 %v2696, %v2784
        %2786 = vmatmul.bf16.gmra.mxu0 %v830
        %v2787 = vpop.f32.mrf.mxu0
        %v2788 = vadd.f32 %v2699, %v2787
        %v2789 = vpop.f32.mrf.mxu0
        %v2790 = vadd.f32 %v2701, %v2789
        %2791 = vmatmul.bf16.gmra.mxu0 %v836
        %v2792 = vpop.f32.mrf.mxu0
        %v2793 = vadd.f32 %v2704, %v2792
        %v2794 = vpop.f32.mrf.mxu0
        %v2795 = vadd.f32 %v2706, %v2794
        %2796 = vmatmul.bf16.gmra.mxu0 %v842
        %v2797 = vpop.f32.mrf.mxu0
        %v2798 = vadd.f32 %v2709, %v2797
        %v2799 = vpop.f32.mrf.mxu0
        %v2800 = vadd.f32 %v2711, %v2799
        %2801 = vmatmul.bf16.gmra.mxu0 %v848
        %v2802 = vpop.f32.mrf.mxu0
        %v2803 = vadd.f32 %v2714, %v2802
        %v2804 = vpop.f32.mrf.mxu0
        %v2805 = vadd.f32 %v2716, %v2804
        %2806 = vmatmul.bf16.gmra.mxu0 %v854
        %v2807 = vpop.f32.mrf.mxu0
        %v2808 = vadd.f32 %v2719, %v2807
        %v2809 = vpop.f32.mrf.mxu0
        %v2810 = vadd.f32 %v2721, %v2809
        %2811 = vmatmul.bf16.gmra.mxu0 %v860
        %v2812 = vpop.f32.mrf.mxu0
        %v2813 = vadd.f32 %v2724, %v2812
        %v2814 = vpop.f32.mrf.mxu0
        %v2815 = vadd.f32 %v2726, %v2814
        %2816 = vmatmul.bf16.gmra.mxu0 %v866
        %v2817 = vpop.f32.mrf.mxu0
        %v2818 = vadd.f32 %v2729, %v2817
        %v2819 = vpop.f32.mrf.mxu0
        %v2820 = vadd.f32 %v2731, %v2819
        %2821 = vmatmul.bf16.gmra.mxu0 %v872
        %v2822 = vpop.f32.mrf.mxu0
        %v2823 = vadd.f32 %v2734, %v2822
        %v2824 = vpop.f32.mrf.mxu0
        %v2825 = vadd.f32 %v2736, %v2824
        %2826 = vmatmul.bf16.gmra.mxu0 %v878
        %v2827 = vpop.f32.mrf.mxu0
        %v2828 = vadd.f32 %v2739, %v2827
        %v2829 = vpop.f32.mrf.mxu0
        %v2830 = vadd.f32 %v2741, %v2829
        %2831 = vmatmul.bf16.gmra.mxu0 %v884
        %v2832 = vpop.f32.mrf.mxu0
        %v2833 = vadd.f32 %v2744, %v2832
        %v2834 = vpop.f32.mrf.mxu0
        %v2835 = vadd.f32 %v2746, %v2834
        %2836 = vmatmul.bf16.gmra.mxu0 %v890
        %v2837 = vpop.f32.mrf.mxu0
        %v2838 = vadd.f32 %v2749, %v2837
        %v2839 = vpop.f32.mrf.mxu0
        %v2840 = vadd.f32 %v2751, %v2839
        %2841 = vmatmul.bf16.gmra.mxu0 %v896
        %v2842 = vpop.f32.mrf.mxu0
        %v2843 = vadd.f32 %v2754, %v2842
        %v2844 = vpop.f32.mrf.mxu0
        %v2845 = vadd.f32 %v2756, %v2844
        %2846 = vmatmul.bf16.gmra.mxu0 %v902
        %v2847 = vpop.f32.mrf.mxu0
        %v2848 = vadd.f32 %v2759, %v2847
        %v2849 = vpop.f32.mrf.mxu0
        %v2850 = vadd.f32 %v2761, %v2849
        %2851 = vmatmul.bf16.gmra.mxu0 %v908
        %v2852 = vpop.f32.mrf.mxu0
        %v2853 = vadd.f32 %v2764, %v2852
        %v2854 = vpop.f32.mrf.mxu0
        %v2855 = vadd.f32 %v2766, %v2854
        %2856 = vdwg.mxu0
        %2857 = vmatpush.bf16.msra.mxu0 %v1740
        %2858 = vmatpush.bf16.msra.mxu0 %v1736
        %2859 = vmatpush.bf16.msra.mxu0 %v1732
        %2860 = vmatpush.bf16.msra.mxu0 %v1728
        %2861 = vmatpush.bf16.msra.mxu0 %v1724
        %2862 = vmatpush.bf16.msra.mxu0 %v1720
        %2863 = vmatpush.bf16.msra.mxu0 %v1716
        %2864 = vmatpush.bf16.msra.mxu0 %v1712
        %2865 = vmatmul.bf16.gmra.mxu0 %v819
        %v2866 = vpop.f32.mrf.mxu0
        %v2867 = vadd.f32 %v2778, %v2866
        %v2868 = vpop.f32.mrf.mxu0
        %v2869 = vadd.f32 %v2780, %v2868
        %2870 = vmatmul.bf16.gmra.mxu0 %v825
        %v2871 = vpop.f32.mrf.mxu0
        %v2872 = vadd.f32 %v2783, %v2871
        %v2873 = vpop.f32.mrf.mxu0
        %v2874 = vadd.f32 %v2785, %v2873
        %2875 = vmatmul.bf16.gmra.mxu0 %v831
        %v2876 = vpop.f32.mrf.mxu0
        %v2877 = vadd.f32 %v2788, %v2876
        %v2878 = vpop.f32.mrf.mxu0
        %v2879 = vadd.f32 %v2790, %v2878
        %2880 = vmatmul.bf16.gmra.mxu0 %v837
        %v2881 = vpop.f32.mrf.mxu0
        %v2882 = vadd.f32 %v2793, %v2881
        %v2883 = vpop.f32.mrf.mxu0
        %v2884 = vadd.f32 %v2795, %v2883
        %2885 = vmatmul.bf16.gmra.mxu0 %v843
        %v2886 = vpop.f32.mrf.mxu0
        %v2887 = vadd.f32 %v2798, %v2886
        %v2888 = vpop.f32.mrf.mxu0
        %v2889 = vadd.f32 %v2800, %v2888
        %2890 = vmatmul.bf16.gmra.mxu0 %v849
        %v2891 = vpop.f32.mrf.mxu0
        %v2892 = vadd.f32 %v2803, %v2891
        %v2893 = vpop.f32.mrf.mxu0
        %v2894 = vadd.f32 %v2805, %v2893
        %2895 = vmatmul.bf16.gmra.mxu0 %v855
        %v2896 = vpop.f32.mrf.mxu0
        %v2897 = vadd.f32 %v2808, %v2896
        %v2898 = vpop.f32.mrf.mxu0
        %v2899 = vadd.f32 %v2810, %v2898
        %2900 = vmatmul.bf16.gmra.mxu0 %v861
        %v2901 = vpop.f32.mrf.mxu0
        %v2902 = vadd.f32 %v2813, %v2901
        %v2903 = vpop.f32.mrf.mxu0
        %v2904 = vadd.f32 %v2815, %v2903
        %2905 = vmatmul.bf16.gmra.mxu0 %v867
        %v2906 = vpop.f32.mrf.mxu0
        %v2907 = vadd.f32 %v2818, %v2906
        %v2908 = vpop.f32.mrf.mxu0
        %v2909 = vadd.f32 %v2820, %v2908
        %2910 = vmatmul.bf16.gmra.mxu0 %v873
        %v2911 = vpop.f32.mrf.mxu0
        %v2912 = vadd.f32 %v2823, %v2911
        %v2913 = vpop.f32.mrf.mxu0
        %v2914 = vadd.f32 %v2825, %v2913
        %2915 = vmatmul.bf16.gmra.mxu0 %v879
        %v2916 = vpop.f32.mrf.mxu0
        %v2917 = vadd.f32 %v2828, %v2916
        %v2918 = vpop.f32.mrf.mxu0
        %v2919 = vadd.f32 %v2830, %v2918
        %2920 = vmatmul.bf16.gmra.mxu0 %v885
        %v2921 = vpop.f32.mrf.mxu0
        %v2922 = vadd.f32 %v2833, %v2921
        %v2923 = vpop.f32.mrf.mxu0
        %v2924 = vadd.f32 %v2835, %v2923
        %2925 = vmatmul.bf16.gmra.mxu0 %v891
        %v2926 = vpop.f32.mrf.mxu0
        %v2927 = vadd.f32 %v2838, %v2926
        %v2928 = vpop.f32.mrf.mxu0
        %v2929 = vadd.f32 %v2840, %v2928
        %2930 = vmatmul.bf16.gmra.mxu0 %v897
        %v2931 = vpop.f32.mrf.mxu0
        %v2932 = vadd.f32 %v2843, %v2931
        %v2933 = vpop.f32.mrf.mxu0
        %v2934 = vadd.f32 %v2845, %v2933
        %2935 = vmatmul.bf16.gmra.mxu0 %v903
        %v2936 = vpop.f32.mrf.mxu0
        %v2937 = vadd.f32 %v2848, %v2936
        %v2938 = vpop.f32.mrf.mxu0
        %v2939 = vadd.f32 %v2850, %v2938
        %2940 = vmatmul.bf16.gmra.mxu0 %v909
        %v2941 = vpop.f32.mrf.mxu0
        %v2942 = vadd.f32 %v2853, %v2941
        %v2943 = vpop.f32.mrf.mxu0
        %v2944 = vadd.f32 %v2855, %v2943
        %2945 = vdwg.mxu0
        %2946 = vmatpush.bf16.msra.mxu0 %v1772
        %2947 = vmatpush.bf16.msra.mxu0 %v1768
        %2948 = vmatpush.bf16.msra.mxu0 %v1764
        %2949 = vmatpush.bf16.msra.mxu0 %v1760
        %2950 = vmatpush.bf16.msra.mxu0 %v1756
        %2951 = vmatpush.bf16.msra.mxu0 %v1752
        %2952 = vmatpush.bf16.msra.mxu0 %v1748
        %2953 = vmatpush.bf16.msra.mxu0 %v1744
        %2954 = vmatmul.bf16.gmra.mxu0 %v820
        %v2955 = vpop.f32.mrf.mxu0
        %v2956 = vadd.f32 %v2867, %v2955
        %v2957 = vpop.f32.mrf.mxu0
        %v2958 = vadd.f32 %v2869, %v2957
        %2959 = vmatmul.bf16.gmra.mxu0 %v826
        %v2960 = vpop.f32.mrf.mxu0
        %v2961 = vadd.f32 %v2872, %v2960
        %v2962 = vpop.f32.mrf.mxu0
        %v2963 = vadd.f32 %v2874, %v2962
        %2964 = vmatmul.bf16.gmra.mxu0 %v832
        %v2965 = vpop.f32.mrf.mxu0
        %v2966 = vadd.f32 %v2877, %v2965
        %v2967 = vpop.f32.mrf.mxu0
        %v2968 = vadd.f32 %v2879, %v2967
        %2969 = vmatmul.bf16.gmra.mxu0 %v838
        %v2970 = vpop.f32.mrf.mxu0
        %v2971 = vadd.f32 %v2882, %v2970
        %v2972 = vpop.f32.mrf.mxu0
        %v2973 = vadd.f32 %v2884, %v2972
        %2974 = vmatmul.bf16.gmra.mxu0 %v844
        %v2975 = vpop.f32.mrf.mxu0
        %v2976 = vadd.f32 %v2887, %v2975
        %v2977 = vpop.f32.mrf.mxu0
        %v2978 = vadd.f32 %v2889, %v2977
        %2979 = vmatmul.bf16.gmra.mxu0 %v850
        %v2980 = vpop.f32.mrf.mxu0
        %v2981 = vadd.f32 %v2892, %v2980
        %v2982 = vpop.f32.mrf.mxu0
        %v2983 = vadd.f32 %v2894, %v2982
        %2984 = vmatmul.bf16.gmra.mxu0 %v856
        %v2985 = vpop.f32.mrf.mxu0
        %v2986 = vadd.f32 %v2897, %v2985
        %v2987 = vpop.f32.mrf.mxu0
        %v2988 = vadd.f32 %v2899, %v2987
        %2989 = vmatmul.bf16.gmra.mxu0 %v862
        %v2990 = vpop.f32.mrf.mxu0
        %v2991 = vadd.f32 %v2902, %v2990
        %v2992 = vpop.f32.mrf.mxu0
        %v2993 = vadd.f32 %v2904, %v2992
        %2994 = vmatmul.bf16.gmra.mxu0 %v868
        %v2995 = vpop.f32.mrf.mxu0
        %v2996 = vadd.f32 %v2907, %v2995
        %v2997 = vpop.f32.mrf.mxu0
        %v2998 = vadd.f32 %v2909, %v2997
        %2999 = vmatmul.bf16.gmra.mxu0 %v874
        %v3000 = vpop.f32.mrf.mxu0
        %v3001 = vadd.f32 %v2912, %v3000
        %v3002 = vpop.f32.mrf.mxu0
        %v3003 = vadd.f32 %v2914, %v3002
        %3004 = vmatmul.bf16.gmra.mxu0 %v880
        %v3005 = vpop.f32.mrf.mxu0
        %v3006 = vadd.f32 %v2917, %v3005
        %v3007 = vpop.f32.mrf.mxu0
        %v3008 = vadd.f32 %v2919, %v3007
        %3009 = vmatmul.bf16.gmra.mxu0 %v886
        %v3010 = vpop.f32.mrf.mxu0
        %v3011 = vadd.f32 %v2922, %v3010
        %v3012 = vpop.f32.mrf.mxu0
        %v3013 = vadd.f32 %v2924, %v3012
        %3014 = vmatmul.bf16.gmra.mxu0 %v892
        %v3015 = vpop.f32.mrf.mxu0
        %v3016 = vadd.f32 %v2927, %v3015
        %v3017 = vpop.f32.mrf.mxu0
        %v3018 = vadd.f32 %v2929, %v3017
        %3019 = vmatmul.bf16.gmra.mxu0 %v898
        %v3020 = vpop.f32.mrf.mxu0
        %v3021 = vadd.f32 %v2932, %v3020
        %v3022 = vpop.f32.mrf.mxu0
        %v3023 = vadd.f32 %v2934, %v3022
        %3024 = vmatmul.bf16.gmra.mxu0 %v904
        %v3025 = vpop.f32.mrf.mxu0
        %v3026 = vadd.f32 %v2937, %v3025
        %v3027 = vpop.f32.mrf.mxu0
        %v3028 = vadd.f32 %v2939, %v3027
        %3029 = vmatmul.bf16.gmra.mxu0 %v910
        %v3030 = vpop.f32.mrf.mxu0
        %v3031 = vadd.f32 %v2942, %v3030
        %v3032 = vpop.f32.mrf.mxu0
        %v3033 = vadd.f32 %v2944, %v3032
        %3034 = vdwg.mxu0
        %3035 = vmatpush.bf16.msra.mxu0 %v1613
        %3036 = vmatpush.bf16.msra.mxu0 %v1609
        %3037 = vmatpush.bf16.msra.mxu0 %v1605
        %3038 = vmatpush.bf16.msra.mxu0 %v1601
        %3039 = vmatpush.bf16.msra.mxu0 %v1597
        %3040 = vmatpush.bf16.msra.mxu0 %v1593
        %3041 = vmatpush.bf16.msra.mxu0 %v1589
        %3042 = vmatpush.bf16.msra.mxu0 %v1585
        %3043 = vmatmul.bf16.gmra.mxu0 %v815
        %v3044 = vpop.f32.mrf.mxu0
        %v3045 = vadd.f32 %v521, %v3044
        %v3046 = vpop.f32.mrf.mxu0
        %v3047 = vadd.f32 %v521, %v3046
        %3048 = vmatmul.bf16.gmra.mxu0 %v821
        %v3049 = vpop.f32.mrf.mxu0
        %v3050 = vadd.f32 %v521, %v3049
        %v3051 = vpop.f32.mrf.mxu0
        %v3052 = vadd.f32 %v521, %v3051
        %3053 = vmatmul.bf16.gmra.mxu0 %v827
        %v3054 = vpop.f32.mrf.mxu0
        %v3055 = vadd.f32 %v521, %v3054
        %v3056 = vpop.f32.mrf.mxu0
        %v3057 = vadd.f32 %v521, %v3056
        %3058 = vmatmul.bf16.gmra.mxu0 %v833
        %v3059 = vpop.f32.mrf.mxu0
        %v3060 = vadd.f32 %v521, %v3059
        %v3061 = vpop.f32.mrf.mxu0
        %v3062 = vadd.f32 %v521, %v3061
        %3063 = vmatmul.bf16.gmra.mxu0 %v839
        %v3064 = vpop.f32.mrf.mxu0
        %v3065 = vadd.f32 %v521, %v3064
        %v3066 = vpop.f32.mrf.mxu0
        %v3067 = vadd.f32 %v521, %v3066
        %3068 = vmatmul.bf16.gmra.mxu0 %v845
        %v3069 = vpop.f32.mrf.mxu0
        %v3070 = vadd.f32 %v521, %v3069
        %v3071 = vpop.f32.mrf.mxu0
        %v3072 = vadd.f32 %v521, %v3071
        %3073 = vmatmul.bf16.gmra.mxu0 %v851
        %v3074 = vpop.f32.mrf.mxu0
        %v3075 = vadd.f32 %v521, %v3074
        %v3076 = vpop.f32.mrf.mxu0
        %v3077 = vadd.f32 %v521, %v3076
        %3078 = vmatmul.bf16.gmra.mxu0 %v857
        %v3079 = vpop.f32.mrf.mxu0
        %v3080 = vadd.f32 %v521, %v3079
        %v3081 = vpop.f32.mrf.mxu0
        %v3082 = vadd.f32 %v521, %v3081
        %3083 = vmatmul.bf16.gmra.mxu0 %v863
        %v3084 = vpop.f32.mrf.mxu0
        %v3085 = vadd.f32 %v521, %v3084
        %v3086 = vpop.f32.mrf.mxu0
        %v3087 = vadd.f32 %v521, %v3086
        %3088 = vmatmul.bf16.gmra.mxu0 %v869
        %v3089 = vpop.f32.mrf.mxu0
        %v3090 = vadd.f32 %v521, %v3089
        %v3091 = vpop.f32.mrf.mxu0
        %v3092 = vadd.f32 %v521, %v3091
        %3093 = vmatmul.bf16.gmra.mxu0 %v875
        %v3094 = vpop.f32.mrf.mxu0
        %v3095 = vadd.f32 %v521, %v3094
        %v3096 = vpop.f32.mrf.mxu0
        %v3097 = vadd.f32 %v521, %v3096
        %3098 = vmatmul.bf16.gmra.mxu0 %v881
        %v3099 = vpop.f32.mrf.mxu0
        %v3100 = vadd.f32 %v521, %v3099
        %v3101 = vpop.f32.mrf.mxu0
        %v3102 = vadd.f32 %v521, %v3101
        %3103 = vmatmul.bf16.gmra.mxu0 %v887
        %v3104 = vpop.f32.mrf.mxu0
        %v3105 = vadd.f32 %v521, %v3104
        %v3106 = vpop.f32.mrf.mxu0
        %v3107 = vadd.f32 %v521, %v3106
        %3108 = vmatmul.bf16.gmra.mxu0 %v893
        %v3109 = vpop.f32.mrf.mxu0
        %v3110 = vadd.f32 %v521, %v3109
        %v3111 = vpop.f32.mrf.mxu0
        %v3112 = vadd.f32 %v521, %v3111
        %3113 = vmatmul.bf16.gmra.mxu0 %v899
        %v3114 = vpop.f32.mrf.mxu0
        %v3115 = vadd.f32 %v521, %v3114
        %v3116 = vpop.f32.mrf.mxu0
        %v3117 = vadd.f32 %v521, %v3116
        %3118 = vmatmul.bf16.gmra.mxu0 %v905
        %v3119 = vpop.f32.mrf.mxu0
        %v3120 = vadd.f32 %v521, %v3119
        %v3121 = vpop.f32.mrf.mxu0
        %v3122 = vadd.f32 %v521, %v3121
        %3123 = vdwg.mxu0
        %3124 = vmatpush.bf16.msra.mxu0 %v1645
        %3125 = vmatpush.bf16.msra.mxu0 %v1641
        %3126 = vmatpush.bf16.msra.mxu0 %v1637
        %3127 = vmatpush.bf16.msra.mxu0 %v1633
        %3128 = vmatpush.bf16.msra.mxu0 %v1629
        %3129 = vmatpush.bf16.msra.mxu0 %v1625
        %3130 = vmatpush.bf16.msra.mxu0 %v1621
        %3131 = vmatpush.bf16.msra.mxu0 %v1617
        %3132 = vmatmul.bf16.gmra.mxu0 %v816
        %v3133 = vpop.f32.mrf.mxu0
        %v3134 = vadd.f32 %v3045, %v3133
        %v3135 = vpop.f32.mrf.mxu0
        %v3136 = vadd.f32 %v3047, %v3135
        %3137 = vmatmul.bf16.gmra.mxu0 %v822
        %v3138 = vpop.f32.mrf.mxu0
        %v3139 = vadd.f32 %v3050, %v3138
        %v3140 = vpop.f32.mrf.mxu0
        %v3141 = vadd.f32 %v3052, %v3140
        %3142 = vmatmul.bf16.gmra.mxu0 %v828
        %v3143 = vpop.f32.mrf.mxu0
        %v3144 = vadd.f32 %v3055, %v3143
        %v3145 = vpop.f32.mrf.mxu0
        %v3146 = vadd.f32 %v3057, %v3145
        %3147 = vmatmul.bf16.gmra.mxu0 %v834
        %v3148 = vpop.f32.mrf.mxu0
        %v3149 = vadd.f32 %v3060, %v3148
        %v3150 = vpop.f32.mrf.mxu0
        %v3151 = vadd.f32 %v3062, %v3150
        %3152 = vmatmul.bf16.gmra.mxu0 %v840
        %v3153 = vpop.f32.mrf.mxu0
        %v3154 = vadd.f32 %v3065, %v3153
        %v3155 = vpop.f32.mrf.mxu0
        %v3156 = vadd.f32 %v3067, %v3155
        %3157 = vmatmul.bf16.gmra.mxu0 %v846
        %v3158 = vpop.f32.mrf.mxu0
        %v3159 = vadd.f32 %v3070, %v3158
        %v3160 = vpop.f32.mrf.mxu0
        %v3161 = vadd.f32 %v3072, %v3160
        %3162 = vmatmul.bf16.gmra.mxu0 %v852
        %v3163 = vpop.f32.mrf.mxu0
        %v3164 = vadd.f32 %v3075, %v3163
        %v3165 = vpop.f32.mrf.mxu0
        %v3166 = vadd.f32 %v3077, %v3165
        %3167 = vmatmul.bf16.gmra.mxu0 %v858
        %v3168 = vpop.f32.mrf.mxu0
        %v3169 = vadd.f32 %v3080, %v3168
        %v3170 = vpop.f32.mrf.mxu0
        %v3171 = vadd.f32 %v3082, %v3170
        %3172 = vmatmul.bf16.gmra.mxu0 %v864
        %v3173 = vpop.f32.mrf.mxu0
        %v3174 = vadd.f32 %v3085, %v3173
        %v3175 = vpop.f32.mrf.mxu0
        %v3176 = vadd.f32 %v3087, %v3175
        %3177 = vmatmul.bf16.gmra.mxu0 %v870
        %v3178 = vpop.f32.mrf.mxu0
        %v3179 = vadd.f32 %v3090, %v3178
        %v3180 = vpop.f32.mrf.mxu0
        %v3181 = vadd.f32 %v3092, %v3180
        %3182 = vmatmul.bf16.gmra.mxu0 %v876
        %v3183 = vpop.f32.mrf.mxu0
        %v3184 = vadd.f32 %v3095, %v3183
        %v3185 = vpop.f32.mrf.mxu0
        %v3186 = vadd.f32 %v3097, %v3185
        %3187 = vmatmul.bf16.gmra.mxu0 %v882
        %v3188 = vpop.f32.mrf.mxu0
        %v3189 = vadd.f32 %v3100, %v3188
        %v3190 = vpop.f32.mrf.mxu0
        %v3191 = vadd.f32 %v3102, %v3190
        %3192 = vmatmul.bf16.gmra.mxu0 %v888
        %v3193 = vpop.f32.mrf.mxu0
        %v3194 = vadd.f32 %v3105, %v3193
        %v3195 = vpop.f32.mrf.mxu0
        %v3196 = vadd.f32 %v3107, %v3195
        %3197 = vmatmul.bf16.gmra.mxu0 %v894
        %v3198 = vpop.f32.mrf.mxu0
        %v3199 = vadd.f32 %v3110, %v3198
        %v3200 = vpop.f32.mrf.mxu0
        %v3201 = vadd.f32 %v3112, %v3200
        %3202 = vmatmul.bf16.gmra.mxu0 %v900
        %v3203 = vpop.f32.mrf.mxu0
        %v3204 = vadd.f32 %v3115, %v3203
        %v3205 = vpop.f32.mrf.mxu0
        %v3206 = vadd.f32 %v3117, %v3205
        %3207 = vmatmul.bf16.gmra.mxu0 %v906
        %v3208 = vpop.f32.mrf.mxu0
        %v3209 = vadd.f32 %v3120, %v3208
        %v3210 = vpop.f32.mrf.mxu0
        %v3211 = vadd.f32 %v3122, %v3210
        %3212 = vdwg.mxu0
        %3213 = vmatpush.bf16.msra.mxu0 %v1677
        %3214 = vmatpush.bf16.msra.mxu0 %v1673
        %3215 = vmatpush.bf16.msra.mxu0 %v1669
        %3216 = vmatpush.bf16.msra.mxu0 %v1665
        %3217 = vmatpush.bf16.msra.mxu0 %v1661
        %3218 = vmatpush.bf16.msra.mxu0 %v1657
        %3219 = vmatpush.bf16.msra.mxu0 %v1653
        %3220 = vmatpush.bf16.msra.mxu0 %v1649
        %3221 = vmatmul.bf16.gmra.mxu0 %v817
        %v3222 = vpop.f32.mrf.mxu0
        %v3223 = vadd.f32 %v3134, %v3222
        %v3224 = vpop.f32.mrf.mxu0
        %v3225 = vadd.f32 %v3136, %v3224
        %3226 = vmatmul.bf16.gmra.mxu0 %v823
        %v3227 = vpop.f32.mrf.mxu0
        %v3228 = vadd.f32 %v3139, %v3227
        %v3229 = vpop.f32.mrf.mxu0
        %v3230 = vadd.f32 %v3141, %v3229
        %3231 = vmatmul.bf16.gmra.mxu0 %v829
        %v3232 = vpop.f32.mrf.mxu0
        %v3233 = vadd.f32 %v3144, %v3232
        %v3234 = vpop.f32.mrf.mxu0
        %v3235 = vadd.f32 %v3146, %v3234
        %3236 = vmatmul.bf16.gmra.mxu0 %v835
        %v3237 = vpop.f32.mrf.mxu0
        %v3238 = vadd.f32 %v3149, %v3237
        %v3239 = vpop.f32.mrf.mxu0
        %v3240 = vadd.f32 %v3151, %v3239
        %3241 = vmatmul.bf16.gmra.mxu0 %v841
        %v3242 = vpop.f32.mrf.mxu0
        %v3243 = vadd.f32 %v3154, %v3242
        %v3244 = vpop.f32.mrf.mxu0
        %v3245 = vadd.f32 %v3156, %v3244
        %3246 = vmatmul.bf16.gmra.mxu0 %v847
        %v3247 = vpop.f32.mrf.mxu0
        %v3248 = vadd.f32 %v3159, %v3247
        %v3249 = vpop.f32.mrf.mxu0
        %v3250 = vadd.f32 %v3161, %v3249
        %3251 = vmatmul.bf16.gmra.mxu0 %v853
        %v3252 = vpop.f32.mrf.mxu0
        %v3253 = vadd.f32 %v3164, %v3252
        %v3254 = vpop.f32.mrf.mxu0
        %v3255 = vadd.f32 %v3166, %v3254
        %3256 = vmatmul.bf16.gmra.mxu0 %v859
        %v3257 = vpop.f32.mrf.mxu0
        %v3258 = vadd.f32 %v3169, %v3257
        %v3259 = vpop.f32.mrf.mxu0
        %v3260 = vadd.f32 %v3171, %v3259
        %3261 = vmatmul.bf16.gmra.mxu0 %v865
        %v3262 = vpop.f32.mrf.mxu0
        %v3263 = vadd.f32 %v3174, %v3262
        %v3264 = vpop.f32.mrf.mxu0
        %v3265 = vadd.f32 %v3176, %v3264
        %3266 = vmatmul.bf16.gmra.mxu0 %v871
        %v3267 = vpop.f32.mrf.mxu0
        %v3268 = vadd.f32 %v3179, %v3267
        %v3269 = vpop.f32.mrf.mxu0
        %v3270 = vadd.f32 %v3181, %v3269
        %3271 = vmatmul.bf16.gmra.mxu0 %v877
        %v3272 = vpop.f32.mrf.mxu0
        %v3273 = vadd.f32 %v3184, %v3272
        %v3274 = vpop.f32.mrf.mxu0
        %v3275 = vadd.f32 %v3186, %v3274
        %3276 = vmatmul.bf16.gmra.mxu0 %v883
        %v3277 = vpop.f32.mrf.mxu0
        %v3278 = vadd.f32 %v3189, %v3277
        %v3279 = vpop.f32.mrf.mxu0
        %v3280 = vadd.f32 %v3191, %v3279
        %3281 = vmatmul.bf16.gmra.mxu0 %v889
        %v3282 = vpop.f32.mrf.mxu0
        %v3283 = vadd.f32 %v3194, %v3282
        %v3284 = vpop.f32.mrf.mxu0
        %v3285 = vadd.f32 %v3196, %v3284
        %3286 = vmatmul.bf16.gmra.mxu0 %v895
        %v3287 = vpop.f32.mrf.mxu0
        %v3288 = vadd.f32 %v3199, %v3287
        %v3289 = vpop.f32.mrf.mxu0
        %v3290 = vadd.f32 %v3201, %v3289
        %3291 = vmatmul.bf16.gmra.mxu0 %v901
        %v3292 = vpop.f32.mrf.mxu0
        %v3293 = vadd.f32 %v3204, %v3292
        %v3294 = vpop.f32.mrf.mxu0
        %v3295 = vadd.f32 %v3206, %v3294
        %3296 = vmatmul.bf16.gmra.mxu0 %v907
        %v3297 = vpop.f32.mrf.mxu0
        %v3298 = vadd.f32 %v3209, %v3297
        %v3299 = vpop.f32.mrf.mxu0
        %v3300 = vadd.f32 %v3211, %v3299
        %3301 = vdwg.mxu0
        %3302 = vmatpush.bf16.msra.mxu0 %v1709
        %3303 = vmatpush.bf16.msra.mxu0 %v1705
        %3304 = vmatpush.bf16.msra.mxu0 %v1701
        %3305 = vmatpush.bf16.msra.mxu0 %v1697
        %3306 = vmatpush.bf16.msra.mxu0 %v1693
        %3307 = vmatpush.bf16.msra.mxu0 %v1689
        %3308 = vmatpush.bf16.msra.mxu0 %v1685
        %3309 = vmatpush.bf16.msra.mxu0 %v1681
        %3310 = vmatmul.bf16.gmra.mxu0 %v818
        %v3311 = vpop.f32.mrf.mxu0
        %v3312 = vadd.f32 %v3223, %v3311
        %v3313 = vpop.f32.mrf.mxu0
        %v3314 = vadd.f32 %v3225, %v3313
        %3315 = vmatmul.bf16.gmra.mxu0 %v824
        %v3316 = vpop.f32.mrf.mxu0
        %v3317 = vadd.f32 %v3228, %v3316
        %v3318 = vpop.f32.mrf.mxu0
        %v3319 = vadd.f32 %v3230, %v3318
        %3320 = vmatmul.bf16.gmra.mxu0 %v830
        %v3321 = vpop.f32.mrf.mxu0
        %v3322 = vadd.f32 %v3233, %v3321
        %v3323 = vpop.f32.mrf.mxu0
        %v3324 = vadd.f32 %v3235, %v3323
        %3325 = vmatmul.bf16.gmra.mxu0 %v836
        %v3326 = vpop.f32.mrf.mxu0
        %v3327 = vadd.f32 %v3238, %v3326
        %v3328 = vpop.f32.mrf.mxu0
        %v3329 = vadd.f32 %v3240, %v3328
        %3330 = vmatmul.bf16.gmra.mxu0 %v842
        %v3331 = vpop.f32.mrf.mxu0
        %v3332 = vadd.f32 %v3243, %v3331
        %v3333 = vpop.f32.mrf.mxu0
        %v3334 = vadd.f32 %v3245, %v3333
        %3335 = vmatmul.bf16.gmra.mxu0 %v848
        %v3336 = vpop.f32.mrf.mxu0
        %v3337 = vadd.f32 %v3248, %v3336
        %v3338 = vpop.f32.mrf.mxu0
        %v3339 = vadd.f32 %v3250, %v3338
        %3340 = vmatmul.bf16.gmra.mxu0 %v854
        %v3341 = vpop.f32.mrf.mxu0
        %v3342 = vadd.f32 %v3253, %v3341
        %v3343 = vpop.f32.mrf.mxu0
        %v3344 = vadd.f32 %v3255, %v3343
        %3345 = vmatmul.bf16.gmra.mxu0 %v860
        %v3346 = vpop.f32.mrf.mxu0
        %v3347 = vadd.f32 %v3258, %v3346
        %v3348 = vpop.f32.mrf.mxu0
        %v3349 = vadd.f32 %v3260, %v3348
        %3350 = vmatmul.bf16.gmra.mxu0 %v866
        %v3351 = vpop.f32.mrf.mxu0
        %v3352 = vadd.f32 %v3263, %v3351
        %v3353 = vpop.f32.mrf.mxu0
        %v3354 = vadd.f32 %v3265, %v3353
        %3355 = vmatmul.bf16.gmra.mxu0 %v872
        %v3356 = vpop.f32.mrf.mxu0
        %v3357 = vadd.f32 %v3268, %v3356
        %v3358 = vpop.f32.mrf.mxu0
        %v3359 = vadd.f32 %v3270, %v3358
        %3360 = vmatmul.bf16.gmra.mxu0 %v878
        %v3361 = vpop.f32.mrf.mxu0
        %v3362 = vadd.f32 %v3273, %v3361
        %v3363 = vpop.f32.mrf.mxu0
        %v3364 = vadd.f32 %v3275, %v3363
        %3365 = vmatmul.bf16.gmra.mxu0 %v884
        %v3366 = vpop.f32.mrf.mxu0
        %v3367 = vadd.f32 %v3278, %v3366
        %v3368 = vpop.f32.mrf.mxu0
        %v3369 = vadd.f32 %v3280, %v3368
        %3370 = vmatmul.bf16.gmra.mxu0 %v890
        %v3371 = vpop.f32.mrf.mxu0
        %v3372 = vadd.f32 %v3283, %v3371
        %v3373 = vpop.f32.mrf.mxu0
        %v3374 = vadd.f32 %v3285, %v3373
        %3375 = vmatmul.bf16.gmra.mxu0 %v896
        %v3376 = vpop.f32.mrf.mxu0
        %v3377 = vadd.f32 %v3288, %v3376
        %v3378 = vpop.f32.mrf.mxu0
        %v3379 = vadd.f32 %v3290, %v3378
        %3380 = vmatmul.bf16.gmra.mxu0 %v902
        %v3381 = vpop.f32.mrf.mxu0
        %v3382 = vadd.f32 %v3293, %v3381
        %v3383 = vpop.f32.mrf.mxu0
        %v3384 = vadd.f32 %v3295, %v3383
        %3385 = vmatmul.bf16.gmra.mxu0 %v908
        %v3386 = vpop.f32.mrf.mxu0
        %v3387 = vadd.f32 %v3298, %v3386
        %v3388 = vpop.f32.mrf.mxu0
        %v3389 = vadd.f32 %v3300, %v3388
        %3390 = vdwg.mxu0
        %3391 = vmatpush.bf16.msra.mxu0 %v1741
        %3392 = vmatpush.bf16.msra.mxu0 %v1737
        %3393 = vmatpush.bf16.msra.mxu0 %v1733
        %3394 = vmatpush.bf16.msra.mxu0 %v1729
        %3395 = vmatpush.bf16.msra.mxu0 %v1725
        %3396 = vmatpush.bf16.msra.mxu0 %v1721
        %3397 = vmatpush.bf16.msra.mxu0 %v1717
        %3398 = vmatpush.bf16.msra.mxu0 %v1713
        %3399 = vmatmul.bf16.gmra.mxu0 %v819
        %v3400 = vpop.f32.mrf.mxu0
        %v3401 = vadd.f32 %v3312, %v3400
        %v3402 = vpop.f32.mrf.mxu0
        %v3403 = vadd.f32 %v3314, %v3402
        %3404 = vmatmul.bf16.gmra.mxu0 %v825
        %v3405 = vpop.f32.mrf.mxu0
        %v3406 = vadd.f32 %v3317, %v3405
        %v3407 = vpop.f32.mrf.mxu0
        %v3408 = vadd.f32 %v3319, %v3407
        %3409 = vmatmul.bf16.gmra.mxu0 %v831
        %v3410 = vpop.f32.mrf.mxu0
        %v3411 = vadd.f32 %v3322, %v3410
        %v3412 = vpop.f32.mrf.mxu0
        %v3413 = vadd.f32 %v3324, %v3412
        %3414 = vmatmul.bf16.gmra.mxu0 %v837
        %v3415 = vpop.f32.mrf.mxu0
        %v3416 = vadd.f32 %v3327, %v3415
        %v3417 = vpop.f32.mrf.mxu0
        %v3418 = vadd.f32 %v3329, %v3417
        %3419 = vmatmul.bf16.gmra.mxu0 %v843
        %v3420 = vpop.f32.mrf.mxu0
        %v3421 = vadd.f32 %v3332, %v3420
        %v3422 = vpop.f32.mrf.mxu0
        %v3423 = vadd.f32 %v3334, %v3422
        %3424 = vmatmul.bf16.gmra.mxu0 %v849
        %v3425 = vpop.f32.mrf.mxu0
        %v3426 = vadd.f32 %v3337, %v3425
        %v3427 = vpop.f32.mrf.mxu0
        %v3428 = vadd.f32 %v3339, %v3427
        %3429 = vmatmul.bf16.gmra.mxu0 %v855
        %v3430 = vpop.f32.mrf.mxu0
        %v3431 = vadd.f32 %v3342, %v3430
        %v3432 = vpop.f32.mrf.mxu0
        %v3433 = vadd.f32 %v3344, %v3432
        %3434 = vmatmul.bf16.gmra.mxu0 %v861
        %v3435 = vpop.f32.mrf.mxu0
        %v3436 = vadd.f32 %v3347, %v3435
        %v3437 = vpop.f32.mrf.mxu0
        %v3438 = vadd.f32 %v3349, %v3437
        %3439 = vmatmul.bf16.gmra.mxu0 %v867
        %v3440 = vpop.f32.mrf.mxu0
        %v3441 = vadd.f32 %v3352, %v3440
        %v3442 = vpop.f32.mrf.mxu0
        %v3443 = vadd.f32 %v3354, %v3442
        %3444 = vmatmul.bf16.gmra.mxu0 %v873
        %v3445 = vpop.f32.mrf.mxu0
        %v3446 = vadd.f32 %v3357, %v3445
        %v3447 = vpop.f32.mrf.mxu0
        %v3448 = vadd.f32 %v3359, %v3447
        %3449 = vmatmul.bf16.gmra.mxu0 %v879
        %v3450 = vpop.f32.mrf.mxu0
        %v3451 = vadd.f32 %v3362, %v3450
        %v3452 = vpop.f32.mrf.mxu0
        %v3453 = vadd.f32 %v3364, %v3452
        %3454 = vmatmul.bf16.gmra.mxu0 %v885
        %v3455 = vpop.f32.mrf.mxu0
        %v3456 = vadd.f32 %v3367, %v3455
        %v3457 = vpop.f32.mrf.mxu0
        %v3458 = vadd.f32 %v3369, %v3457
        %3459 = vmatmul.bf16.gmra.mxu0 %v891
        %v3460 = vpop.f32.mrf.mxu0
        %v3461 = vadd.f32 %v3372, %v3460
        %v3462 = vpop.f32.mrf.mxu0
        %v3463 = vadd.f32 %v3374, %v3462
        %3464 = vmatmul.bf16.gmra.mxu0 %v897
        %v3465 = vpop.f32.mrf.mxu0
        %v3466 = vadd.f32 %v3377, %v3465
        %v3467 = vpop.f32.mrf.mxu0
        %v3468 = vadd.f32 %v3379, %v3467
        %3469 = vmatmul.bf16.gmra.mxu0 %v903
        %v3470 = vpop.f32.mrf.mxu0
        %v3471 = vadd.f32 %v3382, %v3470
        %v3472 = vpop.f32.mrf.mxu0
        %v3473 = vadd.f32 %v3384, %v3472
        %3474 = vmatmul.bf16.gmra.mxu0 %v909
        %v3475 = vpop.f32.mrf.mxu0
        %v3476 = vadd.f32 %v3387, %v3475
        %v3477 = vpop.f32.mrf.mxu0
        %v3478 = vadd.f32 %v3389, %v3477
        %3479 = vdwg.mxu0
        %3480 = vmatpush.bf16.msra.mxu0 %v1773
        %3481 = vmatpush.bf16.msra.mxu0 %v1769
        %3482 = vmatpush.bf16.msra.mxu0 %v1765
        %3483 = vmatpush.bf16.msra.mxu0 %v1761
        %3484 = vmatpush.bf16.msra.mxu0 %v1757
        %3485 = vmatpush.bf16.msra.mxu0 %v1753
        %3486 = vmatpush.bf16.msra.mxu0 %v1749
        %3487 = vmatpush.bf16.msra.mxu0 %v1745
        %3488 = vmatmul.bf16.gmra.mxu0 %v820
        %v3489 = vpop.f32.mrf.mxu0
        %v3490 = vadd.f32 %v3401, %v3489
        %v3491 = vpop.f32.mrf.mxu0
        %v3492 = vadd.f32 %v3403, %v3491
        %3493 = vmatmul.bf16.gmra.mxu0 %v826
        %v3494 = vpop.f32.mrf.mxu0
        %v3495 = vadd.f32 %v3406, %v3494
        %v3496 = vpop.f32.mrf.mxu0
        %v3497 = vadd.f32 %v3408, %v3496
        %3498 = vmatmul.bf16.gmra.mxu0 %v832
        %v3499 = vpop.f32.mrf.mxu0
        %v3500 = vadd.f32 %v3411, %v3499
        %v3501 = vpop.f32.mrf.mxu0
        %v3502 = vadd.f32 %v3413, %v3501
        %3503 = vmatmul.bf16.gmra.mxu0 %v838
        %v3504 = vpop.f32.mrf.mxu0
        %v3505 = vadd.f32 %v3416, %v3504
        %v3506 = vpop.f32.mrf.mxu0
        %v3507 = vadd.f32 %v3418, %v3506
        %3508 = vmatmul.bf16.gmra.mxu0 %v844
        %v3509 = vpop.f32.mrf.mxu0
        %v3510 = vadd.f32 %v3421, %v3509
        %v3511 = vpop.f32.mrf.mxu0
        %v3512 = vadd.f32 %v3423, %v3511
        %3513 = vmatmul.bf16.gmra.mxu0 %v850
        %v3514 = vpop.f32.mrf.mxu0
        %v3515 = vadd.f32 %v3426, %v3514
        %v3516 = vpop.f32.mrf.mxu0
        %v3517 = vadd.f32 %v3428, %v3516
        %3518 = vmatmul.bf16.gmra.mxu0 %v856
        %v3519 = vpop.f32.mrf.mxu0
        %v3520 = vadd.f32 %v3431, %v3519
        %v3521 = vpop.f32.mrf.mxu0
        %v3522 = vadd.f32 %v3433, %v3521
        %3523 = vmatmul.bf16.gmra.mxu0 %v862
        %v3524 = vpop.f32.mrf.mxu0
        %v3525 = vadd.f32 %v3436, %v3524
        %v3526 = vpop.f32.mrf.mxu0
        %v3527 = vadd.f32 %v3438, %v3526
        %3528 = vmatmul.bf16.gmra.mxu0 %v868
        %v3529 = vpop.f32.mrf.mxu0
        %v3530 = vadd.f32 %v3441, %v3529
        %v3531 = vpop.f32.mrf.mxu0
        %v3532 = vadd.f32 %v3443, %v3531
        %3533 = vmatmul.bf16.gmra.mxu0 %v874
        %v3534 = vpop.f32.mrf.mxu0
        %v3535 = vadd.f32 %v3446, %v3534
        %v3536 = vpop.f32.mrf.mxu0
        %v3537 = vadd.f32 %v3448, %v3536
        %3538 = vmatmul.bf16.gmra.mxu0 %v880
        %v3539 = vpop.f32.mrf.mxu0
        %v3540 = vadd.f32 %v3451, %v3539
        %v3541 = vpop.f32.mrf.mxu0
        %v3542 = vadd.f32 %v3453, %v3541
        %3543 = vmatmul.bf16.gmra.mxu0 %v886
        %v3544 = vpop.f32.mrf.mxu0
        %v3545 = vadd.f32 %v3456, %v3544
        %v3546 = vpop.f32.mrf.mxu0
        %v3547 = vadd.f32 %v3458, %v3546
        %3548 = vmatmul.bf16.gmra.mxu0 %v892
        %v3549 = vpop.f32.mrf.mxu0
        %v3550 = vadd.f32 %v3461, %v3549
        %v3551 = vpop.f32.mrf.mxu0
        %v3552 = vadd.f32 %v3463, %v3551
        %3553 = vmatmul.bf16.gmra.mxu0 %v898
        %v3554 = vpop.f32.mrf.mxu0
        %v3555 = vadd.f32 %v3466, %v3554
        %v3556 = vpop.f32.mrf.mxu0
        %v3557 = vadd.f32 %v3468, %v3556
        %3558 = vmatmul.bf16.gmra.mxu0 %v904
        %v3559 = vpop.f32.mrf.mxu0
        %v3560 = vadd.f32 %v3471, %v3559
        %v3561 = vpop.f32.mrf.mxu0
        %v3562 = vadd.f32 %v3473, %v3561
        %3563 = vmatmul.bf16.gmra.mxu0 %v910
        %v3564 = vpop.f32.mrf.mxu0
        %v3565 = vadd.f32 %v3476, %v3564
        %v3566 = vpop.f32.mrf.mxu0
        %v3567 = vadd.f32 %v3478, %v3566
        %3568 = vdwg.mxu0
        %3569 = vmatpush.bf16.msra.mxu0 %v1614
        %3570 = vmatpush.bf16.msra.mxu0 %v1610
        %3571 = vmatpush.bf16.msra.mxu0 %v1606
        %3572 = vmatpush.bf16.msra.mxu0 %v1602
        %3573 = vmatpush.bf16.msra.mxu0 %v1598
        %3574 = vmatpush.bf16.msra.mxu0 %v1594
        %3575 = vmatpush.bf16.msra.mxu0 %v1590
        %3576 = vmatpush.bf16.msra.mxu0 %v1586
        %3577 = vmatmul.bf16.gmra.mxu0 %v815
        %v3578 = vpop.f32.mrf.mxu0
        %v3579 = vadd.f32 %v522, %v3578
        %v3580 = vpop.f32.mrf.mxu0
        %v3581 = vadd.f32 %v522, %v3580
        %3582 = vmatmul.bf16.gmra.mxu0 %v821
        %v3583 = vpop.f32.mrf.mxu0
        %v3584 = vadd.f32 %v522, %v3583
        %v3585 = vpop.f32.mrf.mxu0
        %v3586 = vadd.f32 %v522, %v3585
        %3587 = vmatmul.bf16.gmra.mxu0 %v827
        %v3588 = vpop.f32.mrf.mxu0
        %v3589 = vadd.f32 %v522, %v3588
        %v3590 = vpop.f32.mrf.mxu0
        %v3591 = vadd.f32 %v522, %v3590
        %3592 = vmatmul.bf16.gmra.mxu0 %v833
        %v3593 = vpop.f32.mrf.mxu0
        %v3594 = vadd.f32 %v522, %v3593
        %v3595 = vpop.f32.mrf.mxu0
        %v3596 = vadd.f32 %v522, %v3595
        %3597 = vmatmul.bf16.gmra.mxu0 %v839
        %v3598 = vpop.f32.mrf.mxu0
        %v3599 = vadd.f32 %v522, %v3598
        %v3600 = vpop.f32.mrf.mxu0
        %v3601 = vadd.f32 %v522, %v3600
        %3602 = vmatmul.bf16.gmra.mxu0 %v845
        %v3603 = vpop.f32.mrf.mxu0
        %v3604 = vadd.f32 %v522, %v3603
        %v3605 = vpop.f32.mrf.mxu0
        %v3606 = vadd.f32 %v522, %v3605
        %3607 = vmatmul.bf16.gmra.mxu0 %v851
        %v3608 = vpop.f32.mrf.mxu0
        %v3609 = vadd.f32 %v522, %v3608
        %v3610 = vpop.f32.mrf.mxu0
        %v3611 = vadd.f32 %v522, %v3610
        %3612 = vmatmul.bf16.gmra.mxu0 %v857
        %v3613 = vpop.f32.mrf.mxu0
        %v3614 = vadd.f32 %v522, %v3613
        %v3615 = vpop.f32.mrf.mxu0
        %v3616 = vadd.f32 %v522, %v3615
        %3617 = vmatmul.bf16.gmra.mxu0 %v863
        %v3618 = vpop.f32.mrf.mxu0
        %v3619 = vadd.f32 %v522, %v3618
        %v3620 = vpop.f32.mrf.mxu0
        %v3621 = vadd.f32 %v522, %v3620
        %3622 = vmatmul.bf16.gmra.mxu0 %v869
        %v3623 = vpop.f32.mrf.mxu0
        %v3624 = vadd.f32 %v522, %v3623
        %v3625 = vpop.f32.mrf.mxu0
        %v3626 = vadd.f32 %v522, %v3625
        %3627 = vmatmul.bf16.gmra.mxu0 %v875
        %v3628 = vpop.f32.mrf.mxu0
        %v3629 = vadd.f32 %v522, %v3628
        %v3630 = vpop.f32.mrf.mxu0
        %v3631 = vadd.f32 %v522, %v3630
        %3632 = vmatmul.bf16.gmra.mxu0 %v881
        %v3633 = vpop.f32.mrf.mxu0
        %v3634 = vadd.f32 %v522, %v3633
        %v3635 = vpop.f32.mrf.mxu0
        %v3636 = vadd.f32 %v522, %v3635
        %3637 = vmatmul.bf16.gmra.mxu0 %v887
        %v3638 = vpop.f32.mrf.mxu0
        %v3639 = vadd.f32 %v522, %v3638
        %v3640 = vpop.f32.mrf.mxu0
        %v3641 = vadd.f32 %v522, %v3640
        %3642 = vmatmul.bf16.gmra.mxu0 %v893
        %v3643 = vpop.f32.mrf.mxu0
        %v3644 = vadd.f32 %v522, %v3643
        %v3645 = vpop.f32.mrf.mxu0
        %v3646 = vadd.f32 %v522, %v3645
        %3647 = vmatmul.bf16.gmra.mxu0 %v899
        %v3648 = vpop.f32.mrf.mxu0
        %v3649 = vadd.f32 %v522, %v3648
        %v3650 = vpop.f32.mrf.mxu0
        %v3651 = vadd.f32 %v522, %v3650
        %3652 = vmatmul.bf16.gmra.mxu0 %v905
        %v3653 = vpop.f32.mrf.mxu0
        %v3654 = vadd.f32 %v522, %v3653
        %v3655 = vpop.f32.mrf.mxu0
        %v3656 = vadd.f32 %v522, %v3655
        %3657 = vdwg.mxu0
        %3658 = vmatpush.bf16.msra.mxu0 %v1646
        %3659 = vmatpush.bf16.msra.mxu0 %v1642
        %3660 = vmatpush.bf16.msra.mxu0 %v1638
        %3661 = vmatpush.bf16.msra.mxu0 %v1634
        %3662 = vmatpush.bf16.msra.mxu0 %v1630
        %3663 = vmatpush.bf16.msra.mxu0 %v1626
        %3664 = vmatpush.bf16.msra.mxu0 %v1622
        %3665 = vmatpush.bf16.msra.mxu0 %v1618
        %3666 = vmatmul.bf16.gmra.mxu0 %v816
        %v3667 = vpop.f32.mrf.mxu0
        %v3668 = vadd.f32 %v3579, %v3667
        %v3669 = vpop.f32.mrf.mxu0
        %v3670 = vadd.f32 %v3581, %v3669
        %3671 = vmatmul.bf16.gmra.mxu0 %v822
        %v3672 = vpop.f32.mrf.mxu0
        %v3673 = vadd.f32 %v3584, %v3672
        %v3674 = vpop.f32.mrf.mxu0
        %v3675 = vadd.f32 %v3586, %v3674
        %3676 = vmatmul.bf16.gmra.mxu0 %v828
        %v3677 = vpop.f32.mrf.mxu0
        %v3678 = vadd.f32 %v3589, %v3677
        %v3679 = vpop.f32.mrf.mxu0
        %v3680 = vadd.f32 %v3591, %v3679
        %3681 = vmatmul.bf16.gmra.mxu0 %v834
        %v3682 = vpop.f32.mrf.mxu0
        %v3683 = vadd.f32 %v3594, %v3682
        %v3684 = vpop.f32.mrf.mxu0
        %v3685 = vadd.f32 %v3596, %v3684
        %3686 = vmatmul.bf16.gmra.mxu0 %v840
        %v3687 = vpop.f32.mrf.mxu0
        %v3688 = vadd.f32 %v3599, %v3687
        %v3689 = vpop.f32.mrf.mxu0
        %v3690 = vadd.f32 %v3601, %v3689
        %3691 = vmatmul.bf16.gmra.mxu0 %v846
        %v3692 = vpop.f32.mrf.mxu0
        %v3693 = vadd.f32 %v3604, %v3692
        %v3694 = vpop.f32.mrf.mxu0
        %v3695 = vadd.f32 %v3606, %v3694
        %3696 = vmatmul.bf16.gmra.mxu0 %v852
        %v3697 = vpop.f32.mrf.mxu0
        %v3698 = vadd.f32 %v3609, %v3697
        %v3699 = vpop.f32.mrf.mxu0
        %v3700 = vadd.f32 %v3611, %v3699
        %3701 = vmatmul.bf16.gmra.mxu0 %v858
        %v3702 = vpop.f32.mrf.mxu0
        %v3703 = vadd.f32 %v3614, %v3702
        %v3704 = vpop.f32.mrf.mxu0
        %v3705 = vadd.f32 %v3616, %v3704
        %3706 = vmatmul.bf16.gmra.mxu0 %v864
        %v3707 = vpop.f32.mrf.mxu0
        %v3708 = vadd.f32 %v3619, %v3707
        %v3709 = vpop.f32.mrf.mxu0
        %v3710 = vadd.f32 %v3621, %v3709
        %3711 = vmatmul.bf16.gmra.mxu0 %v870
        %v3712 = vpop.f32.mrf.mxu0
        %v3713 = vadd.f32 %v3624, %v3712
        %v3714 = vpop.f32.mrf.mxu0
        %v3715 = vadd.f32 %v3626, %v3714
        %3716 = vmatmul.bf16.gmra.mxu0 %v876
        %v3717 = vpop.f32.mrf.mxu0
        %v3718 = vadd.f32 %v3629, %v3717
        %v3719 = vpop.f32.mrf.mxu0
        %v3720 = vadd.f32 %v3631, %v3719
        %3721 = vmatmul.bf16.gmra.mxu0 %v882
        %v3722 = vpop.f32.mrf.mxu0
        %v3723 = vadd.f32 %v3634, %v3722
        %v3724 = vpop.f32.mrf.mxu0
        %v3725 = vadd.f32 %v3636, %v3724
        %3726 = vmatmul.bf16.gmra.mxu0 %v888
        %v3727 = vpop.f32.mrf.mxu0
        %v3728 = vadd.f32 %v3639, %v3727
        %v3729 = vpop.f32.mrf.mxu0
        %v3730 = vadd.f32 %v3641, %v3729
        %3731 = vmatmul.bf16.gmra.mxu0 %v894
        %v3732 = vpop.f32.mrf.mxu0
        %v3733 = vadd.f32 %v3644, %v3732
        %v3734 = vpop.f32.mrf.mxu0
        %v3735 = vadd.f32 %v3646, %v3734
        %3736 = vmatmul.bf16.gmra.mxu0 %v900
        %v3737 = vpop.f32.mrf.mxu0
        %v3738 = vadd.f32 %v3649, %v3737
        %v3739 = vpop.f32.mrf.mxu0
        %v3740 = vadd.f32 %v3651, %v3739
        %3741 = vmatmul.bf16.gmra.mxu0 %v906
        %v3742 = vpop.f32.mrf.mxu0
        %v3743 = vadd.f32 %v3654, %v3742
        %v3744 = vpop.f32.mrf.mxu0
        %v3745 = vadd.f32 %v3656, %v3744
        %3746 = vdwg.mxu0
        %3747 = vmatpush.bf16.msra.mxu0 %v1678
        %3748 = vmatpush.bf16.msra.mxu0 %v1674
        %3749 = vmatpush.bf16.msra.mxu0 %v1670
        %3750 = vmatpush.bf16.msra.mxu0 %v1666
        %3751 = vmatpush.bf16.msra.mxu0 %v1662
        %3752 = vmatpush.bf16.msra.mxu0 %v1658
        %3753 = vmatpush.bf16.msra.mxu0 %v1654
        %3754 = vmatpush.bf16.msra.mxu0 %v1650
        %3755 = vmatmul.bf16.gmra.mxu0 %v817
        %v3756 = vpop.f32.mrf.mxu0
        %v3757 = vadd.f32 %v3668, %v3756
        %v3758 = vpop.f32.mrf.mxu0
        %v3759 = vadd.f32 %v3670, %v3758
        %3760 = vmatmul.bf16.gmra.mxu0 %v823
        %v3761 = vpop.f32.mrf.mxu0
        %v3762 = vadd.f32 %v3673, %v3761
        %v3763 = vpop.f32.mrf.mxu0
        %v3764 = vadd.f32 %v3675, %v3763
        %3765 = vmatmul.bf16.gmra.mxu0 %v829
        %v3766 = vpop.f32.mrf.mxu0
        %v3767 = vadd.f32 %v3678, %v3766
        %v3768 = vpop.f32.mrf.mxu0
        %v3769 = vadd.f32 %v3680, %v3768
        %3770 = vmatmul.bf16.gmra.mxu0 %v835
        %v3771 = vpop.f32.mrf.mxu0
        %v3772 = vadd.f32 %v3683, %v3771
        %v3773 = vpop.f32.mrf.mxu0
        %v3774 = vadd.f32 %v3685, %v3773
        %3775 = vmatmul.bf16.gmra.mxu0 %v841
        %v3776 = vpop.f32.mrf.mxu0
        %v3777 = vadd.f32 %v3688, %v3776
        %v3778 = vpop.f32.mrf.mxu0
        %v3779 = vadd.f32 %v3690, %v3778
        %3780 = vmatmul.bf16.gmra.mxu0 %v847
        %v3781 = vpop.f32.mrf.mxu0
        %v3782 = vadd.f32 %v3693, %v3781
        %v3783 = vpop.f32.mrf.mxu0
        %v3784 = vadd.f32 %v3695, %v3783
        %3785 = vmatmul.bf16.gmra.mxu0 %v853
        %v3786 = vpop.f32.mrf.mxu0
        %v3787 = vadd.f32 %v3698, %v3786
        %v3788 = vpop.f32.mrf.mxu0
        %v3789 = vadd.f32 %v3700, %v3788
        %3790 = vmatmul.bf16.gmra.mxu0 %v859
        %v3791 = vpop.f32.mrf.mxu0
        %v3792 = vadd.f32 %v3703, %v3791
        %v3793 = vpop.f32.mrf.mxu0
        %v3794 = vadd.f32 %v3705, %v3793
        %3795 = vmatmul.bf16.gmra.mxu0 %v865
        %v3796 = vpop.f32.mrf.mxu0
        %v3797 = vadd.f32 %v3708, %v3796
        %v3798 = vpop.f32.mrf.mxu0
        %v3799 = vadd.f32 %v3710, %v3798
        %3800 = vmatmul.bf16.gmra.mxu0 %v871
        %v3801 = vpop.f32.mrf.mxu0
        %v3802 = vadd.f32 %v3713, %v3801
        %v3803 = vpop.f32.mrf.mxu0
        %v3804 = vadd.f32 %v3715, %v3803
        %3805 = vmatmul.bf16.gmra.mxu0 %v877
        %v3806 = vpop.f32.mrf.mxu0
        %v3807 = vadd.f32 %v3718, %v3806
        %v3808 = vpop.f32.mrf.mxu0
        %v3809 = vadd.f32 %v3720, %v3808
        %3810 = vmatmul.bf16.gmra.mxu0 %v883
        %v3811 = vpop.f32.mrf.mxu0
        %v3812 = vadd.f32 %v3723, %v3811
        %v3813 = vpop.f32.mrf.mxu0
        %v3814 = vadd.f32 %v3725, %v3813
        %3815 = vmatmul.bf16.gmra.mxu0 %v889
        %v3816 = vpop.f32.mrf.mxu0
        %v3817 = vadd.f32 %v3728, %v3816
        %v3818 = vpop.f32.mrf.mxu0
        %v3819 = vadd.f32 %v3730, %v3818
        %3820 = vmatmul.bf16.gmra.mxu0 %v895
        %v3821 = vpop.f32.mrf.mxu0
        %v3822 = vadd.f32 %v3733, %v3821
        %v3823 = vpop.f32.mrf.mxu0
        %v3824 = vadd.f32 %v3735, %v3823
        %3825 = vmatmul.bf16.gmra.mxu0 %v901
        %v3826 = vpop.f32.mrf.mxu0
        %v3827 = vadd.f32 %v3738, %v3826
        %v3828 = vpop.f32.mrf.mxu0
        %v3829 = vadd.f32 %v3740, %v3828
        %3830 = vmatmul.bf16.gmra.mxu0 %v907
        %v3831 = vpop.f32.mrf.mxu0
        %v3832 = vadd.f32 %v3743, %v3831
        %v3833 = vpop.f32.mrf.mxu0
        %v3834 = vadd.f32 %v3745, %v3833
        %3835 = vdwg.mxu0
        %3836 = vmatpush.bf16.msra.mxu0 %v1710
        %3837 = vmatpush.bf16.msra.mxu0 %v1706
        %3838 = vmatpush.bf16.msra.mxu0 %v1702
        %3839 = vmatpush.bf16.msra.mxu0 %v1698
        %3840 = vmatpush.bf16.msra.mxu0 %v1694
        %3841 = vmatpush.bf16.msra.mxu0 %v1690
        %3842 = vmatpush.bf16.msra.mxu0 %v1686
        %3843 = vmatpush.bf16.msra.mxu0 %v1682
        %3844 = vmatmul.bf16.gmra.mxu0 %v818
        %v3845 = vpop.f32.mrf.mxu0
        %v3846 = vadd.f32 %v3757, %v3845
        %v3847 = vpop.f32.mrf.mxu0
        %v3848 = vadd.f32 %v3759, %v3847
        %3849 = vmatmul.bf16.gmra.mxu0 %v824
        %v3850 = vpop.f32.mrf.mxu0
        %v3851 = vadd.f32 %v3762, %v3850
        %v3852 = vpop.f32.mrf.mxu0
        %v3853 = vadd.f32 %v3764, %v3852
        %3854 = vmatmul.bf16.gmra.mxu0 %v830
        %v3855 = vpop.f32.mrf.mxu0
        %v3856 = vadd.f32 %v3767, %v3855
        %v3857 = vpop.f32.mrf.mxu0
        %v3858 = vadd.f32 %v3769, %v3857
        %3859 = vmatmul.bf16.gmra.mxu0 %v836
        %v3860 = vpop.f32.mrf.mxu0
        %v3861 = vadd.f32 %v3772, %v3860
        %v3862 = vpop.f32.mrf.mxu0
        %v3863 = vadd.f32 %v3774, %v3862
        %3864 = vmatmul.bf16.gmra.mxu0 %v842
        %v3865 = vpop.f32.mrf.mxu0
        %v3866 = vadd.f32 %v3777, %v3865
        %v3867 = vpop.f32.mrf.mxu0
        %v3868 = vadd.f32 %v3779, %v3867
        %3869 = vmatmul.bf16.gmra.mxu0 %v848
        %v3870 = vpop.f32.mrf.mxu0
        %v3871 = vadd.f32 %v3782, %v3870
        %v3872 = vpop.f32.mrf.mxu0
        %v3873 = vadd.f32 %v3784, %v3872
        %3874 = vmatmul.bf16.gmra.mxu0 %v854
        %v3875 = vpop.f32.mrf.mxu0
        %v3876 = vadd.f32 %v3787, %v3875
        %v3877 = vpop.f32.mrf.mxu0
        %v3878 = vadd.f32 %v3789, %v3877
        %3879 = vmatmul.bf16.gmra.mxu0 %v860
        %v3880 = vpop.f32.mrf.mxu0
        %v3881 = vadd.f32 %v3792, %v3880
        %v3882 = vpop.f32.mrf.mxu0
        %v3883 = vadd.f32 %v3794, %v3882
        %3884 = vmatmul.bf16.gmra.mxu0 %v866
        %v3885 = vpop.f32.mrf.mxu0
        %v3886 = vadd.f32 %v3797, %v3885
        %v3887 = vpop.f32.mrf.mxu0
        %v3888 = vadd.f32 %v3799, %v3887
        %3889 = vmatmul.bf16.gmra.mxu0 %v872
        %v3890 = vpop.f32.mrf.mxu0
        %v3891 = vadd.f32 %v3802, %v3890
        %v3892 = vpop.f32.mrf.mxu0
        %v3893 = vadd.f32 %v3804, %v3892
        %3894 = vmatmul.bf16.gmra.mxu0 %v878
        %v3895 = vpop.f32.mrf.mxu0
        %v3896 = vadd.f32 %v3807, %v3895
        %v3897 = vpop.f32.mrf.mxu0
        %v3898 = vadd.f32 %v3809, %v3897
        %3899 = vmatmul.bf16.gmra.mxu0 %v884
        %v3900 = vpop.f32.mrf.mxu0
        %v3901 = vadd.f32 %v3812, %v3900
        %v3902 = vpop.f32.mrf.mxu0
        %v3903 = vadd.f32 %v3814, %v3902
        %3904 = vmatmul.bf16.gmra.mxu0 %v890
        %v3905 = vpop.f32.mrf.mxu0
        %v3906 = vadd.f32 %v3817, %v3905
        %v3907 = vpop.f32.mrf.mxu0
        %v3908 = vadd.f32 %v3819, %v3907
        %3909 = vmatmul.bf16.gmra.mxu0 %v896
        %v3910 = vpop.f32.mrf.mxu0
        %v3911 = vadd.f32 %v3822, %v3910
        %v3912 = vpop.f32.mrf.mxu0
        %v3913 = vadd.f32 %v3824, %v3912
        %3914 = vmatmul.bf16.gmra.mxu0 %v902
        %v3915 = vpop.f32.mrf.mxu0
        %v3916 = vadd.f32 %v3827, %v3915
        %v3917 = vpop.f32.mrf.mxu0
        %v3918 = vadd.f32 %v3829, %v3917
        %3919 = vmatmul.bf16.gmra.mxu0 %v908
        %v3920 = vpop.f32.mrf.mxu0
        %v3921 = vadd.f32 %v3832, %v3920
        %v3922 = vpop.f32.mrf.mxu0
        %v3923 = vadd.f32 %v3834, %v3922
        %3924 = vdwg.mxu0
        %3925 = vmatpush.bf16.msra.mxu0 %v1742
        %3926 = vmatpush.bf16.msra.mxu0 %v1738
        %3927 = vmatpush.bf16.msra.mxu0 %v1734
        %3928 = vmatpush.bf16.msra.mxu0 %v1730
        %3929 = vmatpush.bf16.msra.mxu0 %v1726
        %3930 = vmatpush.bf16.msra.mxu0 %v1722
        %3931 = vmatpush.bf16.msra.mxu0 %v1718
        %3932 = vmatpush.bf16.msra.mxu0 %v1714
        %3933 = vmatmul.bf16.gmra.mxu0 %v819
        %v3934 = vpop.f32.mrf.mxu0
        %v3935 = vadd.f32 %v3846, %v3934
        %v3936 = vpop.f32.mrf.mxu0
        %v3937 = vadd.f32 %v3848, %v3936
        %3938 = vmatmul.bf16.gmra.mxu0 %v825
        %v3939 = vpop.f32.mrf.mxu0
        %v3940 = vadd.f32 %v3851, %v3939
        %v3941 = vpop.f32.mrf.mxu0
        %v3942 = vadd.f32 %v3853, %v3941
        %3943 = vmatmul.bf16.gmra.mxu0 %v831
        %v3944 = vpop.f32.mrf.mxu0
        %v3945 = vadd.f32 %v3856, %v3944
        %v3946 = vpop.f32.mrf.mxu0
        %v3947 = vadd.f32 %v3858, %v3946
        %3948 = vmatmul.bf16.gmra.mxu0 %v837
        %v3949 = vpop.f32.mrf.mxu0
        %v3950 = vadd.f32 %v3861, %v3949
        %v3951 = vpop.f32.mrf.mxu0
        %v3952 = vadd.f32 %v3863, %v3951
        %3953 = vmatmul.bf16.gmra.mxu0 %v843
        %v3954 = vpop.f32.mrf.mxu0
        %v3955 = vadd.f32 %v3866, %v3954
        %v3956 = vpop.f32.mrf.mxu0
        %v3957 = vadd.f32 %v3868, %v3956
        %3958 = vmatmul.bf16.gmra.mxu0 %v849
        %v3959 = vpop.f32.mrf.mxu0
        %v3960 = vadd.f32 %v3871, %v3959
        %v3961 = vpop.f32.mrf.mxu0
        %v3962 = vadd.f32 %v3873, %v3961
        %3963 = vmatmul.bf16.gmra.mxu0 %v855
        %v3964 = vpop.f32.mrf.mxu0
        %v3965 = vadd.f32 %v3876, %v3964
        %v3966 = vpop.f32.mrf.mxu0
        %v3967 = vadd.f32 %v3878, %v3966
        %3968 = vmatmul.bf16.gmra.mxu0 %v861
        %v3969 = vpop.f32.mrf.mxu0
        %v3970 = vadd.f32 %v3881, %v3969
        %v3971 = vpop.f32.mrf.mxu0
        %v3972 = vadd.f32 %v3883, %v3971
        %3973 = vmatmul.bf16.gmra.mxu0 %v867
        %v3974 = vpop.f32.mrf.mxu0
        %v3975 = vadd.f32 %v3886, %v3974
        %v3976 = vpop.f32.mrf.mxu0
        %v3977 = vadd.f32 %v3888, %v3976
        %3978 = vmatmul.bf16.gmra.mxu0 %v873
        %v3979 = vpop.f32.mrf.mxu0
        %v3980 = vadd.f32 %v3891, %v3979
        %v3981 = vpop.f32.mrf.mxu0
        %v3982 = vadd.f32 %v3893, %v3981
        %3983 = vmatmul.bf16.gmra.mxu0 %v879
        %v3984 = vpop.f32.mrf.mxu0
        %v3985 = vadd.f32 %v3896, %v3984
        %v3986 = vpop.f32.mrf.mxu0
        %v3987 = vadd.f32 %v3898, %v3986
        %3988 = vmatmul.bf16.gmra.mxu0 %v885
        %v3989 = vpop.f32.mrf.mxu0
        %v3990 = vadd.f32 %v3901, %v3989
        %v3991 = vpop.f32.mrf.mxu0
        %v3992 = vadd.f32 %v3903, %v3991
        %3993 = vmatmul.bf16.gmra.mxu0 %v891
        %v3994 = vpop.f32.mrf.mxu0
        %v3995 = vadd.f32 %v3906, %v3994
        %v3996 = vpop.f32.mrf.mxu0
        %v3997 = vadd.f32 %v3908, %v3996
        %3998 = vmatmul.bf16.gmra.mxu0 %v897
        %v3999 = vpop.f32.mrf.mxu0
        %v4000 = vadd.f32 %v3911, %v3999
        %v4001 = vpop.f32.mrf.mxu0
        %v4002 = vadd.f32 %v3913, %v4001
        %4003 = vmatmul.bf16.gmra.mxu0 %v903
        %v4004 = vpop.f32.mrf.mxu0
        %v4005 = vadd.f32 %v3916, %v4004
        %v4006 = vpop.f32.mrf.mxu0
        %v4007 = vadd.f32 %v3918, %v4006
        %4008 = vmatmul.bf16.gmra.mxu0 %v909
        %v4009 = vpop.f32.mrf.mxu0
        %v4010 = vadd.f32 %v3921, %v4009
        %v4011 = vpop.f32.mrf.mxu0
        %v4012 = vadd.f32 %v3923, %v4011
        %4013 = vdwg.mxu0
        %4014 = vmatpush.bf16.msra.mxu0 %v1774
        %4015 = vmatpush.bf16.msra.mxu0 %v1770
        %4016 = vmatpush.bf16.msra.mxu0 %v1766
        %4017 = vmatpush.bf16.msra.mxu0 %v1762
        %4018 = vmatpush.bf16.msra.mxu0 %v1758
        %4019 = vmatpush.bf16.msra.mxu0 %v1754
        %4020 = vmatpush.bf16.msra.mxu0 %v1750
        %4021 = vmatpush.bf16.msra.mxu0 %v1746
        %4022 = vmatmul.bf16.gmra.mxu0 %v820
        %v4023 = vpop.f32.mrf.mxu0
        %v4024 = vadd.f32 %v3935, %v4023
        %v4025 = vpop.f32.mrf.mxu0
        %v4026 = vadd.f32 %v3937, %v4025
        %4027 = vmatmul.bf16.gmra.mxu0 %v826
        %v4028 = vpop.f32.mrf.mxu0
        %v4029 = vadd.f32 %v3940, %v4028
        %v4030 = vpop.f32.mrf.mxu0
        %v4031 = vadd.f32 %v3942, %v4030
        %4032 = vmatmul.bf16.gmra.mxu0 %v832
        %v4033 = vpop.f32.mrf.mxu0
        %v4034 = vadd.f32 %v3945, %v4033
        %v4035 = vpop.f32.mrf.mxu0
        %v4036 = vadd.f32 %v3947, %v4035
        %4037 = vmatmul.bf16.gmra.mxu0 %v838
        %v4038 = vpop.f32.mrf.mxu0
        %v4039 = vadd.f32 %v3950, %v4038
        %v4040 = vpop.f32.mrf.mxu0
        %v4041 = vadd.f32 %v3952, %v4040
        %4042 = vmatmul.bf16.gmra.mxu0 %v844
        %v4043 = vpop.f32.mrf.mxu0
        %v4044 = vadd.f32 %v3955, %v4043
        %v4045 = vpop.f32.mrf.mxu0
        %v4046 = vadd.f32 %v3957, %v4045
        %4047 = vmatmul.bf16.gmra.mxu0 %v850
        %v4048 = vpop.f32.mrf.mxu0
        %v4049 = vadd.f32 %v3960, %v4048
        %v4050 = vpop.f32.mrf.mxu0
        %v4051 = vadd.f32 %v3962, %v4050
        %4052 = vmatmul.bf16.gmra.mxu0 %v856
        %v4053 = vpop.f32.mrf.mxu0
        %v4054 = vadd.f32 %v3965, %v4053
        %v4055 = vpop.f32.mrf.mxu0
        %v4056 = vadd.f32 %v3967, %v4055
        %4057 = vmatmul.bf16.gmra.mxu0 %v862
        %v4058 = vpop.f32.mrf.mxu0
        %v4059 = vadd.f32 %v3970, %v4058
        %v4060 = vpop.f32.mrf.mxu0
        %v4061 = vadd.f32 %v3972, %v4060
        %4062 = vmatmul.bf16.gmra.mxu0 %v868
        %v4063 = vpop.f32.mrf.mxu0
        %v4064 = vadd.f32 %v3975, %v4063
        %v4065 = vpop.f32.mrf.mxu0
        %v4066 = vadd.f32 %v3977, %v4065
        %4067 = vmatmul.bf16.gmra.mxu0 %v874
        %v4068 = vpop.f32.mrf.mxu0
        %v4069 = vadd.f32 %v3980, %v4068
        %v4070 = vpop.f32.mrf.mxu0
        %v4071 = vadd.f32 %v3982, %v4070
        %4072 = vmatmul.bf16.gmra.mxu0 %v880
        %v4073 = vpop.f32.mrf.mxu0
        %v4074 = vadd.f32 %v3985, %v4073
        %v4075 = vpop.f32.mrf.mxu0
        %v4076 = vadd.f32 %v3987, %v4075
        %4077 = vmatmul.bf16.gmra.mxu0 %v886
        %v4078 = vpop.f32.mrf.mxu0
        %v4079 = vadd.f32 %v3990, %v4078
        %v4080 = vpop.f32.mrf.mxu0
        %v4081 = vadd.f32 %v3992, %v4080
        %4082 = vmatmul.bf16.gmra.mxu0 %v892
        %v4083 = vpop.f32.mrf.mxu0
        %v4084 = vadd.f32 %v3995, %v4083
        %v4085 = vpop.f32.mrf.mxu0
        %v4086 = vadd.f32 %v3997, %v4085
        %4087 = vmatmul.bf16.gmra.mxu0 %v898
        %v4088 = vpop.f32.mrf.mxu0
        %v4089 = vadd.f32 %v4000, %v4088
        %v4090 = vpop.f32.mrf.mxu0
        %v4091 = vadd.f32 %v4002, %v4090
        %4092 = vmatmul.bf16.gmra.mxu0 %v904
        %v4093 = vpop.f32.mrf.mxu0
        %v4094 = vadd.f32 %v4005, %v4093
        %v4095 = vpop.f32.mrf.mxu0
        %v4096 = vadd.f32 %v4007, %v4095
        %4097 = vmatmul.bf16.gmra.mxu0 %v910
        %v4098 = vpop.f32.mrf.mxu0
        %v4099 = vadd.f32 %v4010, %v4098
        %v4100 = vpop.f32.mrf.mxu0
        %v4101 = vadd.f32 %v4012, %v4100
        %4102 = vdwg.mxu0
        %v4103 = vmax.f32 %v2422, 0.0
        %v4104 = vmax.f32 %v2956, 0.0
        %v4105 = vmax.f32 %v3490, 0.0
        %v4106 = vmax.f32 %v4024, 0.0
        %v4107 = vmax.f32 %v2424, 0.0
        %v4108 = vmax.f32 %v2958, 0.0
        %v4109 = vmax.f32 %v3492, 0.0
        %v4110 = vmax.f32 %v4026, 0.0
        %v4111 = vmax.f32 %v2427, 0.0
        %v4112 = vmax.f32 %v2961, 0.0
        %v4113 = vmax.f32 %v3495, 0.0
        %v4114 = vmax.f32 %v4029, 0.0
        %v4115 = vmax.f32 %v2429, 0.0
        %v4116 = vmax.f32 %v2963, 0.0
        %v4117 = vmax.f32 %v3497, 0.0
        %v4118 = vmax.f32 %v4031, 0.0
        %v4119 = vmax.f32 %v2432, 0.0
        %v4120 = vmax.f32 %v2966, 0.0
        %v4121 = vmax.f32 %v3500, 0.0
        %v4122 = vmax.f32 %v4034, 0.0
        %v4123 = vmax.f32 %v2434, 0.0
        %v4124 = vmax.f32 %v2968, 0.0
        %v4125 = vmax.f32 %v3502, 0.0
        %v4126 = vmax.f32 %v4036, 0.0
        %v4127 = vmax.f32 %v2437, 0.0
        %v4128 = vmax.f32 %v2971, 0.0
        %v4129 = vmax.f32 %v3505, 0.0
        %v4130 = vmax.f32 %v4039, 0.0
        %v4131 = vmax.f32 %v2439, 0.0
        %v4132 = vmax.f32 %v2973, 0.0
        %v4133 = vmax.f32 %v3507, 0.0
        %v4134 = vmax.f32 %v4041, 0.0
        %v4135 = vmax.f32 %v2442, 0.0
        %v4136 = vmax.f32 %v2976, 0.0
        %v4137 = vmax.f32 %v3510, 0.0
        %v4138 = vmax.f32 %v4044, 0.0
        %v4139 = vmax.f32 %v2444, 0.0
        %v4140 = vmax.f32 %v2978, 0.0
        %v4141 = vmax.f32 %v3512, 0.0
        %v4142 = vmax.f32 %v4046, 0.0
        %v4143 = vmax.f32 %v2447, 0.0
        %v4144 = vmax.f32 %v2981, 0.0
        %v4145 = vmax.f32 %v3515, 0.0
        %v4146 = vmax.f32 %v4049, 0.0
        %v4147 = vmax.f32 %v2449, 0.0
        %v4148 = vmax.f32 %v2983, 0.0
        %v4149 = vmax.f32 %v3517, 0.0
        %v4150 = vmax.f32 %v4051, 0.0
        %v4151 = vmax.f32 %v2452, 0.0
        %v4152 = vmax.f32 %v2986, 0.0
        %v4153 = vmax.f32 %v3520, 0.0
        %v4154 = vmax.f32 %v4054, 0.0
        %v4155 = vmax.f32 %v2454, 0.0
        %v4156 = vmax.f32 %v2988, 0.0
        %v4157 = vmax.f32 %v3522, 0.0
        %v4158 = vmax.f32 %v4056, 0.0
        %v4159 = vmax.f32 %v2457, 0.0
        %v4160 = vmax.f32 %v2991, 0.0
        %v4161 = vmax.f32 %v3525, 0.0
        %v4162 = vmax.f32 %v4059, 0.0
        %v4163 = vmax.f32 %v2459, 0.0
        %v4164 = vmax.f32 %v2993, 0.0
        %v4165 = vmax.f32 %v3527, 0.0
        %v4166 = vmax.f32 %v4061, 0.0
        %v4167 = vmax.f32 %v2462, 0.0
        %v4168 = vmax.f32 %v2996, 0.0
        %v4169 = vmax.f32 %v3530, 0.0
        %v4170 = vmax.f32 %v4064, 0.0
        %v4171 = vmax.f32 %v2464, 0.0
        %v4172 = vmax.f32 %v2998, 0.0
        %v4173 = vmax.f32 %v3532, 0.0
        %v4174 = vmax.f32 %v4066, 0.0
        %v4175 = vmax.f32 %v2467, 0.0
        %v4176 = vmax.f32 %v3001, 0.0
        %v4177 = vmax.f32 %v3535, 0.0
        %v4178 = vmax.f32 %v4069, 0.0
        %v4179 = vmax.f32 %v2469, 0.0
        %v4180 = vmax.f32 %v3003, 0.0
        %v4181 = vmax.f32 %v3537, 0.0
        %v4182 = vmax.f32 %v4071, 0.0
        %v4183 = vmax.f32 %v2472, 0.0
        %v4184 = vmax.f32 %v3006, 0.0
        %v4185 = vmax.f32 %v3540, 0.0
        %v4186 = vmax.f32 %v4074, 0.0
        %v4187 = vmax.f32 %v2474, 0.0
        %v4188 = vmax.f32 %v3008, 0.0
        %v4189 = vmax.f32 %v3542, 0.0
        %v4190 = vmax.f32 %v4076, 0.0
        %v4191 = vmax.f32 %v2477, 0.0
        %v4192 = vmax.f32 %v3011, 0.0
        %v4193 = vmax.f32 %v3545, 0.0
        %v4194 = vmax.f32 %v4079, 0.0
        %v4195 = vmax.f32 %v2479, 0.0
        %v4196 = vmax.f32 %v3013, 0.0
        %v4197 = vmax.f32 %v3547, 0.0
        %v4198 = vmax.f32 %v4081, 0.0
        %v4199 = vmax.f32 %v2482, 0.0
        %v4200 = vmax.f32 %v3016, 0.0
        %v4201 = vmax.f32 %v3550, 0.0
        %v4202 = vmax.f32 %v4084, 0.0
        %v4203 = vmax.f32 %v2484, 0.0
        %v4204 = vmax.f32 %v3018, 0.0
        %v4205 = vmax.f32 %v3552, 0.0
        %v4206 = vmax.f32 %v4086, 0.0
        %v4207 = vmax.f32 %v2487, 0.0
        %v4208 = vmax.f32 %v3021, 0.0
        %v4209 = vmax.f32 %v3555, 0.0
        %v4210 = vmax.f32 %v4089, 0.0
        %v4211 = vmax.f32 %v2489, 0.0
        %v4212 = vmax.f32 %v3023, 0.0
        %v4213 = vmax.f32 %v3557, 0.0
        %v4214 = vmax.f32 %v4091, 0.0
        %v4215 = vmax.f32 %v2492, 0.0
        %v4216 = vmax.f32 %v3026, 0.0
        %v4217 = vmax.f32 %v3560, 0.0
        %v4218 = vmax.f32 %v4094, 0.0
        %v4219 = vmax.f32 %v2494, 0.0
        %v4220 = vmax.f32 %v3028, 0.0
        %v4221 = vmax.f32 %v3562, 0.0
        %v4222 = vmax.f32 %v4096, 0.0
        %v4223 = vmax.f32 %v2497, 0.0
        %v4224 = vmax.f32 %v3031, 0.0
        %v4225 = vmax.f32 %v3565, 0.0
        %v4226 = vmax.f32 %v4099, 0.0
        %v4227 = vmax.f32 %v2499, 0.0
        %v4228 = vmax.f32 %v3033, 0.0
        %v4229 = vmax.f32 %v3567, 0.0
        %v4230 = vmax.f32 %v4101, 0.0
        %v4231 = vld [vmem:[%s3] sm:$0xf]
        %s4232 = sld [smem:[#allocation2]]
        %v4233 = vstv %s4232
        %v4235 = vperm.slane %v4231, 0
        %v4236 = vperm.slane %v4231, 1
        %v4237 = vperm.slane %v4231, 2
        %v4238 = vperm.slane %v4231, 3
        %4243 = vmatpush.xpose.msra.mxu0 %v4163
        %4244 = vmatpush.xpose.msra.mxu0 %v4159
        %4245 = vmatpush.xpose.msra.mxu0 %v4155
        %4246 = vmatpush.xpose.msra.mxu0 %v4151
        %4247 = vmatpush.xpose.msra.mxu0 %v4147
        %4248 = vmatpush.xpose.msra.mxu0 %v4143
        %4249 = vmatpush.xpose.msra.mxu0 %v4139
        %4250 = vmatpush.xpose.msra.mxu0 %v4135
        %4251 = vmatpush.xpose.msra.mxu0 %v4131
        %4252 = vmatpush.xpose.msra.mxu0 %v4127
        %4253 = vmatpush.xpose.msra.mxu0 %v4123
        %4254 = vmatpush.xpose.msra.mxu0 %v4119
        %4255 = vmatpush.xpose.msra.mxu0 %v4115
        %4256 = vmatpush.xpose.msra.mxu0 %v4111
        %4257 = vmatpush.xpose.msra.mxu0 %v4107
        %4258 = vmatpush.xpose.msra.mxu0 %v4103
        %4259 = vmatmul.f32.gmra.mxu0 %v4235
        %v4260 = vpop.f32.mrf.mxu0
        %v4261 = vadd.f32 %v4233, %v4260
        %4262 = vdwg.mxu0
        %4263 = vmatpush.xpose.msra.mxu0 %v4164
        %4264 = vmatpush.xpose.msra.mxu0 %v4160
        %4265 = vmatpush.xpose.msra.mxu0 %v4156
        %4266 = vmatpush.xpose.msra.mxu0 %v4152
        %4267 = vmatpush.xpose.msra.mxu0 %v4148
        %4268 = vmatpush.xpose.msra.mxu0 %v4144
        %4269 = vmatpush.xpose.msra.mxu0 %v4140
        %4270 = vmatpush.xpose.msra.mxu0 %v4136
        %4271 = vmatpush.xpose.msra.mxu0 %v4132
        %4272 = vmatpush.xpose.msra.mxu0 %v4128
        %4273 = vmatpush.xpose.msra.mxu0 %v4124
        %4274 = vmatpush.xpose.msra.mxu0 %v4120
        %4275 = vmatpush.xpose.msra.mxu0 %v4116
        %4276 = vmatpush.xpose.msra.mxu0 %v4112
        %4277 = vmatpush.xpose.msra.mxu0 %v4108
        %4278 = vmatpush.xpose.msra.mxu0 %v4104
        %4279 = vmatmul.f32.gmra.mxu0 %v4236
        %v4280 = vpop.f32.mrf.mxu0
        %v4281 = vadd.f32 %v4261, %v4280
        %4282 = vdwg.mxu0
        %4283 = vmatpush.xpose.msra.mxu0 %v4165
        %4284 = vmatpush.xpose.msra.mxu0 %v4161
        %4285 = vmatpush.xpose.msra.mxu0 %v4157
        %4286 = vmatpush.xpose.msra.mxu0 %v4153
        %4287 = vmatpush.xpose.msra.mxu0 %v4149
        %4288 = vmatpush.xpose.msra.mxu0 %v4145
        %4289 = vmatpush.xpose.msra.mxu0 %v4141
        %4290 = vmatpush.xpose.msra.mxu0 %v4137
        %4291 = vmatpush.xpose.msra.mxu0 %v4133
        %4292 = vmatpush.xpose.msra.mxu0 %v4129
        %4293 = vmatpush.xpose.msra.mxu0 %v4125
        %4294 = vmatpush.xpose.msra.mxu0 %v4121
        %4295 = vmatpush.xpose.msra.mxu0 %v4117
        %4296 = vmatpush.xpose.msra.mxu0 %v4113
        %4297 = vmatpush.xpose.msra.mxu0 %v4109
        %4298 = vmatpush.xpose.msra.mxu0 %v4105
        %4299 = vmatmul.f32.gmra.mxu0 %v4237
        %v4300 = vpop.f32.mrf.mxu0
        %v4301 = vadd.f32 %v4281, %v4300
        %4302 = vdwg.mxu0
        %4303 = vmatpush.xpose.msra.mxu0 %v4166
        %4304 = vmatpush.xpose.msra.mxu0 %v4162
        %4305 = vmatpush.xpose.msra.mxu0 %v4158
        %4306 = vmatpush.xpose.msra.mxu0 %v4154
        %4307 = vmatpush.xpose.msra.mxu0 %v4150
        %4308 = vmatpush.xpose.msra.mxu0 %v4146
        %4309 = vmatpush.xpose.msra.mxu0 %v4142
        %4310 = vmatpush.xpose.msra.mxu0 %v4138
        %4311 = vmatpush.xpose.msra.mxu0 %v4134
        %4312 = vmatpush.xpose.msra.mxu0 %v4130
        %4313 = vmatpush.xpose.msra.mxu0 %v4126
        %4314 = vmatpush.xpose.msra.mxu0 %v4122
        %4315 = vmatpush.xpose.msra.mxu0 %v4118
        %4316 = vmatpush.xpose.msra.mxu0 %v4114
        %4317 = vmatpush.xpose.msra.mxu0 %v4110
        %4318 = vmatpush.xpose.msra.mxu0 %v4106
        %4319 = vmatmul.f32.gmra.mxu0 %v4238
        %v4320 = vpop.f32.mrf.mxu0
        %v4321 = vadd.f32 %v4301, %v4320
        %4322 = vdwg.mxu0
        %4323 = vmatpush.xpose.msra.mxu0 %v4227
        %4324 = vmatpush.xpose.msra.mxu0 %v4223
        %4325 = vmatpush.xpose.msra.mxu0 %v4219
        %4326 = vmatpush.xpose.msra.mxu0 %v4215
        %4327 = vmatpush.xpose.msra.mxu0 %v4211
        %4328 = vmatpush.xpose.msra.mxu0 %v4207
        %4329 = vmatpush.xpose.msra.mxu0 %v4203
        %4330 = vmatpush.xpose.msra.mxu0 %v4199
        %4331 = vmatpush.xpose.msra.mxu0 %v4195
        %4332 = vmatpush.xpose.msra.mxu0 %v4191
        %4333 = vmatpush.xpose.msra.mxu0 %v4187
        %4334 = vmatpush.xpose.msra.mxu0 %v4183
        %4335 = vmatpush.xpose.msra.mxu0 %v4179
        %4336 = vmatpush.xpose.msra.mxu0 %v4175
        %4337 = vmatpush.xpose.msra.mxu0 %v4171
        %4338 = vmatpush.xpose.msra.mxu0 %v4167
        %4339 = vmatmul.f32.gmra.mxu0 %v4235
        %v4340 = vpop.f32.mrf.mxu0
        %v4341 = vadd.f32 %v4233, %v4340
        %4342 = vdwg.mxu0
        %4343 = vmatpush.xpose.msra.mxu0 %v4228
        %4344 = vmatpush.xpose.msra.mxu0 %v4224
        %4345 = vmatpush.xpose.msra.mxu0 %v4220
        %4346 = vmatpush.xpose.msra.mxu0 %v4216
        %4347 = vmatpush.xpose.msra.mxu0 %v4212
        %4348 = vmatpush.xpose.msra.mxu0 %v4208
        %4349 = vmatpush.xpose.msra.mxu0 %v4204
        %4350 = vmatpush.xpose.msra.mxu0 %v4200
        %4351 = vmatpush.xpose.msra.mxu0 %v4196
        %4352 = vmatpush.xpose.msra.mxu0 %v4192
        %4353 = vmatpush.xpose.msra.mxu0 %v4188
        %4354 = vmatpush.xpose.msra.mxu0 %v4184
        %4355 = vmatpush.xpose.msra.mxu0 %v4180
        %4356 = vmatpush.xpose.msra.mxu0 %v4176
        %4357 = vmatpush.xpose.msra.mxu0 %v4172
        %4358 = vmatpush.xpose.msra.mxu0 %v4168
        %4359 = vmatmul.f32.gmra.mxu0 %v4236
        %v4360 = vpop.f32.mrf.mxu0
        %v4361 = vadd.f32 %v4341, %v4360
        %4362 = vdwg.mxu0
        %4363 = vmatpush.xpose.msra.mxu0 %v4229
        %4364 = vmatpush.xpose.msra.mxu0 %v4225
        %4365 = vmatpush.xpose.msra.mxu0 %v4221
        %4366 = vmatpush.xpose.msra.mxu0 %v4217
        %4367 = vmatpush.xpose.msra.mxu0 %v4213
        %4368 = vmatpush.xpose.msra.mxu0 %v4209
        %4369 = vmatpush.xpose.msra.mxu0 %v4205
        %4370 = vmatpush.xpose.msra.mxu0 %v4201
        %4371 = vmatpush.xpose.msra.mxu0 %v4197
        %4372 = vmatpush.xpose.msra.mxu0 %v4193
        %4373 = vmatpush.xpose.msra.mxu0 %v4189
        %4374 = vmatpush.xpose.msra.mxu0 %v4185
        %4375 = vmatpush.xpose.msra.mxu0 %v4181
        %4376 = vmatpush.xpose.msra.mxu0 %v4177
        %4377 = vmatpush.xpose.msra.mxu0 %v4173
        %4378 = vmatpush.xpose.msra.mxu0 %v4169
        %4379 = vmatmul.f32.gmra.mxu0 %v4237
        %v4380 = vpop.f32.mrf.mxu0
        %v4381 = vadd.f32 %v4361, %v4380
        %4382 = vdwg.mxu0
        %4383 = vmatpush.xpose.msra.mxu0 %v4230
        %4384 = vmatpush.xpose.msra.mxu0 %v4226
        %4385 = vmatpush.xpose.msra.mxu0 %v4222
        %4386 = vmatpush.xpose.msra.mxu0 %v4218
        %4387 = vmatpush.xpose.msra.mxu0 %v4214
        %4388 = vmatpush.xpose.msra.mxu0 %v4210
        %4389 = vmatpush.xpose.msra.mxu0 %v4206
        %4390 = vmatpush.xpose.msra.mxu0 %v4202
        %4391 = vmatpush.xpose.msra.mxu0 %v4198
        %4392 = vmatpush.xpose.msra.mxu0 %v4194
        %4393 = vmatpush.xpose.msra.mxu0 %v4190
        %4394 = vmatpush.xpose.msra.mxu0 %v4186
        %4395 = vmatpush.xpose.msra.mxu0 %v4182
        %4396 = vmatpush.xpose.msra.mxu0 %v4178
        %4397 = vmatpush.xpose.msra.mxu0 %v4174
        %4398 = vmatpush.xpose.msra.mxu0 %v4170
        %4399 = vmatmul.f32.gmra.mxu0 %v4238
        %v4400 = vpop.f32.mrf.mxu0
        %v4401 = vadd.f32 %v4381, %v4400
        %4402 = vdwg.mxu0
        %v4405 = vrot.slane %v4401, 7
        %vm4406 = vcmask 1040384
        %v4407 = vsel %vm4406, %v4321, %v4405
        %v4409 = vlaneseq
        %vm4410 = vcmp.ge.s32.totalorder %v4409, 0
        %vm4411 = vcmp.lt.s32.totalorder %v4409, 256
        %vm4412 = vmand %vm4410, %vm4411
        %4413 = vst.msk [vmem:[%s221] sm:$0x3] %vm4412, %v4407
        %s4414 = sand.u32 %s138, 1
        %s4415 = scalar_lea.sflag [#allocation4], %s4414
        %s4416 = sand.u32 %s138, 1
        %s4417 = smul.addr %s4416, 2
        %s4418 = scalar_lea.vmem [#allocation3], %s4417
        // Predicated region
        $region41: #{critic_forward.1} parent=39 // pred_check
          %p4419 = pneg %p148
        $region42: #{critic_forward.1} parent=39 // pred_check_branch
          %4421 = sbr.rel (%p4419) target = $region44
        $region43: #{critic_forward.1} parent=39 // pred_region
          %4423 = vsyncadd %s4415, 0
          %s4424 = smul.addr %s20, 2
          %s4425 = scalar_lea.hbm %s5, %s4424
          %s4427 = sshll.u32 %s4418, 4
          %s4428 = int_to_ptr.vmem [resolvable:$true] %s4427
          %s4429 = sshll.u32 %s4425, 4
          %s4430 = int_to_ptr.hbm [resolvable:$true] %s4429
          %4432 = dma.vmem_to_hbm [thread:$0]  %s4428, 32, %s4430, %s4415
        $region44: #{critic_forward.1} parent=39 // pred_fallthru
          _
      $region40: #{critic_forward.1} parent=5 // pred_fallthru
        _
      %p4433 = scmp.le.s32.totalorder 2, %s15
      // Predicated region
      $region45: #{critic_forward.1} parent=5 // pred_check
        %p4434 = pneg %p4433
      $region46: #{critic_forward.1} parent=5 // pred_check_branch
        %4436 = sbr.rel (%p4434) target = $region48
      $region47: #{critic_forward.1} parent=5 // pred_region
        %s4437 = ssub.s32 %s15, 2
        // Predicated region
        $region49: #{critic_forward.1} parent=47 // pred_check
          %p4438 = pneg %p154
        $region50: #{critic_forward.1} parent=47 // pred_check_branch
          %4440 = sbr.rel (%p4438) target = $region52
        $region51: #{critic_forward.1} parent=47 // pred_region
          %s4441 = sand.u32 %s139, 1
          %s4442 = scalar_lea.sflag [#allocation4], %s4441
          %s4443 = sand.u32 %s139, 1
          %s4444 = smul.addr %s4443, 2
          %s4445 = scalar_lea.vmem [#allocation3], %s4444
          %4447 = dma.done %s4442, 32
        $region52: #{critic_forward.1} parent=47 // pred_fallthru
          _
      $region48: #{critic_forward.1} parent=5 // pred_fallthru
        _
    $region6: #{critic_forward.1} parent=1 // loop_footer
      %s19 = sadd.s32 1, %s15
    $region7: #{critic_forward.1} parent=1 // loop_footer_branch
      %14 = sbr.rel target = $region3
    $region8: #{critic_forward.1} parent=1 // loop_exit
      _
    %4448 = vsyncpa [#allocation4], 1
    %s4449 = scalar_lea.sflag [#allocation4], 1
    %4450 = vsyncpa %s4449, 1

</llo_original>
